<compile_context>
chip_gen: v7x
topology: tpu7x:2x2x1
jax: 0.10.0
libtpu: 0.0.40
codegen_flags: <defaults>
</compile_context>

<pallas_src>
import functools
import math

import numpy as np
import jax
import jax.numpy as jnp
from jax.experimental import pallas as pl
from jax.experimental.pallas import tpu as pltpu


LANE = 128  # TPU vreg lane width


# ------------------------------------------------------------------ helpers --
def _gaussian_kernel1d(kernel_size: int, sigma: float) -> np.ndarray:
    """Kornia-style normalized 1D gaussian (odd kernel_size)."""
    x = np.arange(kernel_size, dtype=np.float64) - kernel_size // 2
    g = np.exp(-(x ** 2) / (2.0 * float(sigma) ** 2))
    return (g / g.sum()).astype(np.float32)


# ------------------------------------------------------------- Pallas kernel --
def _blur_body(x_ref, o_ref, *, weights, H, W):
    """Separable gaussian blur of one 128-lane tile; reflect border in VMEM.

    x_ref : VMEM (H, W, LANE)  channels-last block (lane axis = N*C images)
    o_ref : VMEM (H, W, LANE)
    weights: static python floats (K taps, K odd, K >= 3)
    """
    K = len(weights)
    pad = K // 2

    x = x_ref[...].astype(jnp.float32)                      # (H, W, L)

    # ---- reflect pad along W (sublane axis), built from static column slices.
    left = [x[:, j:j + 1, :] for j in range(pad, 0, -1)]            # x[pad]..x[1]
    right = [x[:, j:j + 1, :] for j in range(W - 2, W - 2 - pad, -1)]  # x[W-2]..x[W-1-pad]
    xw = jnp.concatenate(left + [x] + right, axis=1)         # (H, W+2p, L)

    # ---- horizontal pass: taps are sublane-axis slices (no lane shuffles).
    #      Two partial accumulators break the serial add chain.
    acc0 = weights[0] * xw[:, 0:W, :]
    acc1 = weights[1] * xw[:, 1:1 + W, :]
    for j in range(2, K):
        t = weights[j] * xw[:, j:j + W, :]
        if j % 2 == 0:
            acc0 = acc0 + t
        else:
            acc1 = acc1 + t
    h = acc0 + acc1                                          # (H, W, L)

    # ---- reflect pad along H (leading axis; slices are free slab selects).
    top = [h[j:j + 1] for j in range(pad, 0, -1)]
    bot = [h[j:j + 1] for j in range(H - 2, H - 2 - pad, -1)]
    hp = jnp.concatenate(top + [h] + bot, axis=0)            # (H+2p, W, L)

    # ---- vertical pass: taps are leading-axis slices.
    acc0 = weights[0] * hp[0:H]
    acc1 = weights[1] * hp[1:1 + H]
    for i in range(2, K):
        t = weights[i] * hp[i:i + H]
        if i % 2 == 0:
            acc0 = acc0 + t
        else:
            acc1 = acc1 + t
    v = acc0 + acc1                                          # (H, W, L)

    o_ref[...] = v.astype(o_ref.dtype)


@functools.partial(jax.jit, static_argnames=("kernel_size", "weights"))
def _blur_call(x, *, kernel_size, weights):
    """Jitted wrapper: layout plumbing + single pallas_call.

    Note: weights are baked in as compile-time constants, so a new (K, sigma)
    pair triggers a recompile; distinct shapes/K values during the fade are
    bounded, and this keeps the kernel free of SMEM scalar loads.
    """
    N, C, H, W = x.shape
    K = kernel_size
    pad = K // 2
    B = N * C
    Bp = ((B + LANE - 1) // LANE) * LANE

    # Lane-dense channels-last layout (transpose + lane pad fuse into one XLA
    # fusion under jit; the full-image reflect pad is now done in-kernel).
    xt = jnp.transpose(x.reshape(B, H, W), (1, 2, 0))        # (H, W, B)
    if Bp != B:
        xt = jnp.pad(xt, ((0, 0), (0, 0), (0, Bp - B)))      # zero-pad lanes

    # Rough per-lane-tile f32 working set; raise the scoped VMEM limit but cap
    # at 64 MiB so the request stays within v7x physical VMEM.
    block_bytes = 4 * LANE * ((H + 2 * pad) * (W + 2 * pad)
                              + (H + 2 * pad) * W + 4 * H * W)
    vmem_limit = int(min(64 * 1024 * 1024,
                         max(32 * 1024 * 1024, 2 * block_bytes)))

    kernel = functools.partial(_blur_body, weights=weights, H=H, W=W)

    out = pl.pallas_call(
        kernel,
        out_shape=jax.ShapeDtypeStruct((H, W, Bp), x.dtype),
        grid_spec=pltpu.PrefetchScalarGridSpec(
            num_scalar_prefetch=0,
            grid=(Bp // LANE,),                              # one lane tile per step
            in_specs=[pl.BlockSpec((H, W, LANE), lambda b: (0, 0, b))],
            out_specs=pl.BlockSpec((H, W, LANE), lambda b: (0, 0, b)),
        ),
        compiler_params=pltpu.CompilerParams(
            dimension_semantics=("parallel",),
            vmem_limit_bytes=vmem_limit,
        ),
    )(xt)

    out = out[:, :, :B]                                      # drop lane padding
    return jnp.transpose(out, (2, 0, 1)).reshape(N, C, H, W)


def gaussian_blur2d_pallas(x: jax.Array, kernel_size: int, sigma: float) -> jax.Array:
    """Separable gaussian blur, reflect border (kornia gaussian_blur2d default)."""
    N, C, H, W = x.shape
    K = int(kernel_size)
    # Reflect border requires pad <= dim - 1 (same constraint as F.pad/kornia);
    # clamp so huge sigmas on small feature maps stay valid.
    K = min(K, 2 * min(H, W) - 1)
    if K % 2 == 0:
        K -= 1
    if K <= 1:
        return x  # identity blur: skip the kernel entirely (fade-tail fast path)
    weights = tuple(float(v) for v in _gaussian_kernel1d(K, sigma))
    return _blur_call(x, kernel_size=K, weights=weights)


# --------------------------------------------------------------- the module --
class InitialBlurPallas:
    """Mirror of the PyTorch InitialBlur module (forward semantics)."""

    def __init__(self, batch_size, blur_init_sigma, blur_fade_kimg, **kwargs):
        self.init_sigma = blur_init_sigma
        self.fade_kimg = batch_size / 32 * blur_fade_kimg
        self.batch_size = batch_size

    def forward(self, global_step, reals, fakes, **kwargs):
        blur_sigma = (
            max(1 - global_step * self.batch_size / (self.fade_kimg * 1000.0), 0)
            * self.init_sigma
            if self.fade_kimg > 0
            else 0
        )
        if blur_sigma > 0:
            blur_size = math.floor(blur_sigma * 3)
            blur_size = blur_size + (1 - blur_size % 2)
            if blur_size > 1:  # K == 1 is an identity blur -> skip
                if reals is not None:
                    # blur reals + fakes in ONE pallas_call (stacked on batch)
                    n_real = reals.shape[0]
                    both = jnp.concatenate([reals, fakes], axis=0)
                    both = gaussian_blur2d_pallas(both, blur_size, blur_sigma)
                    reals, fakes = both[:n_real], both[n_real:]
                else:
                    fakes = gaussian_blur2d_pallas(fakes, blur_size, blur_sigma)
        return (reals, fakes)


# ----------------------------------------------------------------- reference --
def _ref_blur(x, K, sigma):
    N, C, H, W = x.shape
    pad = K // 2
    w = _gaussian_kernel1d(K, sigma)
    k2d = jnp.asarray(np.outer(w, w), x.dtype)                     # (K, K)
    xpad = jnp.pad(x, ((0, 0), (0, 0), (pad, pad), (pad, pad)), mode="reflect")
    kern = jnp.broadcast_to(k2d[None, None], (C, 1, K, K))
    return jax.lax.conv_general_dilated(
        xpad, kern, (1, 1), "VALID",
        feature_group_count=C,
        dimension_numbers=("NCHW", "OIHW", "NCHW"),
    )


# --------------------------------------------------------------------- main --
if __name__ == "__main__":
    key = jax.random.PRNGKey(0)
    kr, kf = jax.random.split(key)

    N, C, H, W = 2, 4, 16, 16
    reals = jax.random.normal(kr, (N, C, H, W), dtype=jnp.float32)
    fakes = jax.random.normal(kf, (N, C, H, W), dtype=jnp.float32)

    # batch_size=32, blur_init_sigma=10 (defaults), blur_fade_kimg=200
    module = InitialBlurPallas(batch_size=32, blur_init_sigma=10.0, blur_fade_kimg=200)

    # global_step=3125 -> blur_sigma = 0.5 * 10 = 5.0 -> kernel_size = 15
    global_step = 3125
    reals_out, fakes_out = module.forward(global_step, reals, fakes)
    jax.block_until_ready((reals_out, fakes_out))

    # correctness check against an XLA depthwise-conv reference
    blur_sigma = max(1 - global_step * module.batch_size / (module.fade_kimg * 1000.0), 0) * module.init_sigma
    blur_size = math.floor(blur_sigma * 3)
    blur_size = blur_size + (1 - blur_size % 2)
    ref_r = _ref_blur(reals, blur_size, blur_sigma)
    ref_f = _ref_blur(fakes, blur_size, blur_sigma)
    np.testing.assert_allclose(np.asarray(reals_out), np.asarray(ref_r), rtol=1e-5, atol=1e-5)
    np.testing.assert_allclose(np.asarray(fakes_out), np.asarray(ref_f), rtol=1e-5, atol=1e-5)

    # fade-complete fast path: blur_sigma == 0 -> inputs pass through untouched
    r2, f2 = module.forward(10**9, reals, fakes)
    assert r2 is reals and f2 is fakes

    print("KERNEL_OK")
</pallas_src>

<mosaic_0001>
module attributes {stable_mosaic.version = 11 : i64} {
  func.func @_blur_body(%arg0: i32, %arg1: memref<16x16x128xf32, #tpu.memory_space<vmem>>, %arg2: memref<16x16x128xf32, #tpu.memory_space<vmem>>) attributes {dimension_semantics = [#tpu.dimension_semantics<parallel>], iteration_bounds = array<i64: 1>, scalar_prefetch = 0 : i64, scratch_operands = 0 : i64, tpu.core_type = #tpu.core_type<tc>, window_params = [{transform_indices = @transform_0, window_bounds = array<i64: 16, 16, 128>}, {transform_indices = @transform_1, window_bounds = array<i64: 16, 16, 128>}]} {
    %c0 = arith.constant 0 : index
    %c0_0 = arith.constant 0 : index
    %c0_1 = arith.constant 0 : index
    %0 = vector.load %arg1[%c0, %c0_0, %c0_1] : memref<16x16x128xf32, #tpu.memory_space<vmem>>, vector<16x16x128xf32>
    %1 = vector.extract_strided_slice %0 {offsets = [0, 7, 0], sizes = [16, 1, 128], strides = [1, 1, 1]} : vector<16x16x128xf32> to vector<16x1x128xf32>
    %2 = vector.extract_strided_slice %0 {offsets = [0, 6, 0], sizes = [16, 1, 128], strides = [1, 1, 1]} : vector<16x16x128xf32> to vector<16x1x128xf32>
    %3 = vector.extract_strided_slice %0 {offsets = [0, 5, 0], sizes = [16, 1, 128], strides = [1, 1, 1]} : vector<16x16x128xf32> to vector<16x1x128xf32>
    %4 = vector.extract_strided_slice %0 {offsets = [0, 4, 0], sizes = [16, 1, 128], strides = [1, 1, 1]} : vector<16x16x128xf32> to vector<16x1x128xf32>
    %5 = vector.extract_strided_slice %0 {offsets = [0, 3, 0], sizes = [16, 1, 128], strides = [1, 1, 1]} : vector<16x16x128xf32> to vector<16x1x128xf32>
    %6 = vector.extract_strided_slice %0 {offsets = [0, 2, 0], sizes = [16, 1, 128], strides = [1, 1, 1]} : vector<16x16x128xf32> to vector<16x1x128xf32>
    %7 = vector.extract_strided_slice %0 {offsets = [0, 1, 0], sizes = [16, 1, 128], strides = [1, 1, 1]} : vector<16x16x128xf32> to vector<16x1x128xf32>
    %8 = vector.extract_strided_slice %0 {offsets = [0, 14, 0], sizes = [16, 1, 128], strides = [1, 1, 1]} : vector<16x16x128xf32> to vector<16x1x128xf32>
    %9 = vector.extract_strided_slice %0 {offsets = [0, 13, 0], sizes = [16, 1, 128], strides = [1, 1, 1]} : vector<16x16x128xf32> to vector<16x1x128xf32>
    %10 = vector.extract_strided_slice %0 {offsets = [0, 12, 0], sizes = [16, 1, 128], strides = [1, 1, 1]} : vector<16x16x128xf32> to vector<16x1x128xf32>
    %11 = vector.extract_strided_slice %0 {offsets = [0, 11, 0], sizes = [16, 1, 128], strides = [1, 1, 1]} : vector<16x16x128xf32> to vector<16x1x128xf32>
    %12 = vector.extract_strided_slice %0 {offsets = [0, 10, 0], sizes = [16, 1, 128], strides = [1, 1, 1]} : vector<16x16x128xf32> to vector<16x1x128xf32>
    %13 = vector.extract_strided_slice %0 {offsets = [0, 9, 0], sizes = [16, 1, 128], strides = [1, 1, 1]} : vector<16x16x128xf32> to vector<16x1x128xf32>
    %14 = vector.extract_strided_slice %0 {offsets = [0, 8, 0], sizes = [16, 1, 128], strides = [1, 1, 1]} : vector<16x16x128xf32> to vector<16x1x128xf32>
    %15 = tpu.concatenate %1, %2, %3, %4, %5, %6, %7, %0, %8, %9, %10, %11, %12, %13, %14 in 1 : vector<16x1x128xf32>, vector<16x1x128xf32>, vector<16x1x128xf32>, vector<16x1x128xf32>, vector<16x1x128xf32>, vector<16x1x128xf32>, vector<16x1x128xf32>, vector<16x16x128xf32>, vector<16x1x128xf32>, vector<16x1x128xf32>, vector<16x1x128xf32>, vector<16x1x128xf32>, vector<16x1x128xf32>, vector<16x1x128xf32>, vector<16x1x128xf32> -> vector<16x30x128xf32>
    %16 = vector.extract_strided_slice %15 {offsets = [0, 0, 0], sizes = [16, 16, 128], strides = [1, 1, 1]} : vector<16x30x128xf32> to vector<16x16x128xf32>
    %cst = arith.constant 0.034537863 : f32
    %17 = vector.broadcast %cst : f32 to vector<16x16x128xf32>
    %18 = arith.mulf %17, %16 : vector<16x16x128xf32>
    %19 = vector.extract_strided_slice %15 {offsets = [0, 1, 0], sizes = [16, 16, 128], strides = [1, 1, 1]} : vector<16x30x128xf32> to vector<16x16x128xf32>
    %cst_2 = arith.constant 0.0447931923 : f32
    %20 = vector.broadcast %cst_2 : f32 to vector<16x16x128xf32>
    %21 = arith.mulf %20, %19 : vector<16x16x128xf32>
    %22 = vector.extract_strided_slice %15 {offsets = [0, 2, 0], sizes = [16, 16, 128], strides = [1, 1, 1]} : vector<16x30x128xf32> to vector<16x16x128xf32>
    %cst_3 = arith.constant 0.0558157563 : f32
    %23 = vector.broadcast %cst_3 : f32 to vector<16x16x128xf32>
    %24 = arith.mulf %23, %22 : vector<16x16x128xf32>
    %25 = arith.addf %18, %24 : vector<16x16x128xf32>
    %26 = vector.extract_strided_slice %15 {offsets = [0, 3, 0], sizes = [16, 16, 128], strides = [1, 1, 1]} : vector<16x30x128xf32> to vector<16x16x128xf32>
    %cst_4 = arith.constant 0.0668235943 : f32
    %27 = vector.broadcast %cst_4 : f32 to vector<16x16x128xf32>
    %28 = arith.mulf %27, %26 : vector<16x16x128xf32>
    %29 = arith.addf %21, %28 : vector<16x16x128xf32>
    %30 = vector.extract_strided_slice %15 {offsets = [0, 4, 0], sizes = [16, 16, 128], strides = [1, 1, 1]} : vector<16x30x128xf32> to vector<16x16x128xf32>
    %cst_5 = arith.constant 0.0768654272 : f32
    %31 = vector.broadcast %cst_5 : f32 to vector<16x16x128xf32>
    %32 = arith.mulf %31, %30 : vector<16x16x128xf32>
    %33 = arith.addf %25, %32 : vector<16x16x128xf32>
    %34 = vector.extract_strided_slice %15 {offsets = [0, 5, 0], sizes = [16, 16, 128], strides = [1, 1, 1]} : vector<16x30x128xf32> to vector<16x16x128xf32>
    %cst_6 = arith.constant 0.0849494338 : f32
    %35 = vector.broadcast %cst_6 : f32 to vector<16x16x128xf32>
    %36 = arith.mulf %35, %34 : vector<16x16x128xf32>
    %37 = arith.addf %29, %36 : vector<16x16x128xf32>
    %38 = vector.extract_strided_slice %15 {offsets = [0, 6, 0], sizes = [16, 16, 128], strides = [1, 1, 1]} : vector<16x30x128xf32> to vector<16x16x128xf32>
    %cst_7 = arith.constant 0.0902024134 : f32
    %39 = vector.broadcast %cst_7 : f32 to vector<16x16x128xf32>
    %40 = arith.mulf %39, %38 : vector<16x16x128xf32>
    %41 = arith.addf %33, %40 : vector<16x16x128xf32>
    %42 = vector.extract_strided_slice %15 {offsets = [0, 7, 0], sizes = [16, 16, 128], strides = [1, 1, 1]} : vector<16x30x128xf32> to vector<16x16x128xf32>
    %cst_8 = arith.constant 0.0920246243 : f32
    %43 = vector.broadcast %cst_8 : f32 to vector<16x16x128xf32>
    %44 = arith.mulf %43, %42 : vector<16x16x128xf32>
    %45 = arith.addf %37, %44 : vector<16x16x128xf32>
    %46 = vector.extract_strided_slice %15 {offsets = [0, 8, 0], sizes = [16, 16, 128], strides = [1, 1, 1]} : vector<16x30x128xf32> to vector<16x16x128xf32>
    %cst_9 = arith.constant 0.0902024134 : f32
    %47 = vector.broadcast %cst_9 : f32 to vector<16x16x128xf32>
    %48 = arith.mulf %47, %46 : vector<16x16x128xf32>
    %49 = arith.addf %41, %48 : vector<16x16x128xf32>
    %50 = vector.extract_strided_slice %15 {offsets = [0, 9, 0], sizes = [16, 16, 128], strides = [1, 1, 1]} : vector<16x30x128xf32> to vector<16x16x128xf32>
    %cst_10 = arith.constant 0.0849494338 : f32
    %51 = vector.broadcast %cst_10 : f32 to vector<16x16x128xf32>
    %52 = arith.mulf %51, %50 : vector<16x16x128xf32>
    %53 = arith.addf %45, %52 : vector<16x16x128xf32>
    %54 = vector.extract_strided_slice %15 {offsets = [0, 10, 0], sizes = [16, 16, 128], strides = [1, 1, 1]} : vector<16x30x128xf32> to vector<16x16x128xf32>
    %cst_11 = arith.constant 0.0768654272 : f32
    %55 = vector.broadcast %cst_11 : f32 to vector<16x16x128xf32>
    %56 = arith.mulf %55, %54 : vector<16x16x128xf32>
    %57 = arith.addf %49, %56 : vector<16x16x128xf32>
    %58 = vector.extract_strided_slice %15 {offsets = [0, 11, 0], sizes = [16, 16, 128], strides = [1, 1, 1]} : vector<16x30x128xf32> to vector<16x16x128xf32>
    %cst_12 = arith.constant 0.0668235943 : f32
    %59 = vector.broadcast %cst_12 : f32 to vector<16x16x128xf32>
    %60 = arith.mulf %59, %58 : vector<16x16x128xf32>
    %61 = arith.addf %53, %60 : vector<16x16x128xf32>
    %62 = vector.extract_strided_slice %15 {offsets = [0, 12, 0], sizes = [16, 16, 128], strides = [1, 1, 1]} : vector<16x30x128xf32> to vector<16x16x128xf32>
    %cst_13 = arith.constant 0.0558157563 : f32
    %63 = vector.broadcast %cst_13 : f32 to vector<16x16x128xf32>
    %64 = arith.mulf %63, %62 : vector<16x16x128xf32>
    %65 = arith.addf %57, %64 : vector<16x16x128xf32>
    %66 = vector.extract_strided_slice %15 {offsets = [0, 13, 0], sizes = [16, 16, 128], strides = [1, 1, 1]} : vector<16x30x128xf32> to vector<16x16x128xf32>
    %cst_14 = arith.constant 0.0447931923 : f32
    %67 = vector.broadcast %cst_14 : f32 to vector<16x16x128xf32>
    %68 = arith.mulf %67, %66 : vector<16x16x128xf32>
    %69 = arith.addf %61, %68 : vector<16x16x128xf32>
    %70 = vector.extract_strided_slice %15 {offsets = [0, 14, 0], sizes = [16, 16, 128], strides = [1, 1, 1]} : vector<16x30x128xf32> to vector<16x16x128xf32>
    %cst_15 = arith.constant 0.034537863 : f32
    %71 = vector.broadcast %cst_15 : f32 to vector<16x16x128xf32>
    %72 = arith.mulf %71, %70 : vector<16x16x128xf32>
    %73 = arith.addf %65, %72 : vector<16x16x128xf32>
    %74 = arith.addf %73, %69 : vector<16x16x128xf32>
    %75 = vector.extract_strided_slice %74 {offsets = [7, 0, 0], sizes = [1, 16, 128], strides = [1, 1, 1]} : vector<16x16x128xf32> to vector<1x16x128xf32>
    %76 = vector.extract_strided_slice %74 {offsets = [6, 0, 0], sizes = [1, 16, 128], strides = [1, 1, 1]} : vector<16x16x128xf32> to vector<1x16x128xf32>
    %77 = vector.extract_strided_slice %74 {offsets = [5, 0, 0], sizes = [1, 16, 128], strides = [1, 1, 1]} : vector<16x16x128xf32> to vector<1x16x128xf32>
    %78 = vector.extract_strided_slice %74 {offsets = [4, 0, 0], sizes = [1, 16, 128], strides = [1, 1, 1]} : vector<16x16x128xf32> to vector<1x16x128xf32>
    %79 = vector.extract_strided_slice %74 {offsets = [3, 0, 0], sizes = [1, 16, 128], strides = [1, 1, 1]} : vector<16x16x128xf32> to vector<1x16x128xf32>
    %80 = vector.extract_strided_slice %74 {offsets = [2, 0, 0], sizes = [1, 16, 128], strides = [1, 1, 1]} : vector<16x16x128xf32> to vector<1x16x128xf32>
    %81 = vector.extract_strided_slice %74 {offsets = [1, 0, 0], sizes = [1, 16, 128], strides = [1, 1, 1]} : vector<16x16x128xf32> to vector<1x16x128xf32>
    %82 = vector.extract_strided_slice %74 {offsets = [14, 0, 0], sizes = [1, 16, 128], strides = [1, 1, 1]} : vector<16x16x128xf32> to vector<1x16x128xf32>
    %83 = vector.extract_strided_slice %74 {offsets = [13, 0, 0], sizes = [1, 16, 128], strides = [1, 1, 1]} : vector<16x16x128xf32> to vector<1x16x128xf32>
    %84 = vector.extract_strided_slice %74 {offsets = [12, 0, 0], sizes = [1, 16, 128], strides = [1, 1, 1]} : vector<16x16x128xf32> to vector<1x16x128xf32>
    %85 = vector.extract_strided_slice %74 {offsets = [11, 0, 0], sizes = [1, 16, 128], strides = [1, 1, 1]} : vector<16x16x128xf32> to vector<1x16x128xf32>
    %86 = vector.extract_strided_slice %74 {offsets = [10, 0, 0], sizes = [1, 16, 128], strides = [1, 1, 1]} : vector<16x16x128xf32> to vector<1x16x128xf32>
    %87 = vector.extract_strided_slice %74 {offsets = [9, 0, 0], sizes = [1, 16, 128], strides = [1, 1, 1]} : vector<16x16x128xf32> to vector<1x16x128xf32>
    %88 = vector.extract_strided_slice %74 {offsets = [8, 0, 0], sizes = [1, 16, 128], strides = [1, 1, 1]} : vector<16x16x128xf32> to vector<1x16x128xf32>
    %89 = tpu.concatenate %75, %76, %77, %78, %79, %80, %81, %74, %82, %83, %84, %85, %86, %87, %88 in 0 : vector<1x16x128xf32>, vector<1x16x128xf32>, vector<1x16x128xf32>, vector<1x16x128xf32>, vector<1x16x128xf32>, vector<1x16x128xf32>, vector<1x16x128xf32>, vector<16x16x128xf32>, vector<1x16x128xf32>, vector<1x16x128xf32>, vector<1x16x128xf32>, vector<1x16x128xf32>, vector<1x16x128xf32>, vector<1x16x128xf32>, vector<1x16x128xf32> -> vector<30x16x128xf32>
    %90 = vector.extract_strided_slice %89 {offsets = [0, 0, 0], sizes = [16, 16, 128], strides = [1, 1, 1]} : vector<30x16x128xf32> to vector<16x16x128xf32>
    %cst_16 = arith.constant 0.034537863 : f32
    %91 = vector.broadcast %cst_16 : f32 to vector<16x16x128xf32>
    %92 = arith.mulf %91, %90 : vector<16x16x128xf32>
    %93 = vector.extract_strided_slice %89 {offsets = [1, 0, 0], sizes = [16, 16, 128], strides = [1, 1, 1]} : vector<30x16x128xf32> to vector<16x16x128xf32>
    %cst_17 = arith.constant 0.0447931923 : f32
    %94 = vector.broadcast %cst_17 : f32 to vector<16x16x128xf32>
    %95 = arith.mulf %94, %93 : vector<16x16x128xf32>
    %96 = vector.extract_strided_slice %89 {offsets = [2, 0, 0], sizes = [16, 16, 128], strides = [1, 1, 1]} : vector<30x16x128xf32> to vector<16x16x128xf32>
    %cst_18 = arith.constant 0.0558157563 : f32
    %97 = vector.broadcast %cst_18 : f32 to vector<16x16x128xf32>
    %98 = arith.mulf %97, %96 : vector<16x16x128xf32>
    %99 = arith.addf %92, %98 : vector<16x16x128xf32>
    %100 = vector.extract_strided_slice %89 {offsets = [3, 0, 0], sizes = [16, 16, 128], strides = [1, 1, 1]} : vector<30x16x128xf32> to vector<16x16x128xf32>
    %cst_19 = arith.constant 0.0668235943 : f32
    %101 = vector.broadcast %cst_19 : f32 to vector<16x16x128xf32>
    %102 = arith.mulf %101, %100 : vector<16x16x128xf32>
    %103 = arith.addf %95, %102 : vector<16x16x128xf32>
    %104 = vector.extract_strided_slice %89 {offsets = [4, 0, 0], sizes = [16, 16, 128], strides = [1, 1, 1]} : vector<30x16x128xf32> to vector<16x16x128xf32>
    %cst_20 = arith.constant 0.0768654272 : f32
    %105 = vector.broadcast %cst_20 : f32 to vector<16x16x128xf32>
    %106 = arith.mulf %105, %104 : vector<16x16x128xf32>
    %107 = arith.addf %99, %106 : vector<16x16x128xf32>
    %108 = vector.extract_strided_slice %89 {offsets = [5, 0, 0], sizes = [16, 16, 128], strides = [1, 1, 1]} : vector<30x16x128xf32> to vector<16x16x128xf32>
    %cst_21 = arith.constant 0.0849494338 : f32
    %109 = vector.broadcast %cst_21 : f32 to vector<16x16x128xf32>
    %110 = arith.mulf %109, %108 : vector<16x16x128xf32>
    %111 = arith.addf %103, %110 : vector<16x16x128xf32>
    %112 = vector.extract_strided_slice %89 {offsets = [6, 0, 0], sizes = [16, 16, 128], strides = [1, 1, 1]} : vector<30x16x128xf32> to vector<16x16x128xf32>
    %cst_22 = arith.constant 0.0902024134 : f32
    %113 = vector.broadcast %cst_22 : f32 to vector<16x16x128xf32>
    %114 = arith.mulf %113, %112 : vector<16x16x128xf32>
    %115 = arith.addf %107, %114 : vector<16x16x128xf32>
    %116 = vector.extract_strided_slice %89 {offsets = [7, 0, 0], sizes = [16, 16, 128], strides = [1, 1, 1]} : vector<30x16x128xf32> to vector<16x16x128xf32>
    %cst_23 = arith.constant 0.0920246243 : f32
    %117 = vector.broadcast %cst_23 : f32 to vector<16x16x128xf32>
    %118 = arith.mulf %117, %116 : vector<16x16x128xf32>
    %119 = arith.addf %111, %118 : vector<16x16x128xf32>
    %120 = vector.extract_strided_slice %89 {offsets = [8, 0, 0], sizes = [16, 16, 128], strides = [1, 1, 1]} : vector<30x16x128xf32> to vector<16x16x128xf32>
    %cst_24 = arith.constant 0.0902024134 : f32
    %121 = vector.broadcast %cst_24 : f32 to vector<16x16x128xf32>
    %122 = arith.mulf %121, %120 : vector<16x16x128xf32>
    %123 = arith.addf %115, %122 : vector<16x16x128xf32>
    %124 = vector.extract_strided_slice %89 {offsets = [9, 0, 0], sizes = [16, 16, 128], strides = [1, 1, 1]} : vector<30x16x128xf32> to vector<16x16x128xf32>
    %cst_25 = arith.constant 0.0849494338 : f32
    %125 = vector.broadcast %cst_25 : f32 to vector<16x16x128xf32>
    %126 = arith.mulf %125, %124 : vector<16x16x128xf32>
    %127 = arith.addf %119, %126 : vector<16x16x128xf32>
    %128 = vector.extract_strided_slice %89 {offsets = [10, 0, 0], sizes = [16, 16, 128], strides = [1, 1, 1]} : vector<30x16x128xf32> to vector<16x16x128xf32>
    %cst_26 = arith.constant 0.0768654272 : f32
    %129 = vector.broadcast %cst_26 : f32 to vector<16x16x128xf32>
    %130 = arith.mulf %129, %128 : vector<16x16x128xf32>
    %131 = arith.addf %123, %130 : vector<16x16x128xf32>
    %132 = vector.extract_strided_slice %89 {offsets = [11, 0, 0], sizes = [16, 16, 128], strides = [1, 1, 1]} : vector<30x16x128xf32> to vector<16x16x128xf32>
    %cst_27 = arith.constant 0.0668235943 : f32
    %133 = vector.broadcast %cst_27 : f32 to vector<16x16x128xf32>
    %134 = arith.mulf %133, %132 : vector<16x16x128xf32>
    %135 = arith.addf %127, %134 : vector<16x16x128xf32>
    %136 = vector.extract_strided_slice %89 {offsets = [12, 0, 0], sizes = [16, 16, 128], strides = [1, 1, 1]} : vector<30x16x128xf32> to vector<16x16x128xf32>
    %cst_28 = arith.constant 0.0558157563 : f32
    %137 = vector.broadcast %cst_28 : f32 to vector<16x16x128xf32>
    %138 = arith.mulf %137, %136 : vector<16x16x128xf32>
    %139 = arith.addf %131, %138 : vector<16x16x128xf32>
    %140 = vector.extract_strided_slice %89 {offsets = [13, 0, 0], sizes = [16, 16, 128], strides = [1, 1, 1]} : vector<30x16x128xf32> to vector<16x16x128xf32>
    %cst_29 = arith.constant 0.0447931923 : f32
    %141 = vector.broadcast %cst_29 : f32 to vector<16x16x128xf32>
    %142 = arith.mulf %141, %140 : vector<16x16x128xf32>
    %143 = arith.addf %135, %142 : vector<16x16x128xf32>
    %144 = vector.extract_strided_slice %89 {offsets = [14, 0, 0], sizes = [16, 16, 128], strides = [1, 1, 1]} : vector<30x16x128xf32> to vector<16x16x128xf32>
    %cst_30 = arith.constant 0.034537863 : f32
    %145 = vector.broadcast %cst_30 : f32 to vector<16x16x128xf32>
    %146 = arith.mulf %145, %144 : vector<16x16x128xf32>
    %147 = arith.addf %139, %146 : vector<16x16x128xf32>
    %148 = arith.addf %147, %143 : vector<16x16x128xf32>
    %c0_31 = arith.constant 0 : index
    %c0_32 = arith.constant 0 : index
    %c0_33 = arith.constant 0 : index
    %149 = vector.load %arg2[%c0_31, %c0_32, %c0_33] : memref<16x16x128xf32, #tpu.memory_space<vmem>>, vector<16x16x128xf32>
    tpu.vector_store %arg2[%c0_31, %c0_32, %c0_33], %148 {strides = array<i32>} : memref<16x16x128xf32, #tpu.memory_space<vmem>>, vector<16x16x128xf32>,
    return
  }
  func.func @transform_0(%arg0: i32) -> (i32, i32, i32) {
    %c0_i32 = arith.constant 0 : i32
    %c0_i32_0 = arith.constant 0 : i32
    %c0_i32_1 = arith.constant 0 : i32
    return %c0_i32, %c0_i32_0, %arg0 : i32, i32, i32
  }
  func.func @transform_1(%arg0: i32) -> (i32, i32, i32) {
    %c0_i32 = arith.constant 0 : i32
    %c0_i32_0 = arith.constant 0 : i32
    %c0_i32_1 = arith.constant 0 : i32
    return %c0_i32, %c0_i32_0, %arg0 : i32, i32, i32
  }
}

</mosaic_0001>

<llo_original>
// kernel: _blur_call.1
$region0: #{_blur_call.1}
  #allocation0 [shape = 'u32[]', space=smem, size = 0x4, offset = 0x4, fixed_abs, tag = 'smem constant byte address 0x4 - core index']
  #allocation1 [shape = 'u32[144,128]{1,0:T(1,128)}', space=vmem, size = 0x12000, scoped, tag = 'internal scratch']
  %s0 = inlined_call_operand.vmem [shape: f32[16,16,128], index: 0, kind: input, shape index: {}]
  %s1 = inlined_call_operand.vmem [shape: f32[16,16,128], index: 1, kind: output, shape index: {}]
  %s2 = sld [smem:[#allocation0]]
  $region14: #{_blur_call.1} parent=0
    _
  %s4 = ssub.s32 1, %s2
  %s5 = scalar_select 0, %s4, %s2
  // Predicated region
  $region2: #{_blur_call.1} parent=0 // pred_check
    _
  $region3: #{_blur_call.1} parent=0 // pred_check_branch
    %7 = sbr.rel (0) target = $region5
  $region4: #{_blur_call.1} parent=0 // pred_region
    _
  $region5: #{_blur_call.1} parent=0 // pred_fallthru
    _
  %v8 = vld [vmem:[%s0] sm:$0xff]
  %v9 = vld [vmem:[%s0 + $0x8] sm:$0xff]
  %v10 = vld [vmem:[%s0 + $0x10] sm:$0xff]
  %v11 = vld [vmem:[%s0 + $0x18] sm:$0xff]
  %v12 = vld [vmem:[%s0 + $0x20] sm:$0xff]
  %v13 = vld [vmem:[%s0 + $0x28] sm:$0xff]
  %v14 = vld [vmem:[%s0 + $0x30] sm:$0xff]
  %v15 = vld [vmem:[%s0 + $0x38] sm:$0xff]
  %v16 = vld [vmem:[%s0 + $0x40] sm:$0xff]
  %v17 = vld [vmem:[%s0 + $0x48] sm:$0xff]
  %v18 = vld [vmem:[%s0 + $0x50] sm:$0xff]
  %v19 = vld [vmem:[%s0 + $0x58] sm:$0xff]
  %v20 = vld [vmem:[%s0 + $0x60] sm:$0xff]
  %v21 = vld [vmem:[%s0 + $0x68] sm:$0xff]
  %v22 = vld [vmem:[%s0 + $0x70] sm:$0xff]
  %v23 = vld [vmem:[%s0 + $0x78] sm:$0xff]
  %v24 = vld [vmem:[%s0 + $0x80] sm:$0xff]
  %v25 = vld [vmem:[%s0 + $0x88] sm:$0xff]
  %v26 = vld [vmem:[%s0 + $0x90] sm:$0xff]
  %v27 = vld [vmem:[%s0 + $0x98] sm:$0xff]
  %v28 = vld [vmem:[%s0 + $0xa0] sm:$0xff]
  %v29 = vld [vmem:[%s0 + $0xa8] sm:$0xff]
  %v30 = vld [vmem:[%s0 + $0xb0] sm:$0xff]
  %v31 = vld [vmem:[%s0 + $0xb8] sm:$0xff]
  %v32 = vld [vmem:[%s0 + $0xc0] sm:$0xff]
  %v33 = vld [vmem:[%s0 + $0xc8] sm:$0xff]
  %v34 = vld [vmem:[%s0 + $0xd0] sm:$0xff]
  %v35 = vld [vmem:[%s0 + $0xd8] sm:$0xff]
  %v36 = vld [vmem:[%s0 + $0xe0] sm:$0xff]
  %v37 = vld [vmem:[%s0 + $0xe8] sm:$0xff]
  %v38 = vld [vmem:[%s0 + $0xf0] sm:$0xff]
  %v39 = vld [vmem:[%s0 + $0xf8] sm:$0xff]
  %v56 = vrot.slane %v8, 7
  %v57 = vrot.slane %v10, 7
  %v58 = vrot.slane %v12, 7
  %v59 = vrot.slane %v14, 7
  %v60 = vrot.slane %v16, 7
  %v61 = vrot.slane %v18, 7
  %v62 = vrot.slane %v20, 7
  %v63 = vrot.slane %v22, 7
  %v64 = vrot.slane %v24, 7
  %v65 = vrot.slane %v26, 7
  %v66 = vrot.slane %v28, 7
  %v67 = vrot.slane %v30, 7
  %v68 = vrot.slane %v32, 7
  %v69 = vrot.slane %v34, 7
  %v70 = vrot.slane %v36, 7
  %v71 = vrot.slane %v38, 7
  %v88 = vrot.slane %v8, 5
  %v89 = vrot.slane %v10, 5
  %v90 = vrot.slane %v12, 5
  %v91 = vrot.slane %v14, 5
  %v92 = vrot.slane %v16, 5
  %v93 = vrot.slane %v18, 5
  %v94 = vrot.slane %v20, 5
  %v95 = vrot.slane %v22, 5
  %v96 = vrot.slane %v24, 5
  %v97 = vrot.slane %v26, 5
  %v98 = vrot.slane %v28, 5
  %v99 = vrot.slane %v30, 5
  %v100 = vrot.slane %v32, 5
  %v101 = vrot.slane %v34, 5
  %v102 = vrot.slane %v36, 5
  %v103 = vrot.slane %v38, 5
  %v120 = vrot.slane %v8, 3
  %v121 = vrot.slane %v10, 3
  %v122 = vrot.slane %v12, 3
  %v123 = vrot.slane %v14, 3
  %v124 = vrot.slane %v16, 3
  %v125 = vrot.slane %v18, 3
  %v126 = vrot.slane %v20, 3
  %v127 = vrot.slane %v22, 3
  %v128 = vrot.slane %v24, 3
  %v129 = vrot.slane %v26, 3
  %v130 = vrot.slane %v28, 3
  %v131 = vrot.slane %v30, 3
  %v132 = vrot.slane %v32, 3
  %v133 = vrot.slane %v34, 3
  %v134 = vrot.slane %v36, 3
  %v135 = vrot.slane %v38, 3
  %v152 = vrot.slane %v8, 1
  %v153 = vrot.slane %v10, 1
  %v154 = vrot.slane %v12, 1
  %v155 = vrot.slane %v14, 1
  %v156 = vrot.slane %v16, 1
  %v157 = vrot.slane %v18, 1
  %v158 = vrot.slane %v20, 1
  %v159 = vrot.slane %v22, 1
  %v160 = vrot.slane %v24, 1
  %v161 = vrot.slane %v26, 1
  %v162 = vrot.slane %v28, 1
  %v163 = vrot.slane %v30, 1
  %v164 = vrot.slane %v32, 1
  %v165 = vrot.slane %v34, 1
  %v166 = vrot.slane %v36, 1
  %v167 = vrot.slane %v38, 1
  %vm200 = vcmask 1046528
  %v201 = vrot.slane %v9, 1
  %v202 = vsel %vm200, %v152, %v201
  %v203 = vrot.slane %v11, 1
  %v204 = vsel %vm200, %v153, %v203
  %v205 = vrot.slane %v13, 1
  %v206 = vsel %vm200, %v154, %v205
  %v207 = vrot.slane %v15, 1
  %v208 = vsel %vm200, %v155, %v207
  %v209 = vrot.slane %v17, 1
  %v210 = vsel %vm200, %v156, %v209
  %v211 = vrot.slane %v19, 1
  %v212 = vsel %vm200, %v157, %v211
  %v213 = vrot.slane %v21, 1
  %v214 = vsel %vm200, %v158, %v213
  %v215 = vrot.slane %v23, 1
  %v216 = vsel %vm200, %v159, %v215
  %v217 = vrot.slane %v25, 1
  %v218 = vsel %vm200, %v160, %v217
  %v219 = vrot.slane %v27, 1
  %v220 = vsel %vm200, %v161, %v219
  %v221 = vrot.slane %v29, 1
  %v222 = vsel %vm200, %v162, %v221
  %v223 = vrot.slane %v31, 1
  %v224 = vsel %vm200, %v163, %v223
  %v225 = vrot.slane %v33, 1
  %v226 = vsel %vm200, %v164, %v225
  %v227 = vrot.slane %v35, 1
  %v228 = vsel %vm200, %v165, %v227
  %v229 = vrot.slane %v37, 1
  %v230 = vsel %vm200, %v166, %v229
  %v231 = vrot.slane %v39, 1
  %v232 = vsel %vm200, %v167, %v231
  %v265 = vrot.slane %v9, 7
  %v266 = vrot.slane %v11, 7
  %v267 = vrot.slane %v13, 7
  %v268 = vrot.slane %v15, 7
  %v269 = vrot.slane %v17, 7
  %v270 = vrot.slane %v19, 7
  %v271 = vrot.slane %v21, 7
  %v272 = vrot.slane %v23, 7
  %v273 = vrot.slane %v25, 7
  %v274 = vrot.slane %v27, 7
  %v275 = vrot.slane %v29, 7
  %v276 = vrot.slane %v31, 7
  %v277 = vrot.slane %v33, 7
  %v278 = vrot.slane %v35, 7
  %v279 = vrot.slane %v37, 7
  %v280 = vrot.slane %v39, 7
  %v297 = vrot.slane %v9, 5
  %v298 = vrot.slane %v11, 5
  %v299 = vrot.slane %v13, 5
  %v300 = vrot.slane %v15, 5
  %v301 = vrot.slane %v17, 5
  %v302 = vrot.slane %v19, 5
  %v303 = vrot.slane %v21, 5
  %v304 = vrot.slane %v23, 5
  %v305 = vrot.slane %v25, 5
  %v306 = vrot.slane %v27, 5
  %v307 = vrot.slane %v29, 5
  %v308 = vrot.slane %v31, 5
  %v309 = vrot.slane %v33, 5
  %v310 = vrot.slane %v35, 5
  %v311 = vrot.slane %v37, 5
  %v312 = vrot.slane %v39, 5
  %v329 = vrot.slane %v9, 3
  %v330 = vrot.slane %v11, 3
  %v331 = vrot.slane %v13, 3
  %v332 = vrot.slane %v15, 3
  %v333 = vrot.slane %v17, 3
  %v334 = vrot.slane %v19, 3
  %v335 = vrot.slane %v21, 3
  %v336 = vrot.slane %v23, 3
  %v337 = vrot.slane %v25, 3
  %v338 = vrot.slane %v27, 3
  %v339 = vrot.slane %v29, 3
  %v340 = vrot.slane %v31, 3
  %v341 = vrot.slane %v33, 3
  %v342 = vrot.slane %v35, 3
  %v343 = vrot.slane %v37, 3
  %v344 = vrot.slane %v39, 3
  %vm361 = vcmask 1040384
  %v362 = vsel %vm361, %v56, %v88
  %v363 = vsel %vm361, %v57, %v89
  %v364 = vsel %vm361, %v58, %v90
  %v365 = vsel %vm361, %v59, %v91
  %v366 = vsel %vm361, %v60, %v92
  %v367 = vsel %vm361, %v61, %v93
  %v368 = vsel %vm361, %v62, %v94
  %v369 = vsel %vm361, %v63, %v95
  %v370 = vsel %vm361, %v64, %v96
  %v371 = vsel %vm361, %v65, %v97
  %v372 = vsel %vm361, %v66, %v98
  %v373 = vsel %vm361, %v67, %v99
  %v374 = vsel %vm361, %v68, %v100
  %v375 = vsel %vm361, %v69, %v101
  %v376 = vsel %vm361, %v70, %v102
  %v377 = vsel %vm361, %v71, %v103
  %vm378 = vcmask 1041408
  %v379 = vsel %vm378, %v362, %v120
  %v380 = vsel %vm378, %v363, %v121
  %v381 = vsel %vm378, %v364, %v122
  %v382 = vsel %vm378, %v365, %v123
  %v383 = vsel %vm378, %v366, %v124
  %v384 = vsel %vm378, %v367, %v125
  %v385 = vsel %vm378, %v368, %v126
  %v386 = vsel %vm378, %v369, %v127
  %v387 = vsel %vm378, %v370, %v128
  %v388 = vsel %vm378, %v371, %v129
  %v389 = vsel %vm378, %v372, %v130
  %v390 = vsel %vm378, %v373, %v131
  %v391 = vsel %vm378, %v374, %v132
  %v392 = vsel %vm378, %v375, %v133
  %v393 = vsel %vm378, %v376, %v134
  %v394 = vsel %vm378, %v377, %v135
  %vm395 = vcmask 1042432
  %v396 = vsel %vm395, %v379, %v152
  %v397 = vsel %vm395, %v380, %v153
  %v398 = vsel %vm395, %v381, %v154
  %v399 = vsel %vm395, %v382, %v155
  %v400 = vsel %vm395, %v383, %v156
  %v401 = vsel %vm395, %v384, %v157
  %v402 = vsel %vm395, %v385, %v158
  %v403 = vsel %vm395, %v386, %v159
  %v404 = vsel %vm395, %v387, %v160
  %v405 = vsel %vm395, %v388, %v161
  %v406 = vsel %vm395, %v389, %v162
  %v407 = vsel %vm395, %v390, %v163
  %v408 = vsel %vm395, %v391, %v164
  %v409 = vsel %vm395, %v392, %v165
  %v410 = vsel %vm395, %v393, %v166
  %v411 = vsel %vm395, %v394, %v167
  %vm412 = vcmask 1043456
  %v413 = vsel %vm412, %v396, %v56
  %v414 = vsel %vm412, %v397, %v57
  %v415 = vsel %vm412, %v398, %v58
  %v416 = vsel %vm412, %v399, %v59
  %v417 = vsel %vm412, %v400, %v60
  %v418 = vsel %vm412, %v401, %v61
  %v419 = vsel %vm412, %v402, %v62
  %v420 = vsel %vm412, %v403, %v63
  %v421 = vsel %vm412, %v404, %v64
  %v422 = vsel %vm412, %v405, %v65
  %v423 = vsel %vm412, %v406, %v66
  %v424 = vsel %vm412, %v407, %v67
  %v425 = vsel %vm412, %v408, %v68
  %v426 = vsel %vm412, %v409, %v69
  %v427 = vsel %vm412, %v410, %v70
  %v428 = vsel %vm412, %v411, %v71
  %vm429 = vcmask 1044480
  %v430 = vsel %vm429, %v413, %v88
  %v431 = vsel %vm429, %v414, %v89
  %v432 = vsel %vm429, %v415, %v90
  %v433 = vsel %vm429, %v416, %v91
  %v434 = vsel %vm429, %v417, %v92
  %v435 = vsel %vm429, %v418, %v93
  %v436 = vsel %vm429, %v419, %v94
  %v437 = vsel %vm429, %v420, %v95
  %v438 = vsel %vm429, %v421, %v96
  %v439 = vsel %vm429, %v422, %v97
  %v440 = vsel %vm429, %v423, %v98
  %v441 = vsel %vm429, %v424, %v99
  %v442 = vsel %vm429, %v425, %v100
  %v443 = vsel %vm429, %v426, %v101
  %v444 = vsel %vm429, %v427, %v102
  %v445 = vsel %vm429, %v428, %v103
  %vm446 = vcmask 1045504
  %v447 = vsel %vm446, %v430, %v120
  %v448 = vsel %vm446, %v431, %v121
  %v449 = vsel %vm446, %v432, %v122
  %v450 = vsel %vm446, %v433, %v123
  %v451 = vsel %vm446, %v434, %v124
  %v452 = vsel %vm446, %v435, %v125
  %v453 = vsel %vm446, %v436, %v126
  %v454 = vsel %vm446, %v437, %v127
  %v455 = vsel %vm446, %v438, %v128
  %v456 = vsel %vm446, %v439, %v129
  %v457 = vsel %vm446, %v440, %v130
  %v458 = vsel %vm446, %v441, %v131
  %v459 = vsel %vm446, %v442, %v132
  %v460 = vsel %vm446, %v443, %v133
  %v461 = vsel %vm446, %v444, %v134
  %v462 = vsel %vm446, %v445, %v135
  %v463 = vsel %vm200, %v447, %v152
  %v464 = vsel %vm200, %v448, %v153
  %v465 = vsel %vm200, %v449, %v154
  %v466 = vsel %vm200, %v450, %v155
  %v467 = vsel %vm200, %v451, %v156
  %v468 = vsel %vm200, %v452, %v157
  %v469 = vsel %vm200, %v453, %v158
  %v470 = vsel %vm200, %v454, %v159
  %v471 = vsel %vm200, %v455, %v160
  %v472 = vsel %vm200, %v456, %v161
  %v473 = vsel %vm200, %v457, %v162
  %v474 = vsel %vm200, %v458, %v163
  %v475 = vsel %vm200, %v459, %v164
  %v476 = vsel %vm200, %v460, %v165
  %v477 = vsel %vm200, %v461, %v166
  %v478 = vsel %vm200, %v462, %v167
  %v479 = vsel %vm200, %v201, %v265
  %v480 = vsel %vm200, %v203, %v266
  %v481 = vsel %vm200, %v205, %v267
  %v482 = vsel %vm200, %v207, %v268
  %v483 = vsel %vm200, %v209, %v269
  %v484 = vsel %vm200, %v211, %v270
  %v485 = vsel %vm200, %v213, %v271
  %v486 = vsel %vm200, %v215, %v272
  %v487 = vsel %vm200, %v217, %v273
  %v488 = vsel %vm200, %v219, %v274
  %v489 = vsel %vm200, %v221, %v275
  %v490 = vsel %vm200, %v223, %v276
  %v491 = vsel %vm200, %v225, %v277
  %v492 = vsel %vm200, %v227, %v278
  %v493 = vsel %vm200, %v229, %v279
  %v494 = vsel %vm200, %v231, %v280
  %v495 = vsel %vm361, %v297, %v329
  %v496 = vsel %vm361, %v298, %v330
  %v497 = vsel %vm361, %v299, %v331
  %v498 = vsel %vm361, %v300, %v332
  %v499 = vsel %vm361, %v301, %v333
  %v500 = vsel %vm361, %v302, %v334
  %v501 = vsel %vm361, %v303, %v335
  %v502 = vsel %vm361, %v304, %v336
  %v503 = vsel %vm361, %v305, %v337
  %v504 = vsel %vm361, %v306, %v338
  %v505 = vsel %vm361, %v307, %v339
  %v506 = vsel %vm361, %v308, %v340
  %v507 = vsel %vm361, %v309, %v341
  %v508 = vsel %vm361, %v310, %v342
  %v509 = vsel %vm361, %v311, %v343
  %v510 = vsel %vm361, %v312, %v344
  %v511 = vsel %vm378, %v495, %v201
  %v512 = vsel %vm378, %v496, %v203
  %v513 = vsel %vm378, %v497, %v205
  %v514 = vsel %vm378, %v498, %v207
  %v515 = vsel %vm378, %v499, %v209
  %v516 = vsel %vm378, %v500, %v211
  %v517 = vsel %vm378, %v501, %v213
  %v518 = vsel %vm378, %v502, %v215
  %v519 = vsel %vm378, %v503, %v217
  %v520 = vsel %vm378, %v504, %v219
  %v521 = vsel %vm378, %v505, %v221
  %v522 = vsel %vm378, %v506, %v223
  %v523 = vsel %vm378, %v507, %v225
  %v524 = vsel %vm378, %v508, %v227
  %v525 = vsel %vm378, %v509, %v229
  %v526 = vsel %vm378, %v510, %v231
  %v527 = vsel %vm395, %v511, %v265
  %v528 = vsel %vm395, %v512, %v266
  %v529 = vsel %vm395, %v513, %v267
  %v530 = vsel %vm395, %v514, %v268
  %v531 = vsel %vm395, %v515, %v269
  %v532 = vsel %vm395, %v516, %v270
  %v533 = vsel %vm395, %v517, %v271
  %v534 = vsel %vm395, %v518, %v272
  %v535 = vsel %vm395, %v519, %v273
  %v536 = vsel %vm395, %v520, %v274
  %v537 = vsel %vm395, %v521, %v275
  %v538 = vsel %vm395, %v522, %v276
  %v539 = vsel %vm395, %v523, %v277
  %v540 = vsel %vm395, %v524, %v278
  %v541 = vsel %vm395, %v525, %v279
  %v542 = vsel %vm395, %v526, %v280
  %v543 = vsel %vm412, %v527, %v297
  %v544 = vsel %vm412, %v528, %v298
  %v545 = vsel %vm412, %v529, %v299
  %v546 = vsel %vm412, %v530, %v300
  %v547 = vsel %vm412, %v531, %v301
  %v548 = vsel %vm412, %v532, %v302
  %v549 = vsel %vm412, %v533, %v303
  %v550 = vsel %vm412, %v534, %v304
  %v551 = vsel %vm412, %v535, %v305
  %v552 = vsel %vm412, %v536, %v306
  %v553 = vsel %vm412, %v537, %v307
  %v554 = vsel %vm412, %v538, %v308
  %v555 = vsel %vm412, %v539, %v309
  %v556 = vsel %vm412, %v540, %v310
  %v557 = vsel %vm412, %v541, %v311
  %v558 = vsel %vm412, %v542, %v312
  %v559 = vsel %vm429, %v543, %v329
  %v560 = vsel %vm429, %v544, %v330
  %v561 = vsel %vm429, %v545, %v331
  %v562 = vsel %vm429, %v546, %v332
  %v563 = vsel %vm429, %v547, %v333
  %v564 = vsel %vm429, %v548, %v334
  %v565 = vsel %vm429, %v549, %v335
  %v566 = vsel %vm429, %v550, %v336
  %v567 = vsel %vm429, %v551, %v337
  %v568 = vsel %vm429, %v552, %v338
  %v569 = vsel %vm429, %v553, %v339
  %v570 = vsel %vm429, %v554, %v340
  %v571 = vsel %vm429, %v555, %v341
  %v572 = vsel %vm429, %v556, %v342
  %v573 = vsel %vm429, %v557, %v343
  %v574 = vsel %vm429, %v558, %v344
  %v575 = vmul.f32 %v463, 0.034537863
  %v576 = vmul.f32 %v202, 0.034537863
  %v577 = vmul.f32 %v464, 0.034537863
  %v578 = vmul.f32 %v204, 0.034537863
  %v579 = vmul.f32 %v465, 0.034537863
  %v580 = vmul.f32 %v206, 0.034537863
  %v581 = vmul.f32 %v466, 0.034537863
  %v582 = vmul.f32 %v208, 0.034537863
  %v583 = vmul.f32 %v467, 0.034537863
  %v584 = vmul.f32 %v210, 0.034537863
  %v585 = vmul.f32 %v468, 0.034537863
  %v586 = vmul.f32 %v212, 0.034537863
  %v587 = vmul.f32 %v469, 0.034537863
  %v588 = vmul.f32 %v214, 0.034537863
  %v589 = vmul.f32 %v470, 0.034537863
  %v590 = vmul.f32 %v216, 0.034537863
  %v591 = vmul.f32 %v471, 0.034537863
  %v592 = vmul.f32 %v218, 0.034537863
  %v593 = vmul.f32 %v472, 0.034537863
  %v594 = vmul.f32 %v220, 0.034537863
  %v595 = vmul.f32 %v473, 0.034537863
  %v596 = vmul.f32 %v222, 0.034537863
  %v597 = vmul.f32 %v474, 0.034537863
  %v598 = vmul.f32 %v224, 0.034537863
  %v599 = vmul.f32 %v475, 0.034537863
  %v600 = vmul.f32 %v226, 0.034537863
  %v601 = vmul.f32 %v476, 0.034537863
  %v602 = vmul.f32 %v228, 0.034537863
  %v603 = vmul.f32 %v477, 0.034537863
  %v604 = vmul.f32 %v230, 0.034537863
  %v605 = vmul.f32 %v478, 0.034537863
  %v606 = vmul.f32 %v232, 0.034537863
  %v607 = vmul.f32 %v463, 0.044793192
  %v608 = vmul.f32 %v202, 0.044793192
  %v609 = vmul.f32 %v479, 0.044793192
  %v610 = vmul.f32 %v464, 0.044793192
  %v611 = vmul.f32 %v204, 0.044793192
  %v612 = vmul.f32 %v480, 0.044793192
  %v613 = vmul.f32 %v465, 0.044793192
  %v614 = vmul.f32 %v206, 0.044793192
  %v615 = vmul.f32 %v481, 0.044793192
  %v616 = vmul.f32 %v466, 0.044793192
  %v617 = vmul.f32 %v208, 0.044793192
  %v618 = vmul.f32 %v482, 0.044793192
  %v619 = vmul.f32 %v467, 0.044793192
  %v620 = vmul.f32 %v210, 0.044793192
  %v621 = vmul.f32 %v483, 0.044793192
  %v622 = vmul.f32 %v468, 0.044793192
  %v623 = vmul.f32 %v212, 0.044793192
  %v624 = vmul.f32 %v484, 0.044793192
  %v625 = vmul.f32 %v469, 0.044793192
  %v626 = vmul.f32 %v214, 0.044793192
  %v627 = vmul.f32 %v485, 0.044793192
  %v628 = vmul.f32 %v470, 0.044793192
  %v629 = vmul.f32 %v216, 0.044793192
  %v630 = vmul.f32 %v486, 0.044793192
  %v631 = vmul.f32 %v471, 0.044793192
  %v632 = vmul.f32 %v218, 0.044793192
  %v633 = vmul.f32 %v487, 0.044793192
  %v634 = vmul.f32 %v472, 0.044793192
  %v635 = vmul.f32 %v220, 0.044793192
  %v636 = vmul.f32 %v488, 0.044793192
  %v637 = vmul.f32 %v473, 0.044793192
  %v638 = vmul.f32 %v222, 0.044793192
  %v639 = vmul.f32 %v489, 0.044793192
  %v640 = vmul.f32 %v474, 0.044793192
  %v641 = vmul.f32 %v224, 0.044793192
  %v642 = vmul.f32 %v490, 0.044793192
  %v643 = vmul.f32 %v475, 0.044793192
  %v644 = vmul.f32 %v226, 0.044793192
  %v645 = vmul.f32 %v491, 0.044793192
  %v646 = vmul.f32 %v476, 0.044793192
  %v647 = vmul.f32 %v228, 0.044793192
  %v648 = vmul.f32 %v492, 0.044793192
  %v649 = vmul.f32 %v477, 0.044793192
  %v650 = vmul.f32 %v230, 0.044793192
  %v651 = vmul.f32 %v493, 0.044793192
  %v652 = vmul.f32 %v478, 0.044793192
  %v653 = vmul.f32 %v232, 0.044793192
  %v654 = vmul.f32 %v494, 0.044793192
  %v655 = vmul.f32 %v463, 0.055815756
  %v656 = vmul.f32 %v202, 0.055815756
  %v657 = vmul.f32 %v479, 0.055815756
  %v658 = vmul.f32 %v464, 0.055815756
  %v659 = vmul.f32 %v204, 0.055815756
  %v660 = vmul.f32 %v480, 0.055815756
  %v661 = vmul.f32 %v465, 0.055815756
  %v662 = vmul.f32 %v206, 0.055815756
  %v663 = vmul.f32 %v481, 0.055815756
  %v664 = vmul.f32 %v466, 0.055815756
  %v665 = vmul.f32 %v208, 0.055815756
  %v666 = vmul.f32 %v482, 0.055815756
  %v667 = vmul.f32 %v467, 0.055815756
  %v668 = vmul.f32 %v210, 0.055815756
  %v669 = vmul.f32 %v483, 0.055815756
  %v670 = vmul.f32 %v468, 0.055815756
  %v671 = vmul.f32 %v212, 0.055815756
  %v672 = vmul.f32 %v484, 0.055815756
  %v673 = vmul.f32 %v469, 0.055815756
  %v674 = vmul.f32 %v214, 0.055815756
  %v675 = vmul.f32 %v485, 0.055815756
  %v676 = vmul.f32 %v470, 0.055815756
  %v677 = vmul.f32 %v216, 0.055815756
  %v678 = vmul.f32 %v486, 0.055815756
  %v679 = vmul.f32 %v471, 0.055815756
  %v680 = vmul.f32 %v218, 0.055815756
  %v681 = vmul.f32 %v487, 0.055815756
  %v682 = vmul.f32 %v472, 0.055815756
  %v683 = vmul.f32 %v220, 0.055815756
  %v684 = vmul.f32 %v488, 0.055815756
  %v685 = vmul.f32 %v473, 0.055815756
  %v686 = vmul.f32 %v222, 0.055815756
  %v687 = vmul.f32 %v489, 0.055815756
  %v688 = vmul.f32 %v474, 0.055815756
  %v689 = vmul.f32 %v224, 0.055815756
  %v690 = vmul.f32 %v490, 0.055815756
  %v691 = vmul.f32 %v475, 0.055815756
  %v692 = vmul.f32 %v226, 0.055815756
  %v693 = vmul.f32 %v491, 0.055815756
  %v694 = vmul.f32 %v476, 0.055815756
  %v695 = vmul.f32 %v228, 0.055815756
  %v696 = vmul.f32 %v492, 0.055815756
  %v697 = vmul.f32 %v477, 0.055815756
  %v698 = vmul.f32 %v230, 0.055815756
  %v699 = vmul.f32 %v493, 0.055815756
  %v700 = vmul.f32 %v478, 0.055815756
  %v701 = vmul.f32 %v232, 0.055815756
  %v702 = vmul.f32 %v494, 0.055815756
  %v751 = vrot.slane %v655, 2
  %v752 = vrot.slane %v656, 2
  %v753 = vsel %vm446, %v751, %v752
  %v754 = vrot.slane %v657, 2
  %v755 = vsel %vm446, %v752, %v754
  %v756 = vrot.slane %v658, 2
  %v757 = vrot.slane %v659, 2
  %v758 = vsel %vm446, %v756, %v757
  %v759 = vrot.slane %v660, 2
  %v760 = vsel %vm446, %v757, %v759
  %v761 = vrot.slane %v661, 2
  %v762 = vrot.slane %v662, 2
  %v763 = vsel %vm446, %v761, %v762
  %v764 = vrot.slane %v663, 2
  %v765 = vsel %vm446, %v762, %v764
  %v766 = vrot.slane %v664, 2
  %v767 = vrot.slane %v665, 2
  %v768 = vsel %vm446, %v766, %v767
  %v769 = vrot.slane %v666, 2
  %v770 = vsel %vm446, %v767, %v769
  %v771 = vrot.slane %v667, 2
  %v772 = vrot.slane %v668, 2
  %v773 = vsel %vm446, %v771, %v772
  %v774 = vrot.slane %v669, 2
  %v775 = vsel %vm446, %v772, %v774
  %v776 = vrot.slane %v670, 2
  %v777 = vrot.slane %v671, 2
  %v778 = vsel %vm446, %v776, %v777
  %v779 = vrot.slane %v672, 2
  %v780 = vsel %vm446, %v777, %v779
  %v781 = vrot.slane %v673, 2
  %v782 = vrot.slane %v674, 2
  %v783 = vsel %vm446, %v781, %v782
  %v784 = vrot.slane %v675, 2
  %v785 = vsel %vm446, %v782, %v784
  %v786 = vrot.slane %v676, 2
  %v787 = vrot.slane %v677, 2
  %v788 = vsel %vm446, %v786, %v787
  %v789 = vrot.slane %v678, 2
  %v790 = vsel %vm446, %v787, %v789
  %v791 = vrot.slane %v679, 2
  %v792 = vrot.slane %v680, 2
  %v793 = vsel %vm446, %v791, %v792
  %v794 = vrot.slane %v681, 2
  %v795 = vsel %vm446, %v792, %v794
  %v796 = vrot.slane %v682, 2
  %v797 = vrot.slane %v683, 2
  %v798 = vsel %vm446, %v796, %v797
  %v799 = vrot.slane %v684, 2
  %v800 = vsel %vm446, %v797, %v799
  %v801 = vrot.slane %v685, 2
  %v802 = vrot.slane %v686, 2
  %v803 = vsel %vm446, %v801, %v802
  %v804 = vrot.slane %v687, 2
  %v805 = vsel %vm446, %v802, %v804
  %v806 = vrot.slane %v688, 2
  %v807 = vrot.slane %v689, 2
  %v808 = vsel %vm446, %v806, %v807
  %v809 = vrot.slane %v690, 2
  %v810 = vsel %vm446, %v807, %v809
  %v811 = vrot.slane %v691, 2
  %v812 = vrot.slane %v692, 2
  %v813 = vsel %vm446, %v811, %v812
  %v814 = vrot.slane %v693, 2
  %v815 = vsel %vm446, %v812, %v814
  %v816 = vrot.slane %v694, 2
  %v817 = vrot.slane %v695, 2
  %v818 = vsel %vm446, %v816, %v817
  %v819 = vrot.slane %v696, 2
  %v820 = vsel %vm446, %v817, %v819
  %v821 = vrot.slane %v697, 2
  %v822 = vrot.slane %v698, 2
  %v823 = vsel %vm446, %v821, %v822
  %v824 = vrot.slane %v699, 2
  %v825 = vsel %vm446, %v822, %v824
  %v826 = vrot.slane %v700, 2
  %v827 = vrot.slane %v701, 2
  %v828 = vsel %vm446, %v826, %v827
  %v829 = vrot.slane %v702, 2
  %v830 = vsel %vm446, %v827, %v829
  %v863 = vadd.f32 %v575, %v753
  %v864 = vadd.f32 %v576, %v755
  %v865 = vadd.f32 %v577, %v758
  %v866 = vadd.f32 %v578, %v760
  %v867 = vadd.f32 %v579, %v763
  %v868 = vadd.f32 %v580, %v765
  %v869 = vadd.f32 %v581, %v768
  %v870 = vadd.f32 %v582, %v770
  %v871 = vadd.f32 %v583, %v773
  %v872 = vadd.f32 %v584, %v775
  %v873 = vadd.f32 %v585, %v778
  %v874 = vadd.f32 %v586, %v780
  %v875 = vadd.f32 %v587, %v783
  %v876 = vadd.f32 %v588, %v785
  %v877 = vadd.f32 %v589, %v788
  %v878 = vadd.f32 %v590, %v790
  %v879 = vadd.f32 %v591, %v793
  %v880 = vadd.f32 %v592, %v795
  %v881 = vadd.f32 %v593, %v798
  %v882 = vadd.f32 %v594, %v800
  %v883 = vadd.f32 %v595, %v803
  %v884 = vadd.f32 %v596, %v805
  %v885 = vadd.f32 %v597, %v808
  %v886 = vadd.f32 %v598, %v810
  %v887 = vadd.f32 %v599, %v813
  %v888 = vadd.f32 %v600, %v815
  %v889 = vadd.f32 %v601, %v818
  %v890 = vadd.f32 %v602, %v820
  %v891 = vadd.f32 %v603, %v823
  %v892 = vadd.f32 %v604, %v825
  %v893 = vadd.f32 %v605, %v828
  %v894 = vadd.f32 %v606, %v830
  %v895 = vmul.f32 %v463, 0.066823594
  %v896 = vmul.f32 %v202, 0.066823594
  %v897 = vmul.f32 %v479, 0.066823594
  %v898 = vmul.f32 %v464, 0.066823594
  %v899 = vmul.f32 %v204, 0.066823594
  %v900 = vmul.f32 %v480, 0.066823594
  %v901 = vmul.f32 %v465, 0.066823594
  %v902 = vmul.f32 %v206, 0.066823594
  %v903 = vmul.f32 %v481, 0.066823594
  %v904 = vmul.f32 %v466, 0.066823594
  %v905 = vmul.f32 %v208, 0.066823594
  %v906 = vmul.f32 %v482, 0.066823594
  %v907 = vmul.f32 %v467, 0.066823594
  %v908 = vmul.f32 %v210, 0.066823594
  %v909 = vmul.f32 %v483, 0.066823594
  %v910 = vmul.f32 %v468, 0.066823594
  %v911 = vmul.f32 %v212, 0.066823594
  %v912 = vmul.f32 %v484, 0.066823594
  %v913 = vmul.f32 %v469, 0.066823594
  %v914 = vmul.f32 %v214, 0.066823594
  %v915 = vmul.f32 %v485, 0.066823594
  %v916 = vmul.f32 %v470, 0.066823594
  %v917 = vmul.f32 %v216, 0.066823594
  %v918 = vmul.f32 %v486, 0.066823594
  %v919 = vmul.f32 %v471, 0.066823594
  %v920 = vmul.f32 %v218, 0.066823594
  %v921 = vmul.f32 %v487, 0.066823594
  %v922 = vmul.f32 %v472, 0.066823594
  %v923 = vmul.f32 %v220, 0.066823594
  %v924 = vmul.f32 %v488, 0.066823594
  %v925 = vmul.f32 %v473, 0.066823594
  %v926 = vmul.f32 %v222, 0.066823594
  %v927 = vmul.f32 %v489, 0.066823594
  %v928 = vmul.f32 %v474, 0.066823594
  %v929 = vmul.f32 %v224, 0.066823594
  %v930 = vmul.f32 %v490, 0.066823594
  %v931 = vmul.f32 %v475, 0.066823594
  %v932 = vmul.f32 %v226, 0.066823594
  %v933 = vmul.f32 %v491, 0.066823594
  %v934 = vmul.f32 %v476, 0.066823594
  %v935 = vmul.f32 %v228, 0.066823594
  %v936 = vmul.f32 %v492, 0.066823594
  %v937 = vmul.f32 %v477, 0.066823594
  %v938 = vmul.f32 %v230, 0.066823594
  %v939 = vmul.f32 %v493, 0.066823594
  %v940 = vmul.f32 %v478, 0.066823594
  %v941 = vmul.f32 %v232, 0.066823594
  %v942 = vmul.f32 %v494, 0.066823594
  %v991 = vrot.slane %v895, 2
  %v992 = vrot.slane %v896, 2
  %v993 = vsel %vm446, %v991, %v992
  %v994 = vrot.slane %v897, 2
  %v995 = vsel %vm446, %v992, %v994
  %v996 = vrot.slane %v898, 2
  %v997 = vrot.slane %v899, 2
  %v998 = vsel %vm446, %v996, %v997
  %v999 = vrot.slane %v900, 2
  %v1000 = vsel %vm446, %v997, %v999
  %v1001 = vrot.slane %v901, 2
  %v1002 = vrot.slane %v902, 2
  %v1003 = vsel %vm446, %v1001, %v1002
  %v1004 = vrot.slane %v903, 2
  %v1005 = vsel %vm446, %v1002, %v1004
  %v1006 = vrot.slane %v904, 2
  %v1007 = vrot.slane %v905, 2
  %v1008 = vsel %vm446, %v1006, %v1007
  %v1009 = vrot.slane %v906, 2
  %v1010 = vsel %vm446, %v1007, %v1009
  %v1011 = vrot.slane %v907, 2
  %v1012 = vrot.slane %v908, 2
  %v1013 = vsel %vm446, %v1011, %v1012
  %v1014 = vrot.slane %v909, 2
  %v1015 = vsel %vm446, %v1012, %v1014
  %v1016 = vrot.slane %v910, 2
  %v1017 = vrot.slane %v911, 2
  %v1018 = vsel %vm446, %v1016, %v1017
  %v1019 = vrot.slane %v912, 2
  %v1020 = vsel %vm446, %v1017, %v1019
  %v1021 = vrot.slane %v913, 2
  %v1022 = vrot.slane %v914, 2
  %v1023 = vsel %vm446, %v1021, %v1022
  %v1024 = vrot.slane %v915, 2
  %v1025 = vsel %vm446, %v1022, %v1024
  %v1026 = vrot.slane %v916, 2
  %v1027 = vrot.slane %v917, 2
  %v1028 = vsel %vm446, %v1026, %v1027
  %v1029 = vrot.slane %v918, 2
  %v1030 = vsel %vm446, %v1027, %v1029
  %v1031 = vrot.slane %v919, 2
  %v1032 = vrot.slane %v920, 2
  %v1033 = vsel %vm446, %v1031, %v1032
  %v1034 = vrot.slane %v921, 2
  %v1035 = vsel %vm446, %v1032, %v1034
  %v1036 = vrot.slane %v922, 2
  %v1037 = vrot.slane %v923, 2
  %v1038 = vsel %vm446, %v1036, %v1037
  %v1039 = vrot.slane %v924, 2
  %v1040 = vsel %vm446, %v1037, %v1039
  %v1041 = vrot.slane %v925, 2
  %v1042 = vrot.slane %v926, 2
  %v1043 = vsel %vm446, %v1041, %v1042
  %v1044 = vrot.slane %v927, 2
  %v1045 = vsel %vm446, %v1042, %v1044
  %v1046 = vrot.slane %v928, 2
  %v1047 = vrot.slane %v929, 2
  %v1048 = vsel %vm446, %v1046, %v1047
  %v1049 = vrot.slane %v930, 2
  %v1050 = vsel %vm446, %v1047, %v1049
  %v1051 = vrot.slane %v931, 2
  %v1052 = vrot.slane %v932, 2
  %v1053 = vsel %vm446, %v1051, %v1052
  %v1054 = vrot.slane %v933, 2
  %v1055 = vsel %vm446, %v1052, %v1054
  %v1056 = vrot.slane %v934, 2
  %v1057 = vrot.slane %v935, 2
  %v1058 = vsel %vm446, %v1056, %v1057
  %v1059 = vrot.slane %v936, 2
  %v1060 = vsel %vm446, %v1057, %v1059
  %v1061 = vrot.slane %v937, 2
  %v1062 = vrot.slane %v938, 2
  %v1063 = vsel %vm446, %v1061, %v1062
  %v1064 = vrot.slane %v939, 2
  %v1065 = vsel %vm446, %v1062, %v1064
  %v1066 = vrot.slane %v940, 2
  %v1067 = vrot.slane %v941, 2
  %v1068 = vsel %vm446, %v1066, %v1067
  %v1069 = vrot.slane %v942, 2
  %v1070 = vsel %vm446, %v1067, %v1069
  %v1119 = vadd.f32 %v607, %v993
  %v1120 = vadd.f32 %v608, %v995
  %v1121 = vadd.f32 %v609, %v994
  %v1122 = vadd.f32 %v610, %v998
  %v1123 = vadd.f32 %v611, %v1000
  %v1124 = vadd.f32 %v612, %v999
  %v1125 = vadd.f32 %v613, %v1003
  %v1126 = vadd.f32 %v614, %v1005
  %v1127 = vadd.f32 %v615, %v1004
  %v1128 = vadd.f32 %v616, %v1008
  %v1129 = vadd.f32 %v617, %v1010
  %v1130 = vadd.f32 %v618, %v1009
  %v1131 = vadd.f32 %v619, %v1013
  %v1132 = vadd.f32 %v620, %v1015
  %v1133 = vadd.f32 %v621, %v1014
  %v1134 = vadd.f32 %v622, %v1018
  %v1135 = vadd.f32 %v623, %v1020
  %v1136 = vadd.f32 %v624, %v1019
  %v1137 = vadd.f32 %v625, %v1023
  %v1138 = vadd.f32 %v626, %v1025
  %v1139 = vadd.f32 %v627, %v1024
  %v1140 = vadd.f32 %v628, %v1028
  %v1141 = vadd.f32 %v629, %v1030
  %v1142 = vadd.f32 %v630, %v1029
  %v1143 = vadd.f32 %v631, %v1033
  %v1144 = vadd.f32 %v632, %v1035
  %v1145 = vadd.f32 %v633, %v1034
  %v1146 = vadd.f32 %v634, %v1038
  %v1147 = vadd.f32 %v635, %v1040
  %v1148 = vadd.f32 %v636, %v1039
  %v1149 = vadd.f32 %v637, %v1043
  %v1150 = vadd.f32 %v638, %v1045
  %v1151 = vadd.f32 %v639, %v1044
  %v1152 = vadd.f32 %v640, %v1048
  %v1153 = vadd.f32 %v641, %v1050
  %v1154 = vadd.f32 %v642, %v1049
  %v1155 = vadd.f32 %v643, %v1053
  %v1156 = vadd.f32 %v644, %v1055
  %v1157 = vadd.f32 %v645, %v1054
  %v1158 = vadd.f32 %v646, %v1058
  %v1159 = vadd.f32 %v647, %v1060
  %v1160 = vadd.f32 %v648, %v1059
  %v1161 = vadd.f32 %v649, %v1063
  %v1162 = vadd.f32 %v650, %v1065
  %v1163 = vadd.f32 %v651, %v1064
  %v1164 = vadd.f32 %v652, %v1068
  %v1165 = vadd.f32 %v653, %v1070
  %v1166 = vadd.f32 %v654, %v1069
  %v1167 = vmul.f32 %v463, 0.07686543
  %v1168 = vmul.f32 %v202, 0.07686543
  %v1169 = vmul.f32 %v479, 0.07686543
  %v1170 = vmul.f32 %v464, 0.07686543
  %v1171 = vmul.f32 %v204, 0.07686543
  %v1172 = vmul.f32 %v480, 0.07686543
  %v1173 = vmul.f32 %v465, 0.07686543
  %v1174 = vmul.f32 %v206, 0.07686543
  %v1175 = vmul.f32 %v481, 0.07686543
  %v1176 = vmul.f32 %v466, 0.07686543
  %v1177 = vmul.f32 %v208, 0.07686543
  %v1178 = vmul.f32 %v482, 0.07686543
  %v1179 = vmul.f32 %v467, 0.07686543
  %v1180 = vmul.f32 %v210, 0.07686543
  %v1181 = vmul.f32 %v483, 0.07686543
  %v1182 = vmul.f32 %v468, 0.07686543
  %v1183 = vmul.f32 %v212, 0.07686543
  %v1184 = vmul.f32 %v484, 0.07686543
  %v1185 = vmul.f32 %v469, 0.07686543
  %v1186 = vmul.f32 %v214, 0.07686543
  %v1187 = vmul.f32 %v485, 0.07686543
  %v1188 = vmul.f32 %v470, 0.07686543
  %v1189 = vmul.f32 %v216, 0.07686543
  %v1190 = vmul.f32 %v486, 0.07686543
  %v1191 = vmul.f32 %v471, 0.07686543
  %v1192 = vmul.f32 %v218, 0.07686543
  %v1193 = vmul.f32 %v487, 0.07686543
  %v1194 = vmul.f32 %v472, 0.07686543
  %v1195 = vmul.f32 %v220, 0.07686543
  %v1196 = vmul.f32 %v488, 0.07686543
  %v1197 = vmul.f32 %v473, 0.07686543
  %v1198 = vmul.f32 %v222, 0.07686543
  %v1199 = vmul.f32 %v489, 0.07686543
  %v1200 = vmul.f32 %v474, 0.07686543
  %v1201 = vmul.f32 %v224, 0.07686543
  %v1202 = vmul.f32 %v490, 0.07686543
  %v1203 = vmul.f32 %v475, 0.07686543
  %v1204 = vmul.f32 %v226, 0.07686543
  %v1205 = vmul.f32 %v491, 0.07686543
  %v1206 = vmul.f32 %v476, 0.07686543
  %v1207 = vmul.f32 %v228, 0.07686543
  %v1208 = vmul.f32 %v492, 0.07686543
  %v1209 = vmul.f32 %v477, 0.07686543
  %v1210 = vmul.f32 %v230, 0.07686543
  %v1211 = vmul.f32 %v493, 0.07686543
  %v1212 = vmul.f32 %v478, 0.07686543
  %v1213 = vmul.f32 %v232, 0.07686543
  %v1214 = vmul.f32 %v494, 0.07686543
  %v1263 = vrot.slane %v1167, 4
  %v1264 = vrot.slane %v1168, 4
  %v1265 = vsel %vm412, %v1263, %v1264
  %v1266 = vrot.slane %v1169, 4
  %v1267 = vsel %vm412, %v1264, %v1266
  %v1268 = vrot.slane %v1170, 4
  %v1269 = vrot.slane %v1171, 4
  %v1270 = vsel %vm412, %v1268, %v1269
  %v1271 = vrot.slane %v1172, 4
  %v1272 = vsel %vm412, %v1269, %v1271
  %v1273 = vrot.slane %v1173, 4
  %v1274 = vrot.slane %v1174, 4
  %v1275 = vsel %vm412, %v1273, %v1274
  %v1276 = vrot.slane %v1175, 4
  %v1277 = vsel %vm412, %v1274, %v1276
  %v1278 = vrot.slane %v1176, 4
  %v1279 = vrot.slane %v1177, 4
  %v1280 = vsel %vm412, %v1278, %v1279
  %v1281 = vrot.slane %v1178, 4
  %v1282 = vsel %vm412, %v1279, %v1281
  %v1283 = vrot.slane %v1179, 4
  %v1284 = vrot.slane %v1180, 4
  %v1285 = vsel %vm412, %v1283, %v1284
  %v1286 = vrot.slane %v1181, 4
  %v1287 = vsel %vm412, %v1284, %v1286
  %v1288 = vrot.slane %v1182, 4
  %v1289 = vrot.slane %v1183, 4
  %v1290 = vsel %vm412, %v1288, %v1289
  %v1291 = vrot.slane %v1184, 4
  %v1292 = vsel %vm412, %v1289, %v1291
  %v1293 = vrot.slane %v1185, 4
  %v1294 = vrot.slane %v1186, 4
  %v1295 = vsel %vm412, %v1293, %v1294
  %v1296 = vrot.slane %v1187, 4
  %v1297 = vsel %vm412, %v1294, %v1296
  %v1298 = vrot.slane %v1188, 4
  %v1299 = vrot.slane %v1189, 4
  %v1300 = vsel %vm412, %v1298, %v1299
  %v1301 = vrot.slane %v1190, 4
  %v1302 = vsel %vm412, %v1299, %v1301
  %v1303 = vrot.slane %v1191, 4
  %v1304 = vrot.slane %v1192, 4
  %v1305 = vsel %vm412, %v1303, %v1304
  %v1306 = vrot.slane %v1193, 4
  %v1307 = vsel %vm412, %v1304, %v1306
  %v1308 = vrot.slane %v1194, 4
  %v1309 = vrot.slane %v1195, 4
  %v1310 = vsel %vm412, %v1308, %v1309
  %v1311 = vrot.slane %v1196, 4
  %v1312 = vsel %vm412, %v1309, %v1311
  %v1313 = vrot.slane %v1197, 4
  %v1314 = vrot.slane %v1198, 4
  %v1315 = vsel %vm412, %v1313, %v1314
  %v1316 = vrot.slane %v1199, 4
  %v1317 = vsel %vm412, %v1314, %v1316
  %v1318 = vrot.slane %v1200, 4
  %v1319 = vrot.slane %v1201, 4
  %v1320 = vsel %vm412, %v1318, %v1319
  %v1321 = vrot.slane %v1202, 4
  %v1322 = vsel %vm412, %v1319, %v1321
  %v1323 = vrot.slane %v1203, 4
  %v1324 = vrot.slane %v1204, 4
  %v1325 = vsel %vm412, %v1323, %v1324
  %v1326 = vrot.slane %v1205, 4
  %v1327 = vsel %vm412, %v1324, %v1326
  %v1328 = vrot.slane %v1206, 4
  %v1329 = vrot.slane %v1207, 4
  %v1330 = vsel %vm412, %v1328, %v1329
  %v1331 = vrot.slane %v1208, 4
  %v1332 = vsel %vm412, %v1329, %v1331
  %v1333 = vrot.slane %v1209, 4
  %v1334 = vrot.slane %v1210, 4
  %v1335 = vsel %vm412, %v1333, %v1334
  %v1336 = vrot.slane %v1211, 4
  %v1337 = vsel %vm412, %v1334, %v1336
  %v1338 = vrot.slane %v1212, 4
  %v1339 = vrot.slane %v1213, 4
  %v1340 = vsel %vm412, %v1338, %v1339
  %v1341 = vrot.slane %v1214, 4
  %v1342 = vsel %vm412, %v1339, %v1341
  %v1375 = vadd.f32 %v863, %v1265
  %v1376 = vadd.f32 %v864, %v1267
  %v1377 = vadd.f32 %v865, %v1270
  %v1378 = vadd.f32 %v866, %v1272
  %v1379 = vadd.f32 %v867, %v1275
  %v1380 = vadd.f32 %v868, %v1277
  %v1381 = vadd.f32 %v869, %v1280
  %v1382 = vadd.f32 %v870, %v1282
  %v1383 = vadd.f32 %v871, %v1285
  %v1384 = vadd.f32 %v872, %v1287
  %v1385 = vadd.f32 %v873, %v1290
  %v1386 = vadd.f32 %v874, %v1292
  %v1387 = vadd.f32 %v875, %v1295
  %v1388 = vadd.f32 %v876, %v1297
  %v1389 = vadd.f32 %v877, %v1300
  %v1390 = vadd.f32 %v878, %v1302
  %v1391 = vadd.f32 %v879, %v1305
  %v1392 = vadd.f32 %v880, %v1307
  %v1393 = vadd.f32 %v881, %v1310
  %v1394 = vadd.f32 %v882, %v1312
  %v1395 = vadd.f32 %v883, %v1315
  %v1396 = vadd.f32 %v884, %v1317
  %v1397 = vadd.f32 %v885, %v1320
  %v1398 = vadd.f32 %v886, %v1322
  %v1399 = vadd.f32 %v887, %v1325
  %v1400 = vadd.f32 %v888, %v1327
  %v1401 = vadd.f32 %v889, %v1330
  %v1402 = vadd.f32 %v890, %v1332
  %v1403 = vadd.f32 %v891, %v1335
  %v1404 = vadd.f32 %v892, %v1337
  %v1405 = vadd.f32 %v893, %v1340
  %v1406 = vadd.f32 %v894, %v1342
  %v1407 = vmul.f32 %v463, 0.084949434
  %v1408 = vmul.f32 %v202, 0.084949434
  %v1409 = vmul.f32 %v479, 0.084949434
  %v1410 = vmul.f32 %v464, 0.084949434
  %v1411 = vmul.f32 %v204, 0.084949434
  %v1412 = vmul.f32 %v480, 0.084949434
  %v1413 = vmul.f32 %v465, 0.084949434
  %v1414 = vmul.f32 %v206, 0.084949434
  %v1415 = vmul.f32 %v481, 0.084949434
  %v1416 = vmul.f32 %v466, 0.084949434
  %v1417 = vmul.f32 %v208, 0.084949434
  %v1418 = vmul.f32 %v482, 0.084949434
  %v1419 = vmul.f32 %v467, 0.084949434
  %v1420 = vmul.f32 %v210, 0.084949434
  %v1421 = vmul.f32 %v483, 0.084949434
  %v1422 = vmul.f32 %v468, 0.084949434
  %v1423 = vmul.f32 %v212, 0.084949434
  %v1424 = vmul.f32 %v484, 0.084949434
  %v1425 = vmul.f32 %v469, 0.084949434
  %v1426 = vmul.f32 %v214, 0.084949434
  %v1427 = vmul.f32 %v485, 0.084949434
  %v1428 = vmul.f32 %v470, 0.084949434
  %v1429 = vmul.f32 %v216, 0.084949434
  %v1430 = vmul.f32 %v486, 0.084949434
  %v1431 = vmul.f32 %v471, 0.084949434
  %v1432 = vmul.f32 %v218, 0.084949434
  %v1433 = vmul.f32 %v487, 0.084949434
  %v1434 = vmul.f32 %v472, 0.084949434
  %v1435 = vmul.f32 %v220, 0.084949434
  %v1436 = vmul.f32 %v488, 0.084949434
  %v1437 = vmul.f32 %v473, 0.084949434
  %v1438 = vmul.f32 %v222, 0.084949434
  %v1439 = vmul.f32 %v489, 0.084949434
  %v1440 = vmul.f32 %v474, 0.084949434
  %v1441 = vmul.f32 %v224, 0.084949434
  %v1442 = vmul.f32 %v490, 0.084949434
  %v1443 = vmul.f32 %v475, 0.084949434
  %v1444 = vmul.f32 %v226, 0.084949434
  %v1445 = vmul.f32 %v491, 0.084949434
  %v1446 = vmul.f32 %v476, 0.084949434
  %v1447 = vmul.f32 %v228, 0.084949434
  %v1448 = vmul.f32 %v492, 0.084949434
  %v1449 = vmul.f32 %v477, 0.084949434
  %v1450 = vmul.f32 %v230, 0.084949434
  %v1451 = vmul.f32 %v493, 0.084949434
  %v1452 = vmul.f32 %v478, 0.084949434
  %v1453 = vmul.f32 %v232, 0.084949434
  %v1454 = vmul.f32 %v494, 0.084949434
  %v1503 = vrot.slane %v1407, 4
  %v1504 = vrot.slane %v1408, 4
  %v1505 = vsel %vm412, %v1503, %v1504
  %v1506 = vrot.slane %v1409, 4
  %v1507 = vsel %vm412, %v1504, %v1506
  %v1508 = vrot.slane %v1410, 4
  %v1509 = vrot.slane %v1411, 4
  %v1510 = vsel %vm412, %v1508, %v1509
  %v1511 = vrot.slane %v1412, 4
  %v1512 = vsel %vm412, %v1509, %v1511
  %v1513 = vrot.slane %v1413, 4
  %v1514 = vrot.slane %v1414, 4
  %v1515 = vsel %vm412, %v1513, %v1514
  %v1516 = vrot.slane %v1415, 4
  %v1517 = vsel %vm412, %v1514, %v1516
  %v1518 = vrot.slane %v1416, 4
  %v1519 = vrot.slane %v1417, 4
  %v1520 = vsel %vm412, %v1518, %v1519
  %v1521 = vrot.slane %v1418, 4
  %v1522 = vsel %vm412, %v1519, %v1521
  %v1523 = vrot.slane %v1419, 4
  %v1524 = vrot.slane %v1420, 4
  %v1525 = vsel %vm412, %v1523, %v1524
  %v1526 = vrot.slane %v1421, 4
  %v1527 = vsel %vm412, %v1524, %v1526
  %v1528 = vrot.slane %v1422, 4
  %v1529 = vrot.slane %v1423, 4
  %v1530 = vsel %vm412, %v1528, %v1529
  %v1531 = vrot.slane %v1424, 4
  %v1532 = vsel %vm412, %v1529, %v1531
  %v1533 = vrot.slane %v1425, 4
  %v1534 = vrot.slane %v1426, 4
  %v1535 = vsel %vm412, %v1533, %v1534
  %v1536 = vrot.slane %v1427, 4
  %v1537 = vsel %vm412, %v1534, %v1536
  %v1538 = vrot.slane %v1428, 4
  %v1539 = vrot.slane %v1429, 4
  %v1540 = vsel %vm412, %v1538, %v1539
  %v1541 = vrot.slane %v1430, 4
  %v1542 = vsel %vm412, %v1539, %v1541
  %v1543 = vrot.slane %v1431, 4
  %v1544 = vrot.slane %v1432, 4
  %v1545 = vsel %vm412, %v1543, %v1544
  %v1546 = vrot.slane %v1433, 4
  %v1547 = vsel %vm412, %v1544, %v1546
  %v1548 = vrot.slane %v1434, 4
  %v1549 = vrot.slane %v1435, 4
  %v1550 = vsel %vm412, %v1548, %v1549
  %v1551 = vrot.slane %v1436, 4
  %v1552 = vsel %vm412, %v1549, %v1551
  %v1553 = vrot.slane %v1437, 4
  %v1554 = vrot.slane %v1438, 4
  %v1555 = vsel %vm412, %v1553, %v1554
  %v1556 = vrot.slane %v1439, 4
  %v1557 = vsel %vm412, %v1554, %v1556
  %v1558 = vrot.slane %v1440, 4
  %v1559 = vrot.slane %v1441, 4
  %v1560 = vsel %vm412, %v1558, %v1559
  %v1561 = vrot.slane %v1442, 4
  %v1562 = vsel %vm412, %v1559, %v1561
  %v1563 = vrot.slane %v1443, 4
  %v1564 = vrot.slane %v1444, 4
  %v1565 = vsel %vm412, %v1563, %v1564
  %v1566 = vrot.slane %v1445, 4
  %v1567 = vsel %vm412, %v1564, %v1566
  %v1568 = vrot.slane %v1446, 4
  %v1569 = vrot.slane %v1447, 4
  %v1570 = vsel %vm412, %v1568, %v1569
  %v1571 = vrot.slane %v1448, 4
  %v1572 = vsel %vm412, %v1569, %v1571
  %v1573 = vrot.slane %v1449, 4
  %v1574 = vrot.slane %v1450, 4
  %v1575 = vsel %vm412, %v1573, %v1574
  %v1576 = vrot.slane %v1451, 4
  %v1577 = vsel %vm412, %v1574, %v1576
  %v1578 = vrot.slane %v1452, 4
  %v1579 = vrot.slane %v1453, 4
  %v1580 = vsel %vm412, %v1578, %v1579
  %v1581 = vrot.slane %v1454, 4
  %v1582 = vsel %vm412, %v1579, %v1581
  %v1631 = vadd.f32 %v1119, %v1505
  %v1632 = vadd.f32 %v1120, %v1507
  %v1633 = vadd.f32 %v1121, %v1506
  %v1634 = vadd.f32 %v1122, %v1510
  %v1635 = vadd.f32 %v1123, %v1512
  %v1636 = vadd.f32 %v1124, %v1511
  %v1637 = vadd.f32 %v1125, %v1515
  %v1638 = vadd.f32 %v1126, %v1517
  %v1639 = vadd.f32 %v1127, %v1516
  %v1640 = vadd.f32 %v1128, %v1520
  %v1641 = vadd.f32 %v1129, %v1522
  %v1642 = vadd.f32 %v1130, %v1521
  %v1643 = vadd.f32 %v1131, %v1525
  %v1644 = vadd.f32 %v1132, %v1527
  %v1645 = vadd.f32 %v1133, %v1526
  %v1646 = vadd.f32 %v1134, %v1530
  %v1647 = vadd.f32 %v1135, %v1532
  %v1648 = vadd.f32 %v1136, %v1531
  %v1649 = vadd.f32 %v1137, %v1535
  %v1650 = vadd.f32 %v1138, %v1537
  %v1651 = vadd.f32 %v1139, %v1536
  %v1652 = vadd.f32 %v1140, %v1540
  %v1653 = vadd.f32 %v1141, %v1542
  %v1654 = vadd.f32 %v1142, %v1541
  %v1655 = vadd.f32 %v1143, %v1545
  %v1656 = vadd.f32 %v1144, %v1547
  %v1657 = vadd.f32 %v1145, %v1546
  %v1658 = vadd.f32 %v1146, %v1550
  %v1659 = vadd.f32 %v1147, %v1552
  %v1660 = vadd.f32 %v1148, %v1551
  %v1661 = vadd.f32 %v1149, %v1555
  %v1662 = vadd.f32 %v1150, %v1557
  %v1663 = vadd.f32 %v1151, %v1556
  %v1664 = vadd.f32 %v1152, %v1560
  %v1665 = vadd.f32 %v1153, %v1562
  %v1666 = vadd.f32 %v1154, %v1561
  %v1667 = vadd.f32 %v1155, %v1565
  %v1668 = vadd.f32 %v1156, %v1567
  %v1669 = vadd.f32 %v1157, %v1566
  %v1670 = vadd.f32 %v1158, %v1570
  %v1671 = vadd.f32 %v1159, %v1572
  %v1672 = vadd.f32 %v1160, %v1571
  %v1673 = vadd.f32 %v1161, %v1575
  %v1674 = vadd.f32 %v1162, %v1577
  %v1675 = vadd.f32 %v1163, %v1576
  %v1676 = vadd.f32 %v1164, %v1580
  %v1677 = vadd.f32 %v1165, %v1582
  %v1678 = vadd.f32 %v1166, %v1581
  %v1679 = vmul.f32 %v463, 0.09020241
  %v1680 = vmul.f32 %v202, 0.09020241
  %v1681 = vmul.f32 %v479, 0.09020241
  %v1682 = vmul.f32 %v464, 0.09020241
  %v1683 = vmul.f32 %v204, 0.09020241
  %v1684 = vmul.f32 %v480, 0.09020241
  %v1685 = vmul.f32 %v465, 0.09020241
  %v1686 = vmul.f32 %v206, 0.09020241
  %v1687 = vmul.f32 %v481, 0.09020241
  %v1688 = vmul.f32 %v466, 0.09020241
  %v1689 = vmul.f32 %v208, 0.09020241
  %v1690 = vmul.f32 %v482, 0.09020241
  %v1691 = vmul.f32 %v467, 0.09020241
  %v1692 = vmul.f32 %v210, 0.09020241
  %v1693 = vmul.f32 %v483, 0.09020241
  %v1694 = vmul.f32 %v468, 0.09020241
  %v1695 = vmul.f32 %v212, 0.09020241
  %v1696 = vmul.f32 %v484, 0.09020241
  %v1697 = vmul.f32 %v469, 0.09020241
  %v1698 = vmul.f32 %v214, 0.09020241
  %v1699 = vmul.f32 %v485, 0.09020241
  %v1700 = vmul.f32 %v470, 0.09020241
  %v1701 = vmul.f32 %v216, 0.09020241
  %v1702 = vmul.f32 %v486, 0.09020241
  %v1703 = vmul.f32 %v471, 0.09020241
  %v1704 = vmul.f32 %v218, 0.09020241
  %v1705 = vmul.f32 %v487, 0.09020241
  %v1706 = vmul.f32 %v472, 0.09020241
  %v1707 = vmul.f32 %v220, 0.09020241
  %v1708 = vmul.f32 %v488, 0.09020241
  %v1709 = vmul.f32 %v473, 0.09020241
  %v1710 = vmul.f32 %v222, 0.09020241
  %v1711 = vmul.f32 %v489, 0.09020241
  %v1712 = vmul.f32 %v474, 0.09020241
  %v1713 = vmul.f32 %v224, 0.09020241
  %v1714 = vmul.f32 %v490, 0.09020241
  %v1715 = vmul.f32 %v475, 0.09020241
  %v1716 = vmul.f32 %v226, 0.09020241
  %v1717 = vmul.f32 %v491, 0.09020241
  %v1718 = vmul.f32 %v476, 0.09020241
  %v1719 = vmul.f32 %v228, 0.09020241
  %v1720 = vmul.f32 %v492, 0.09020241
  %v1721 = vmul.f32 %v477, 0.09020241
  %v1722 = vmul.f32 %v230, 0.09020241
  %v1723 = vmul.f32 %v493, 0.09020241
  %v1724 = vmul.f32 %v478, 0.09020241
  %v1725 = vmul.f32 %v232, 0.09020241
  %v1726 = vmul.f32 %v494, 0.09020241
  %v1775 = vrot.slane %v1679, 6
  %v1776 = vrot.slane %v1680, 6
  %v1777 = vsel %vm378, %v1775, %v1776
  %v1778 = vrot.slane %v1681, 6
  %v1779 = vsel %vm378, %v1776, %v1778
  %v1780 = vrot.slane %v1682, 6
  %v1781 = vrot.slane %v1683, 6
  %v1782 = vsel %vm378, %v1780, %v1781
  %v1783 = vrot.slane %v1684, 6
  %v1784 = vsel %vm378, %v1781, %v1783
  %v1785 = vrot.slane %v1685, 6
  %v1786 = vrot.slane %v1686, 6
  %v1787 = vsel %vm378, %v1785, %v1786
  %v1788 = vrot.slane %v1687, 6
  %v1789 = vsel %vm378, %v1786, %v1788
  %v1790 = vrot.slane %v1688, 6
  %v1791 = vrot.slane %v1689, 6
  %v1792 = vsel %vm378, %v1790, %v1791
  %v1793 = vrot.slane %v1690, 6
  %v1794 = vsel %vm378, %v1791, %v1793
  %v1795 = vrot.slane %v1691, 6
  %v1796 = vrot.slane %v1692, 6
  %v1797 = vsel %vm378, %v1795, %v1796
  %v1798 = vrot.slane %v1693, 6
  %v1799 = vsel %vm378, %v1796, %v1798
  %v1800 = vrot.slane %v1694, 6
  %v1801 = vrot.slane %v1695, 6
  %v1802 = vsel %vm378, %v1800, %v1801
  %v1803 = vrot.slane %v1696, 6
  %v1804 = vsel %vm378, %v1801, %v1803
  %v1805 = vrot.slane %v1697, 6
  %v1806 = vrot.slane %v1698, 6
  %v1807 = vsel %vm378, %v1805, %v1806
  %v1808 = vrot.slane %v1699, 6
  %v1809 = vsel %vm378, %v1806, %v1808
  %v1810 = vrot.slane %v1700, 6
  %v1811 = vrot.slane %v1701, 6
  %v1812 = vsel %vm378, %v1810, %v1811
  %v1813 = vrot.slane %v1702, 6
  %v1814 = vsel %vm378, %v1811, %v1813
  %v1815 = vrot.slane %v1703, 6
  %v1816 = vrot.slane %v1704, 6
  %v1817 = vsel %vm378, %v1815, %v1816
  %v1818 = vrot.slane %v1705, 6
  %v1819 = vsel %vm378, %v1816, %v1818
  %v1820 = vrot.slane %v1706, 6
  %v1821 = vrot.slane %v1707, 6
  %v1822 = vsel %vm378, %v1820, %v1821
  %v1823 = vrot.slane %v1708, 6
  %v1824 = vsel %vm378, %v1821, %v1823
  %v1825 = vrot.slane %v1709, 6
  %v1826 = vrot.slane %v1710, 6
  %v1827 = vsel %vm378, %v1825, %v1826
  %v1828 = vrot.slane %v1711, 6
  %v1829 = vsel %vm378, %v1826, %v1828
  %v1830 = vrot.slane %v1712, 6
  %v1831 = vrot.slane %v1713, 6
  %v1832 = vsel %vm378, %v1830, %v1831
  %v1833 = vrot.slane %v1714, 6
  %v1834 = vsel %vm378, %v1831, %v1833
  %v1835 = vrot.slane %v1715, 6
  %v1836 = vrot.slane %v1716, 6
  %v1837 = vsel %vm378, %v1835, %v1836
  %v1838 = vrot.slane %v1717, 6
  %v1839 = vsel %vm378, %v1836, %v1838
  %v1840 = vrot.slane %v1718, 6
  %v1841 = vrot.slane %v1719, 6
  %v1842 = vsel %vm378, %v1840, %v1841
  %v1843 = vrot.slane %v1720, 6
  %v1844 = vsel %vm378, %v1841, %v1843
  %v1845 = vrot.slane %v1721, 6
  %v1846 = vrot.slane %v1722, 6
  %v1847 = vsel %vm378, %v1845, %v1846
  %v1848 = vrot.slane %v1723, 6
  %v1849 = vsel %vm378, %v1846, %v1848
  %v1850 = vrot.slane %v1724, 6
  %v1851 = vrot.slane %v1725, 6
  %v1852 = vsel %vm378, %v1850, %v1851
  %v1853 = vrot.slane %v1726, 6
  %v1854 = vsel %vm378, %v1851, %v1853
  %v1887 = vadd.f32 %v1375, %v1777
  %v1888 = vadd.f32 %v1376, %v1779
  %v1889 = vadd.f32 %v1377, %v1782
  %v1890 = vadd.f32 %v1378, %v1784
  %v1891 = vadd.f32 %v1379, %v1787
  %v1892 = vadd.f32 %v1380, %v1789
  %v1893 = vadd.f32 %v1381, %v1792
  %v1894 = vadd.f32 %v1382, %v1794
  %v1895 = vadd.f32 %v1383, %v1797
  %v1896 = vadd.f32 %v1384, %v1799
  %v1897 = vadd.f32 %v1385, %v1802
  %v1898 = vadd.f32 %v1386, %v1804
  %v1899 = vadd.f32 %v1387, %v1807
  %v1900 = vadd.f32 %v1388, %v1809
  %v1901 = vadd.f32 %v1389, %v1812
  %v1902 = vadd.f32 %v1390, %v1814
  %v1903 = vadd.f32 %v1391, %v1817
  %v1904 = vadd.f32 %v1392, %v1819
  %v1905 = vadd.f32 %v1393, %v1822
  %v1906 = vadd.f32 %v1394, %v1824
  %v1907 = vadd.f32 %v1395, %v1827
  %v1908 = vadd.f32 %v1396, %v1829
  %v1909 = vadd.f32 %v1397, %v1832
  %v1910 = vadd.f32 %v1398, %v1834
  %v1911 = vadd.f32 %v1399, %v1837
  %v1912 = vadd.f32 %v1400, %v1839
  %v1913 = vadd.f32 %v1401, %v1842
  %v1914 = vadd.f32 %v1402, %v1844
  %v1915 = vadd.f32 %v1403, %v1847
  %v1916 = vadd.f32 %v1404, %v1849
  %v1917 = vadd.f32 %v1405, %v1852
  %v1918 = vadd.f32 %v1406, %v1854
  %v1919 = vmul.f32 %v463, 0.092024624
  %v1920 = vmul.f32 %v202, 0.092024624
  %v1921 = vmul.f32 %v479, 0.092024624
  %v1922 = vmul.f32 %v464, 0.092024624
  %v1923 = vmul.f32 %v204, 0.092024624
  %v1924 = vmul.f32 %v480, 0.092024624
  %v1925 = vmul.f32 %v465, 0.092024624
  %v1926 = vmul.f32 %v206, 0.092024624
  %v1927 = vmul.f32 %v481, 0.092024624
  %v1928 = vmul.f32 %v466, 0.092024624
  %v1929 = vmul.f32 %v208, 0.092024624
  %v1930 = vmul.f32 %v482, 0.092024624
  %v1931 = vmul.f32 %v467, 0.092024624
  %v1932 = vmul.f32 %v210, 0.092024624
  %v1933 = vmul.f32 %v483, 0.092024624
  %v1934 = vmul.f32 %v468, 0.092024624
  %v1935 = vmul.f32 %v212, 0.092024624
  %v1936 = vmul.f32 %v484, 0.092024624
  %v1937 = vmul.f32 %v469, 0.092024624
  %v1938 = vmul.f32 %v214, 0.092024624
  %v1939 = vmul.f32 %v485, 0.092024624
  %v1940 = vmul.f32 %v470, 0.092024624
  %v1941 = vmul.f32 %v216, 0.092024624
  %v1942 = vmul.f32 %v486, 0.092024624
  %v1943 = vmul.f32 %v471, 0.092024624
  %v1944 = vmul.f32 %v218, 0.092024624
  %v1945 = vmul.f32 %v487, 0.092024624
  %v1946 = vmul.f32 %v472, 0.092024624
  %v1947 = vmul.f32 %v220, 0.092024624
  %v1948 = vmul.f32 %v488, 0.092024624
  %v1949 = vmul.f32 %v473, 0.092024624
  %v1950 = vmul.f32 %v222, 0.092024624
  %v1951 = vmul.f32 %v489, 0.092024624
  %v1952 = vmul.f32 %v474, 0.092024624
  %v1953 = vmul.f32 %v224, 0.092024624
  %v1954 = vmul.f32 %v490, 0.092024624
  %v1955 = vmul.f32 %v475, 0.092024624
  %v1956 = vmul.f32 %v226, 0.092024624
  %v1957 = vmul.f32 %v491, 0.092024624
  %v1958 = vmul.f32 %v476, 0.092024624
  %v1959 = vmul.f32 %v228, 0.092024624
  %v1960 = vmul.f32 %v492, 0.092024624
  %v1961 = vmul.f32 %v477, 0.092024624
  %v1962 = vmul.f32 %v230, 0.092024624
  %v1963 = vmul.f32 %v493, 0.092024624
  %v1964 = vmul.f32 %v478, 0.092024624
  %v1965 = vmul.f32 %v232, 0.092024624
  %v1966 = vmul.f32 %v494, 0.092024624
  %v2015 = vrot.slane %v1919, 6
  %v2016 = vrot.slane %v1920, 6
  %v2017 = vsel %vm378, %v2015, %v2016
  %v2018 = vrot.slane %v1921, 6
  %v2019 = vsel %vm378, %v2016, %v2018
  %v2020 = vrot.slane %v1922, 6
  %v2021 = vrot.slane %v1923, 6
  %v2022 = vsel %vm378, %v2020, %v2021
  %v2023 = vrot.slane %v1924, 6
  %v2024 = vsel %vm378, %v2021, %v2023
  %v2025 = vrot.slane %v1925, 6
  %v2026 = vrot.slane %v1926, 6
  %v2027 = vsel %vm378, %v2025, %v2026
  %v2028 = vrot.slane %v1927, 6
  %v2029 = vsel %vm378, %v2026, %v2028
  %v2030 = vrot.slane %v1928, 6
  %v2031 = vrot.slane %v1929, 6
  %v2032 = vsel %vm378, %v2030, %v2031
  %v2033 = vrot.slane %v1930, 6
  %v2034 = vsel %vm378, %v2031, %v2033
  %v2035 = vrot.slane %v1931, 6
  %v2036 = vrot.slane %v1932, 6
  %v2037 = vsel %vm378, %v2035, %v2036
  %v2038 = vrot.slane %v1933, 6
  %v2039 = vsel %vm378, %v2036, %v2038
  %v2040 = vrot.slane %v1934, 6
  %v2041 = vrot.slane %v1935, 6
  %v2042 = vsel %vm378, %v2040, %v2041
  %v2043 = vrot.slane %v1936, 6
  %v2044 = vsel %vm378, %v2041, %v2043
  %v2045 = vrot.slane %v1937, 6
  %v2046 = vrot.slane %v1938, 6
  %v2047 = vsel %vm378, %v2045, %v2046
  %v2048 = vrot.slane %v1939, 6
  %v2049 = vsel %vm378, %v2046, %v2048
  %v2050 = vrot.slane %v1940, 6
  %v2051 = vrot.slane %v1941, 6
  %v2052 = vsel %vm378, %v2050, %v2051
  %v2053 = vrot.slane %v1942, 6
  %v2054 = vsel %vm378, %v2051, %v2053
  %v2055 = vrot.slane %v1943, 6
  %v2056 = vrot.slane %v1944, 6
  %v2057 = vsel %vm378, %v2055, %v2056
  %v2058 = vrot.slane %v1945, 6
  %v2059 = vsel %vm378, %v2056, %v2058
  %v2060 = vrot.slane %v1946, 6
  %v2061 = vrot.slane %v1947, 6
  %v2062 = vsel %vm378, %v2060, %v2061
  %v2063 = vrot.slane %v1948, 6
  %v2064 = vsel %vm378, %v2061, %v2063
  %v2065 = vrot.slane %v1949, 6
  %v2066 = vrot.slane %v1950, 6
  %v2067 = vsel %vm378, %v2065, %v2066
  %v2068 = vrot.slane %v1951, 6
  %v2069 = vsel %vm378, %v2066, %v2068
  %v2070 = vrot.slane %v1952, 6
  %v2071 = vrot.slane %v1953, 6
  %v2072 = vsel %vm378, %v2070, %v2071
  %v2073 = vrot.slane %v1954, 6
  %v2074 = vsel %vm378, %v2071, %v2073
  %v2075 = vrot.slane %v1955, 6
  %v2076 = vrot.slane %v1956, 6
  %v2077 = vsel %vm378, %v2075, %v2076
  %v2078 = vrot.slane %v1957, 6
  %v2079 = vsel %vm378, %v2076, %v2078
  %v2080 = vrot.slane %v1958, 6
  %v2081 = vrot.slane %v1959, 6
  %v2082 = vsel %vm378, %v2080, %v2081
  %v2083 = vrot.slane %v1960, 6
  %v2084 = vsel %vm378, %v2081, %v2083
  %v2085 = vrot.slane %v1961, 6
  %v2086 = vrot.slane %v1962, 6
  %v2087 = vsel %vm378, %v2085, %v2086
  %v2088 = vrot.slane %v1963, 6
  %v2089 = vsel %vm378, %v2086, %v2088
  %v2090 = vrot.slane %v1964, 6
  %v2091 = vrot.slane %v1965, 6
  %v2092 = vsel %vm378, %v2090, %v2091
  %v2093 = vrot.slane %v1966, 6
  %v2094 = vsel %vm378, %v2091, %v2093
  %v2143 = vadd.f32 %v1631, %v2017
  %v2144 = vadd.f32 %v1632, %v2019
  %v2145 = vadd.f32 %v1633, %v2018
  %v2146 = vadd.f32 %v1634, %v2022
  %v2147 = vadd.f32 %v1635, %v2024
  %v2148 = vadd.f32 %v1636, %v2023
  %v2149 = vadd.f32 %v1637, %v2027
  %v2150 = vadd.f32 %v1638, %v2029
  %v2151 = vadd.f32 %v1639, %v2028
  %v2152 = vadd.f32 %v1640, %v2032
  %v2153 = vadd.f32 %v1641, %v2034
  %v2154 = vadd.f32 %v1642, %v2033
  %v2155 = vadd.f32 %v1643, %v2037
  %v2156 = vadd.f32 %v1644, %v2039
  %v2157 = vadd.f32 %v1645, %v2038
  %v2158 = vadd.f32 %v1646, %v2042
  %v2159 = vadd.f32 %v1647, %v2044
  %v2160 = vadd.f32 %v1648, %v2043
  %v2161 = vadd.f32 %v1649, %v2047
  %v2162 = vadd.f32 %v1650, %v2049
  %v2163 = vadd.f32 %v1651, %v2048
  %v2164 = vadd.f32 %v1652, %v2052
  %v2165 = vadd.f32 %v1653, %v2054
  %v2166 = vadd.f32 %v1654, %v2053
  %v2167 = vadd.f32 %v1655, %v2057
  %v2168 = vadd.f32 %v1656, %v2059
  %v2169 = vadd.f32 %v1657, %v2058
  %v2170 = vadd.f32 %v1658, %v2062
  %v2171 = vadd.f32 %v1659, %v2064
  %v2172 = vadd.f32 %v1660, %v2063
  %v2173 = vadd.f32 %v1661, %v2067
  %v2174 = vadd.f32 %v1662, %v2069
  %v2175 = vadd.f32 %v1663, %v2068
  %v2176 = vadd.f32 %v1664, %v2072
  %v2177 = vadd.f32 %v1665, %v2074
  %v2178 = vadd.f32 %v1666, %v2073
  %v2179 = vadd.f32 %v1667, %v2077
  %v2180 = vadd.f32 %v1668, %v2079
  %v2181 = vadd.f32 %v1669, %v2078
  %v2182 = vadd.f32 %v1670, %v2082
  %v2183 = vadd.f32 %v1671, %v2084
  %v2184 = vadd.f32 %v1672, %v2083
  %v2185 = vadd.f32 %v1673, %v2087
  %v2186 = vadd.f32 %v1674, %v2089
  %v2187 = vadd.f32 %v1675, %v2088
  %v2188 = vadd.f32 %v1676, %v2092
  %v2189 = vadd.f32 %v1677, %v2094
  %v2190 = vadd.f32 %v1678, %v2093
  %v2191 = vadd.f32 %v1887, %v1680
  %v2192 = vadd.f32 %v1888, %v1681
  %v2193 = vadd.f32 %v1889, %v1683
  %v2194 = vadd.f32 %v1890, %v1684
  %v2195 = vadd.f32 %v1891, %v1686
  %v2196 = vadd.f32 %v1892, %v1687
  %v2197 = vadd.f32 %v1893, %v1689
  %v2198 = vadd.f32 %v1894, %v1690
  %v2199 = vadd.f32 %v1895, %v1692
  %v2200 = vadd.f32 %v1896, %v1693
  %v2201 = vadd.f32 %v1897, %v1695
  %v2202 = vadd.f32 %v1898, %v1696
  %v2203 = vadd.f32 %v1899, %v1698
  %v2204 = vadd.f32 %v1900, %v1699
  %v2205 = vadd.f32 %v1901, %v1701
  %v2206 = vadd.f32 %v1902, %v1702
  %v2207 = vadd.f32 %v1903, %v1704
  %v2208 = vadd.f32 %v1904, %v1705
  %v2209 = vadd.f32 %v1905, %v1707
  %v2210 = vadd.f32 %v1906, %v1708
  %v2211 = vadd.f32 %v1907, %v1710
  %v2212 = vadd.f32 %v1908, %v1711
  %v2213 = vadd.f32 %v1909, %v1713
  %v2214 = vadd.f32 %v1910, %v1714
  %v2215 = vadd.f32 %v1911, %v1716
  %v2216 = vadd.f32 %v1912, %v1717
  %v2217 = vadd.f32 %v1913, %v1719
  %v2218 = vadd.f32 %v1914, %v1720
  %v2219 = vadd.f32 %v1915, %v1722
  %v2220 = vadd.f32 %v1916, %v1723
  %v2221 = vadd.f32 %v1917, %v1725
  %v2222 = vadd.f32 %v1918, %v1726
  %v2223 = vmul.f32 %v559, 0.084949434
  %v2224 = vmul.f32 %v560, 0.084949434
  %v2225 = vmul.f32 %v561, 0.084949434
  %v2226 = vmul.f32 %v562, 0.084949434
  %v2227 = vmul.f32 %v563, 0.084949434
  %v2228 = vmul.f32 %v564, 0.084949434
  %v2229 = vmul.f32 %v565, 0.084949434
  %v2230 = vmul.f32 %v566, 0.084949434
  %v2231 = vmul.f32 %v567, 0.084949434
  %v2232 = vmul.f32 %v568, 0.084949434
  %v2233 = vmul.f32 %v569, 0.084949434
  %v2234 = vmul.f32 %v570, 0.084949434
  %v2235 = vmul.f32 %v571, 0.084949434
  %v2236 = vmul.f32 %v572, 0.084949434
  %v2237 = vmul.f32 %v573, 0.084949434
  %v2238 = vmul.f32 %v574, 0.084949434
  %v2239 = vadd.f32 %v2143, %v1408
  %v2240 = vadd.f32 %v2144, %v1409
  %v2241 = vadd.f32 %v2145, %v2223
  %v2242 = vadd.f32 %v2146, %v1411
  %v2243 = vadd.f32 %v2147, %v1412
  %v2244 = vadd.f32 %v2148, %v2224
  %v2245 = vadd.f32 %v2149, %v1414
  %v2246 = vadd.f32 %v2150, %v1415
  %v2247 = vadd.f32 %v2151, %v2225
  %v2248 = vadd.f32 %v2152, %v1417
  %v2249 = vadd.f32 %v2153, %v1418
  %v2250 = vadd.f32 %v2154, %v2226
  %v2251 = vadd.f32 %v2155, %v1420
  %v2252 = vadd.f32 %v2156, %v1421
  %v2253 = vadd.f32 %v2157, %v2227
  %v2254 = vadd.f32 %v2158, %v1423
  %v2255 = vadd.f32 %v2159, %v1424
  %v2256 = vadd.f32 %v2160, %v2228
  %v2257 = vadd.f32 %v2161, %v1426
  %v2258 = vadd.f32 %v2162, %v1427
  %v2259 = vadd.f32 %v2163, %v2229
  %v2260 = vadd.f32 %v2164, %v1429
  %v2261 = vadd.f32 %v2165, %v1430
  %v2262 = vadd.f32 %v2166, %v2230
  %v2263 = vadd.f32 %v2167, %v1432
  %v2264 = vadd.f32 %v2168, %v1433
  %v2265 = vadd.f32 %v2169, %v2231
  %v2266 = vadd.f32 %v2170, %v1435
  %v2267 = vadd.f32 %v2171, %v1436
  %v2268 = vadd.f32 %v2172, %v2232
  %v2269 = vadd.f32 %v2173, %v1438
  %v2270 = vadd.f32 %v2174, %v1439
  %v2271 = vadd.f32 %v2175, %v2233
  %v2272 = vadd.f32 %v2176, %v1441
  %v2273 = vadd.f32 %v2177, %v1442
  %v2274 = vadd.f32 %v2178, %v2234
  %v2275 = vadd.f32 %v2179, %v1444
  %v2276 = vadd.f32 %v2180, %v1445
  %v2277 = vadd.f32 %v2181, %v2235
  %v2278 = vadd.f32 %v2182, %v1447
  %v2279 = vadd.f32 %v2183, %v1448
  %v2280 = vadd.f32 %v2184, %v2236
  %v2281 = vadd.f32 %v2185, %v1450
  %v2282 = vadd.f32 %v2186, %v1451
  %v2283 = vadd.f32 %v2187, %v2237
  %v2284 = vadd.f32 %v2188, %v1453
  %v2285 = vadd.f32 %v2189, %v1454
  %v2286 = vadd.f32 %v2190, %v2238
  %v2287 = vmul.f32 %v559, 0.07686543
  %v2288 = vmul.f32 %v560, 0.07686543
  %v2289 = vmul.f32 %v561, 0.07686543
  %v2290 = vmul.f32 %v562, 0.07686543
  %v2291 = vmul.f32 %v563, 0.07686543
  %v2292 = vmul.f32 %v564, 0.07686543
  %v2293 = vmul.f32 %v565, 0.07686543
  %v2294 = vmul.f32 %v566, 0.07686543
  %v2295 = vmul.f32 %v567, 0.07686543
  %v2296 = vmul.f32 %v568, 0.07686543
  %v2297 = vmul.f32 %v569, 0.07686543
  %v2298 = vmul.f32 %v570, 0.07686543
  %v2299 = vmul.f32 %v571, 0.07686543
  %v2300 = vmul.f32 %v572, 0.07686543
  %v2301 = vmul.f32 %v573, 0.07686543
  %v2302 = vmul.f32 %v574, 0.07686543
  %v2319 = vrot.slane %v1168, 2
  %v2320 = vrot.slane %v1169, 2
  %v2321 = vsel %vm446, %v2319, %v2320
  %v2322 = vrot.slane %v2287, 2
  %v2323 = vsel %vm446, %v2320, %v2322
  %v2324 = vrot.slane %v1171, 2
  %v2325 = vrot.slane %v1172, 2
  %v2326 = vsel %vm446, %v2324, %v2325
  %v2327 = vrot.slane %v2288, 2
  %v2328 = vsel %vm446, %v2325, %v2327
  %v2329 = vrot.slane %v1174, 2
  %v2330 = vrot.slane %v1175, 2
  %v2331 = vsel %vm446, %v2329, %v2330
  %v2332 = vrot.slane %v2289, 2
  %v2333 = vsel %vm446, %v2330, %v2332
  %v2334 = vrot.slane %v1177, 2
  %v2335 = vrot.slane %v1178, 2
  %v2336 = vsel %vm446, %v2334, %v2335
  %v2337 = vrot.slane %v2290, 2
  %v2338 = vsel %vm446, %v2335, %v2337
  %v2339 = vrot.slane %v1180, 2
  %v2340 = vrot.slane %v1181, 2
  %v2341 = vsel %vm446, %v2339, %v2340
  %v2342 = vrot.slane %v2291, 2
  %v2343 = vsel %vm446, %v2340, %v2342
  %v2344 = vrot.slane %v1183, 2
  %v2345 = vrot.slane %v1184, 2
  %v2346 = vsel %vm446, %v2344, %v2345
  %v2347 = vrot.slane %v2292, 2
  %v2348 = vsel %vm446, %v2345, %v2347
  %v2349 = vrot.slane %v1186, 2
  %v2350 = vrot.slane %v1187, 2
  %v2351 = vsel %vm446, %v2349, %v2350
  %v2352 = vrot.slane %v2293, 2
  %v2353 = vsel %vm446, %v2350, %v2352
  %v2354 = vrot.slane %v1189, 2
  %v2355 = vrot.slane %v1190, 2
  %v2356 = vsel %vm446, %v2354, %v2355
  %v2357 = vrot.slane %v2294, 2
  %v2358 = vsel %vm446, %v2355, %v2357
  %v2359 = vrot.slane %v1192, 2
  %v2360 = vrot.slane %v1193, 2
  %v2361 = vsel %vm446, %v2359, %v2360
  %v2362 = vrot.slane %v2295, 2
  %v2363 = vsel %vm446, %v2360, %v2362
  %v2364 = vrot.slane %v1195, 2
  %v2365 = vrot.slane %v1196, 2
  %v2366 = vsel %vm446, %v2364, %v2365
  %v2367 = vrot.slane %v2296, 2
  %v2368 = vsel %vm446, %v2365, %v2367
  %v2369 = vrot.slane %v1198, 2
  %v2370 = vrot.slane %v1199, 2
  %v2371 = vsel %vm446, %v2369, %v2370
  %v2372 = vrot.slane %v2297, 2
  %v2373 = vsel %vm446, %v2370, %v2372
  %v2374 = vrot.slane %v1201, 2
  %v2375 = vrot.slane %v1202, 2
  %v2376 = vsel %vm446, %v2374, %v2375
  %v2377 = vrot.slane %v2298, 2
  %v2378 = vsel %vm446, %v2375, %v2377
  %v2379 = vrot.slane %v1204, 2
  %v2380 = vrot.slane %v1205, 2
  %v2381 = vsel %vm446, %v2379, %v2380
  %v2382 = vrot.slane %v2299, 2
  %v2383 = vsel %vm446, %v2380, %v2382
  %v2384 = vrot.slane %v1207, 2
  %v2385 = vrot.slane %v1208, 2
  %v2386 = vsel %vm446, %v2384, %v2385
  %v2387 = vrot.slane %v2300, 2
  %v2388 = vsel %vm446, %v2385, %v2387
  %v2389 = vrot.slane %v1210, 2
  %v2390 = vrot.slane %v1211, 2
  %v2391 = vsel %vm446, %v2389, %v2390
  %v2392 = vrot.slane %v2301, 2
  %v2393 = vsel %vm446, %v2390, %v2392
  %v2394 = vrot.slane %v1213, 2
  %v2395 = vrot.slane %v1214, 2
  %v2396 = vsel %vm446, %v2394, %v2395
  %v2397 = vrot.slane %v2302, 2
  %v2398 = vsel %vm446, %v2395, %v2397
  %v2431 = vadd.f32 %v2191, %v2321
  %v2432 = vadd.f32 %v2192, %v2323
  %v2433 = vadd.f32 %v2193, %v2326
  %v2434 = vadd.f32 %v2194, %v2328
  %v2435 = vadd.f32 %v2195, %v2331
  %v2436 = vadd.f32 %v2196, %v2333
  %v2437 = vadd.f32 %v2197, %v2336
  %v2438 = vadd.f32 %v2198, %v2338
  %v2439 = vadd.f32 %v2199, %v2341
  %v2440 = vadd.f32 %v2200, %v2343
  %v2441 = vadd.f32 %v2201, %v2346
  %v2442 = vadd.f32 %v2202, %v2348
  %v2443 = vadd.f32 %v2203, %v2351
  %v2444 = vadd.f32 %v2204, %v2353
  %v2445 = vadd.f32 %v2205, %v2356
  %v2446 = vadd.f32 %v2206, %v2358
  %v2447 = vadd.f32 %v2207, %v2361
  %v2448 = vadd.f32 %v2208, %v2363
  %v2449 = vadd.f32 %v2209, %v2366
  %v2450 = vadd.f32 %v2210, %v2368
  %v2451 = vadd.f32 %v2211, %v2371
  %v2452 = vadd.f32 %v2212, %v2373
  %v2453 = vadd.f32 %v2213, %v2376
  %v2454 = vadd.f32 %v2214, %v2378
  %v2455 = vadd.f32 %v2215, %v2381
  %v2456 = vadd.f32 %v2216, %v2383
  %v2457 = vadd.f32 %v2217, %v2386
  %v2458 = vadd.f32 %v2218, %v2388
  %v2459 = vadd.f32 %v2219, %v2391
  %v2460 = vadd.f32 %v2220, %v2393
  %v2461 = vadd.f32 %v2221, %v2396
  %v2462 = vadd.f32 %v2222, %v2398
  %v2463 = vmul.f32 %v559, 0.066823594
  %v2464 = vmul.f32 %v560, 0.066823594
  %v2465 = vmul.f32 %v561, 0.066823594
  %v2466 = vmul.f32 %v562, 0.066823594
  %v2467 = vmul.f32 %v563, 0.066823594
  %v2468 = vmul.f32 %v564, 0.066823594
  %v2469 = vmul.f32 %v565, 0.066823594
  %v2470 = vmul.f32 %v566, 0.066823594
  %v2471 = vmul.f32 %v567, 0.066823594
  %v2472 = vmul.f32 %v568, 0.066823594
  %v2473 = vmul.f32 %v569, 0.066823594
  %v2474 = vmul.f32 %v570, 0.066823594
  %v2475 = vmul.f32 %v571, 0.066823594
  %v2476 = vmul.f32 %v572, 0.066823594
  %v2477 = vmul.f32 %v573, 0.066823594
  %v2478 = vmul.f32 %v574, 0.066823594
  %v2495 = vrot.slane %v2463, 2
  %v2496 = vsel %vm446, %v994, %v2495
  %v2497 = vrot.slane %v2464, 2
  %v2498 = vsel %vm446, %v999, %v2497
  %v2499 = vrot.slane %v2465, 2
  %v2500 = vsel %vm446, %v1004, %v2499
  %v2501 = vrot.slane %v2466, 2
  %v2502 = vsel %vm446, %v1009, %v2501
  %v2503 = vrot.slane %v2467, 2
  %v2504 = vsel %vm446, %v1014, %v2503
  %v2505 = vrot.slane %v2468, 2
  %v2506 = vsel %vm446, %v1019, %v2505
  %v2507 = vrot.slane %v2469, 2
  %v2508 = vsel %vm446, %v1024, %v2507
  %v2509 = vrot.slane %v2470, 2
  %v2510 = vsel %vm446, %v1029, %v2509
  %v2511 = vrot.slane %v2471, 2
  %v2512 = vsel %vm446, %v1034, %v2511
  %v2513 = vrot.slane %v2472, 2
  %v2514 = vsel %vm446, %v1039, %v2513
  %v2515 = vrot.slane %v2473, 2
  %v2516 = vsel %vm446, %v1044, %v2515
  %v2517 = vrot.slane %v2474, 2
  %v2518 = vsel %vm446, %v1049, %v2517
  %v2519 = vrot.slane %v2475, 2
  %v2520 = vsel %vm446, %v1054, %v2519
  %v2521 = vrot.slane %v2476, 2
  %v2522 = vsel %vm446, %v1059, %v2521
  %v2523 = vrot.slane %v2477, 2
  %v2524 = vsel %vm446, %v1064, %v2523
  %v2525 = vrot.slane %v2478, 2
  %v2526 = vsel %vm446, %v1069, %v2525
  %v2559 = vadd.f32 %v2239, %v995
  %v2560 = vadd.f32 %v2240, %v2496
  %v2561 = vadd.f32 %v2241, %v2495
  %v2562 = vadd.f32 %v2242, %v1000
  %v2563 = vadd.f32 %v2243, %v2498
  %v2564 = vadd.f32 %v2244, %v2497
  %v2565 = vadd.f32 %v2245, %v1005
  %v2566 = vadd.f32 %v2246, %v2500
  %v2567 = vadd.f32 %v2247, %v2499
  %v2568 = vadd.f32 %v2248, %v1010
  %v2569 = vadd.f32 %v2249, %v2502
  %v2570 = vadd.f32 %v2250, %v2501
  %v2571 = vadd.f32 %v2251, %v1015
  %v2572 = vadd.f32 %v2252, %v2504
  %v2573 = vadd.f32 %v2253, %v2503
  %v2574 = vadd.f32 %v2254, %v1020
  %v2575 = vadd.f32 %v2255, %v2506
  %v2576 = vadd.f32 %v2256, %v2505
  %v2577 = vadd.f32 %v2257, %v1025
  %v2578 = vadd.f32 %v2258, %v2508
  %v2579 = vadd.f32 %v2259, %v2507
  %v2580 = vadd.f32 %v2260, %v1030
  %v2581 = vadd.f32 %v2261, %v2510
  %v2582 = vadd.f32 %v2262, %v2509
  %v2583 = vadd.f32 %v2263, %v1035
  %v2584 = vadd.f32 %v2264, %v2512
  %v2585 = vadd.f32 %v2265, %v2511
  %v2586 = vadd.f32 %v2266, %v1040
  %v2587 = vadd.f32 %v2267, %v2514
  %v2588 = vadd.f32 %v2268, %v2513
  %v2589 = vadd.f32 %v2269, %v1045
  %v2590 = vadd.f32 %v2270, %v2516
  %v2591 = vadd.f32 %v2271, %v2515
  %v2592 = vadd.f32 %v2272, %v1050
  %v2593 = vadd.f32 %v2273, %v2518
  %v2594 = vadd.f32 %v2274, %v2517
  %v2595 = vadd.f32 %v2275, %v1055
  %v2596 = vadd.f32 %v2276, %v2520
  %v2597 = vadd.f32 %v2277, %v2519
  %v2598 = vadd.f32 %v2278, %v1060
  %v2599 = vadd.f32 %v2279, %v2522
  %v2600 = vadd.f32 %v2280, %v2521
  %v2601 = vadd.f32 %v2281, %v1065
  %v2602 = vadd.f32 %v2282, %v2524
  %v2603 = vadd.f32 %v2283, %v2523
  %v2604 = vadd.f32 %v2284, %v1070
  %v2605 = vadd.f32 %v2285, %v2526
  %v2606 = vadd.f32 %v2286, %v2525
  %v2607 = vmul.f32 %v559, 0.055815756
  %v2608 = vmul.f32 %v560, 0.055815756
  %v2609 = vmul.f32 %v561, 0.055815756
  %v2610 = vmul.f32 %v562, 0.055815756
  %v2611 = vmul.f32 %v563, 0.055815756
  %v2612 = vmul.f32 %v564, 0.055815756
  %v2613 = vmul.f32 %v565, 0.055815756
  %v2614 = vmul.f32 %v566, 0.055815756
  %v2615 = vmul.f32 %v567, 0.055815756
  %v2616 = vmul.f32 %v568, 0.055815756
  %v2617 = vmul.f32 %v569, 0.055815756
  %v2618 = vmul.f32 %v570, 0.055815756
  %v2619 = vmul.f32 %v571, 0.055815756
  %v2620 = vmul.f32 %v572, 0.055815756
  %v2621 = vmul.f32 %v573, 0.055815756
  %v2622 = vmul.f32 %v574, 0.055815756
  %v2639 = vrot.slane %v656, 4
  %v2640 = vrot.slane %v657, 4
  %v2641 = vsel %vm412, %v2639, %v2640
  %v2642 = vrot.slane %v2607, 4
  %v2643 = vsel %vm412, %v2640, %v2642
  %v2644 = vrot.slane %v659, 4
  %v2645 = vrot.slane %v660, 4
  %v2646 = vsel %vm412, %v2644, %v2645
  %v2647 = vrot.slane %v2608, 4
  %v2648 = vsel %vm412, %v2645, %v2647
  %v2649 = vrot.slane %v662, 4
  %v2650 = vrot.slane %v663, 4
  %v2651 = vsel %vm412, %v2649, %v2650
  %v2652 = vrot.slane %v2609, 4
  %v2653 = vsel %vm412, %v2650, %v2652
  %v2654 = vrot.slane %v665, 4
  %v2655 = vrot.slane %v666, 4
  %v2656 = vsel %vm412, %v2654, %v2655
  %v2657 = vrot.slane %v2610, 4
  %v2658 = vsel %vm412, %v2655, %v2657
  %v2659 = vrot.slane %v668, 4
  %v2660 = vrot.slane %v669, 4
  %v2661 = vsel %vm412, %v2659, %v2660
  %v2662 = vrot.slane %v2611, 4
  %v2663 = vsel %vm412, %v2660, %v2662
  %v2664 = vrot.slane %v671, 4
  %v2665 = vrot.slane %v672, 4
  %v2666 = vsel %vm412, %v2664, %v2665
  %v2667 = vrot.slane %v2612, 4
  %v2668 = vsel %vm412, %v2665, %v2667
  %v2669 = vrot.slane %v674, 4
  %v2670 = vrot.slane %v675, 4
  %v2671 = vsel %vm412, %v2669, %v2670
  %v2672 = vrot.slane %v2613, 4
  %v2673 = vsel %vm412, %v2670, %v2672
  %v2674 = vrot.slane %v677, 4
  %v2675 = vrot.slane %v678, 4
  %v2676 = vsel %vm412, %v2674, %v2675
  %v2677 = vrot.slane %v2614, 4
  %v2678 = vsel %vm412, %v2675, %v2677
  %v2679 = vrot.slane %v680, 4
  %v2680 = vrot.slane %v681, 4
  %v2681 = vsel %vm412, %v2679, %v2680
  %v2682 = vrot.slane %v2615, 4
  %v2683 = vsel %vm412, %v2680, %v2682
  %v2684 = vrot.slane %v683, 4
  %v2685 = vrot.slane %v684, 4
  %v2686 = vsel %vm412, %v2684, %v2685
  %v2687 = vrot.slane %v2616, 4
  %v2688 = vsel %vm412, %v2685, %v2687
  %v2689 = vrot.slane %v686, 4
  %v2690 = vrot.slane %v687, 4
  %v2691 = vsel %vm412, %v2689, %v2690
  %v2692 = vrot.slane %v2617, 4
  %v2693 = vsel %vm412, %v2690, %v2692
  %v2694 = vrot.slane %v689, 4
  %v2695 = vrot.slane %v690, 4
  %v2696 = vsel %vm412, %v2694, %v2695
  %v2697 = vrot.slane %v2618, 4
  %v2698 = vsel %vm412, %v2695, %v2697
  %v2699 = vrot.slane %v692, 4
  %v2700 = vrot.slane %v693, 4
  %v2701 = vsel %vm412, %v2699, %v2700
  %v2702 = vrot.slane %v2619, 4
  %v2703 = vsel %vm412, %v2700, %v2702
  %v2704 = vrot.slane %v695, 4
  %v2705 = vrot.slane %v696, 4
  %v2706 = vsel %vm412, %v2704, %v2705
  %v2707 = vrot.slane %v2620, 4
  %v2708 = vsel %vm412, %v2705, %v2707
  %v2709 = vrot.slane %v698, 4
  %v2710 = vrot.slane %v699, 4
  %v2711 = vsel %vm412, %v2709, %v2710
  %v2712 = vrot.slane %v2621, 4
  %v2713 = vsel %vm412, %v2710, %v2712
  %v2714 = vrot.slane %v701, 4
  %v2715 = vrot.slane %v702, 4
  %v2716 = vsel %vm412, %v2714, %v2715
  %v2717 = vrot.slane %v2622, 4
  %v2718 = vsel %vm412, %v2715, %v2717
  %v2751 = vadd.f32 %v2431, %v2641
  %v2752 = vadd.f32 %v2432, %v2643
  %v2753 = vadd.f32 %v2433, %v2646
  %v2754 = vadd.f32 %v2434, %v2648
  %v2755 = vadd.f32 %v2435, %v2651
  %v2756 = vadd.f32 %v2436, %v2653
  %v2757 = vadd.f32 %v2437, %v2656
  %v2758 = vadd.f32 %v2438, %v2658
  %v2759 = vadd.f32 %v2439, %v2661
  %v2760 = vadd.f32 %v2440, %v2663
  %v2761 = vadd.f32 %v2441, %v2666
  %v2762 = vadd.f32 %v2442, %v2668
  %v2763 = vadd.f32 %v2443, %v2671
  %v2764 = vadd.f32 %v2444, %v2673
  %v2765 = vadd.f32 %v2445, %v2676
  %v2766 = vadd.f32 %v2446, %v2678
  %v2767 = vadd.f32 %v2447, %v2681
  %v2768 = vadd.f32 %v2448, %v2683
  %v2769 = vadd.f32 %v2449, %v2686
  %v2770 = vadd.f32 %v2450, %v2688
  %v2771 = vadd.f32 %v2451, %v2691
  %v2772 = vadd.f32 %v2452, %v2693
  %v2773 = vadd.f32 %v2453, %v2696
  %v2774 = vadd.f32 %v2454, %v2698
  %v2775 = vadd.f32 %v2455, %v2701
  %v2776 = vadd.f32 %v2456, %v2703
  %v2777 = vadd.f32 %v2457, %v2706
  %v2778 = vadd.f32 %v2458, %v2708
  %v2779 = vadd.f32 %v2459, %v2711
  %v2780 = vadd.f32 %v2460, %v2713
  %v2781 = vadd.f32 %v2461, %v2716
  %v2782 = vadd.f32 %v2462, %v2718
  %v2783 = vmul.f32 %v559, 0.044793192
  %v2784 = vmul.f32 %v560, 0.044793192
  %v2785 = vmul.f32 %v561, 0.044793192
  %v2786 = vmul.f32 %v562, 0.044793192
  %v2787 = vmul.f32 %v563, 0.044793192
  %v2788 = vmul.f32 %v564, 0.044793192
  %v2789 = vmul.f32 %v565, 0.044793192
  %v2790 = vmul.f32 %v566, 0.044793192
  %v2791 = vmul.f32 %v567, 0.044793192
  %v2792 = vmul.f32 %v568, 0.044793192
  %v2793 = vmul.f32 %v569, 0.044793192
  %v2794 = vmul.f32 %v570, 0.044793192
  %v2795 = vmul.f32 %v571, 0.044793192
  %v2796 = vmul.f32 %v572, 0.044793192
  %v2797 = vmul.f32 %v573, 0.044793192
  %v2798 = vmul.f32 %v574, 0.044793192
  %v2847 = vrot.slane %v608, 4
  %v2848 = vrot.slane %v609, 4
  %v2849 = vsel %vm412, %v2847, %v2848
  %v2850 = vrot.slane %v2783, 4
  %v2851 = vsel %vm412, %v2848, %v2850
  %v2852 = vrot.slane %v611, 4
  %v2853 = vrot.slane %v612, 4
  %v2854 = vsel %vm412, %v2852, %v2853
  %v2855 = vrot.slane %v2784, 4
  %v2856 = vsel %vm412, %v2853, %v2855
  %v2857 = vrot.slane %v614, 4
  %v2858 = vrot.slane %v615, 4
  %v2859 = vsel %vm412, %v2857, %v2858
  %v2860 = vrot.slane %v2785, 4
  %v2861 = vsel %vm412, %v2858, %v2860
  %v2862 = vrot.slane %v617, 4
  %v2863 = vrot.slane %v618, 4
  %v2864 = vsel %vm412, %v2862, %v2863
  %v2865 = vrot.slane %v2786, 4
  %v2866 = vsel %vm412, %v2863, %v2865
  %v2867 = vrot.slane %v620, 4
  %v2868 = vrot.slane %v621, 4
  %v2869 = vsel %vm412, %v2867, %v2868
  %v2870 = vrot.slane %v2787, 4
  %v2871 = vsel %vm412, %v2868, %v2870
  %v2872 = vrot.slane %v623, 4
  %v2873 = vrot.slane %v624, 4
  %v2874 = vsel %vm412, %v2872, %v2873
  %v2875 = vrot.slane %v2788, 4
  %v2876 = vsel %vm412, %v2873, %v2875
  %v2877 = vrot.slane %v626, 4
  %v2878 = vrot.slane %v627, 4
  %v2879 = vsel %vm412, %v2877, %v2878
  %v2880 = vrot.slane %v2789, 4
  %v2881 = vsel %vm412, %v2878, %v2880
  %v2882 = vrot.slane %v629, 4
  %v2883 = vrot.slane %v630, 4
  %v2884 = vsel %vm412, %v2882, %v2883
  %v2885 = vrot.slane %v2790, 4
  %v2886 = vsel %vm412, %v2883, %v2885
  %v2887 = vrot.slane %v632, 4
  %v2888 = vrot.slane %v633, 4
  %v2889 = vsel %vm412, %v2887, %v2888
  %v2890 = vrot.slane %v2791, 4
  %v2891 = vsel %vm412, %v2888, %v2890
  %v2892 = vrot.slane %v635, 4
  %v2893 = vrot.slane %v636, 4
  %v2894 = vsel %vm412, %v2892, %v2893
  %v2895 = vrot.slane %v2792, 4
  %v2896 = vsel %vm412, %v2893, %v2895
  %v2897 = vrot.slane %v638, 4
  %v2898 = vrot.slane %v639, 4
  %v2899 = vsel %vm412, %v2897, %v2898
  %v2900 = vrot.slane %v2793, 4
  %v2901 = vsel %vm412, %v2898, %v2900
  %v2902 = vrot.slane %v641, 4
  %v2903 = vrot.slane %v642, 4
  %v2904 = vsel %vm412, %v2902, %v2903
  %v2905 = vrot.slane %v2794, 4
  %v2906 = vsel %vm412, %v2903, %v2905
  %v2907 = vrot.slane %v644, 4
  %v2908 = vrot.slane %v645, 4
  %v2909 = vsel %vm412, %v2907, %v2908
  %v2910 = vrot.slane %v2795, 4
  %v2911 = vsel %vm412, %v2908, %v2910
  %v2912 = vrot.slane %v647, 4
  %v2913 = vrot.slane %v648, 4
  %v2914 = vsel %vm412, %v2912, %v2913
  %v2915 = vrot.slane %v2796, 4
  %v2916 = vsel %vm412, %v2913, %v2915
  %v2917 = vrot.slane %v650, 4
  %v2918 = vrot.slane %v651, 4
  %v2919 = vsel %vm412, %v2917, %v2918
  %v2920 = vrot.slane %v2797, 4
  %v2921 = vsel %vm412, %v2918, %v2920
  %v2922 = vrot.slane %v653, 4
  %v2923 = vrot.slane %v654, 4
  %v2924 = vsel %vm412, %v2922, %v2923
  %v2925 = vrot.slane %v2798, 4
  %v2926 = vsel %vm412, %v2923, %v2925
  %v2975 = vadd.f32 %v2559, %v2849
  %v2976 = vadd.f32 %v2560, %v2851
  %v2977 = vadd.f32 %v2561, %v2850
  %v2978 = vadd.f32 %v2562, %v2854
  %v2979 = vadd.f32 %v2563, %v2856
  %v2980 = vadd.f32 %v2564, %v2855
  %v2981 = vadd.f32 %v2565, %v2859
  %v2982 = vadd.f32 %v2566, %v2861
  %v2983 = vadd.f32 %v2567, %v2860
  %v2984 = vadd.f32 %v2568, %v2864
  %v2985 = vadd.f32 %v2569, %v2866
  %v2986 = vadd.f32 %v2570, %v2865
  %v2987 = vadd.f32 %v2571, %v2869
  %v2988 = vadd.f32 %v2572, %v2871
  %v2989 = vadd.f32 %v2573, %v2870
  %v2990 = vadd.f32 %v2574, %v2874
  %v2991 = vadd.f32 %v2575, %v2876
  %v2992 = vadd.f32 %v2576, %v2875
  %v2993 = vadd.f32 %v2577, %v2879
  %v2994 = vadd.f32 %v2578, %v2881
  %v2995 = vadd.f32 %v2579, %v2880
  %v2996 = vadd.f32 %v2580, %v2884
  %v2997 = vadd.f32 %v2581, %v2886
  %v2998 = vadd.f32 %v2582, %v2885
  %v2999 = vadd.f32 %v2583, %v2889
  %v3000 = vadd.f32 %v2584, %v2891
  %v3001 = vadd.f32 %v2585, %v2890
  %v3002 = vadd.f32 %v2586, %v2894
  %v3003 = vadd.f32 %v2587, %v2896
  %v3004 = vadd.f32 %v2588, %v2895
  %v3005 = vadd.f32 %v2589, %v2899
  %v3006 = vadd.f32 %v2590, %v2901
  %v3007 = vadd.f32 %v2591, %v2900
  %v3008 = vadd.f32 %v2592, %v2904
  %v3009 = vadd.f32 %v2593, %v2906
  %v3010 = vadd.f32 %v2594, %v2905
  %v3011 = vadd.f32 %v2595, %v2909
  %v3012 = vadd.f32 %v2596, %v2911
  %v3013 = vadd.f32 %v2597, %v2910
  %v3014 = vadd.f32 %v2598, %v2914
  %v3015 = vadd.f32 %v2599, %v2916
  %v3016 = vadd.f32 %v2600, %v2915
  %v3017 = vadd.f32 %v2601, %v2919
  %v3018 = vadd.f32 %v2602, %v2921
  %v3019 = vadd.f32 %v2603, %v2920
  %v3020 = vadd.f32 %v2604, %v2924
  %v3021 = vadd.f32 %v2605, %v2926
  %v3022 = vadd.f32 %v2606, %v2925
  %v3023 = vmul.f32 %v479, 0.034537863
  %v3024 = vmul.f32 %v559, 0.034537863
  %v3025 = vmul.f32 %v480, 0.034537863
  %v3026 = vmul.f32 %v560, 0.034537863
  %v3027 = vmul.f32 %v481, 0.034537863
  %v3028 = vmul.f32 %v561, 0.034537863
  %v3029 = vmul.f32 %v482, 0.034537863
  %v3030 = vmul.f32 %v562, 0.034537863
  %v3031 = vmul.f32 %v483, 0.034537863
  %v3032 = vmul.f32 %v563, 0.034537863
  %v3033 = vmul.f32 %v484, 0.034537863
  %v3034 = vmul.f32 %v564, 0.034537863
  %v3035 = vmul.f32 %v485, 0.034537863
  %v3036 = vmul.f32 %v565, 0.034537863
  %v3037 = vmul.f32 %v486, 0.034537863
  %v3038 = vmul.f32 %v566, 0.034537863
  %v3039 = vmul.f32 %v487, 0.034537863
  %v3040 = vmul.f32 %v567, 0.034537863
  %v3041 = vmul.f32 %v488, 0.034537863
  %v3042 = vmul.f32 %v568, 0.034537863
  %v3043 = vmul.f32 %v489, 0.034537863
  %v3044 = vmul.f32 %v569, 0.034537863
  %v3045 = vmul.f32 %v490, 0.034537863
  %v3046 = vmul.f32 %v570, 0.034537863
  %v3047 = vmul.f32 %v491, 0.034537863
  %v3048 = vmul.f32 %v571, 0.034537863
  %v3049 = vmul.f32 %v492, 0.034537863
  %v3050 = vmul.f32 %v572, 0.034537863
  %v3051 = vmul.f32 %v493, 0.034537863
  %v3052 = vmul.f32 %v573, 0.034537863
  %v3053 = vmul.f32 %v494, 0.034537863
  %v3054 = vmul.f32 %v574, 0.034537863
  %v3103 = vrot.slane %v576, 6
  %v3104 = vrot.slane %v3023, 6
  %v3105 = vsel %vm378, %v3103, %v3104
  %v3106 = vrot.slane %v3024, 6
  %v3107 = vsel %vm378, %v3104, %v3106
  %v3108 = vrot.slane %v578, 6
  %v3109 = vrot.slane %v3025, 6
  %v3110 = vsel %vm378, %v3108, %v3109
  %v3111 = vrot.slane %v3026, 6
  %v3112 = vsel %vm378, %v3109, %v3111
  %v3113 = vrot.slane %v580, 6
  %v3114 = vrot.slane %v3027, 6
  %v3115 = vsel %vm378, %v3113, %v3114
  %v3116 = vrot.slane %v3028, 6
  %v3117 = vsel %vm378, %v3114, %v3116
  %v3118 = vrot.slane %v582, 6
  %v3119 = vrot.slane %v3029, 6
  %v3120 = vsel %vm378, %v3118, %v3119
  %v3121 = vrot.slane %v3030, 6
  %v3122 = vsel %vm378, %v3119, %v3121
  %v3123 = vrot.slane %v584, 6
  %v3124 = vrot.slane %v3031, 6
  %v3125 = vsel %vm378, %v3123, %v3124
  %v3126 = vrot.slane %v3032, 6
  %v3127 = vsel %vm378, %v3124, %v3126
  %v3128 = vrot.slane %v586, 6
  %v3129 = vrot.slane %v3033, 6
  %v3130 = vsel %vm378, %v3128, %v3129
  %v3131 = vrot.slane %v3034, 6
  %v3132 = vsel %vm378, %v3129, %v3131
  %v3133 = vrot.slane %v588, 6
  %v3134 = vrot.slane %v3035, 6
  %v3135 = vsel %vm378, %v3133, %v3134
  %v3136 = vrot.slane %v3036, 6
  %v3137 = vsel %vm378, %v3134, %v3136
  %v3138 = vrot.slane %v590, 6
  %v3139 = vrot.slane %v3037, 6
  %v3140 = vsel %vm378, %v3138, %v3139
  %v3141 = vrot.slane %v3038, 6
  %v3142 = vsel %vm378, %v3139, %v3141
  %v3143 = vrot.slane %v592, 6
  %v3144 = vrot.slane %v3039, 6
  %v3145 = vsel %vm378, %v3143, %v3144
  %v3146 = vrot.slane %v3040, 6
  %v3147 = vsel %vm378, %v3144, %v3146
  %v3148 = vrot.slane %v594, 6
  %v3149 = vrot.slane %v3041, 6
  %v3150 = vsel %vm378, %v3148, %v3149
  %v3151 = vrot.slane %v3042, 6
  %v3152 = vsel %vm378, %v3149, %v3151
  %v3153 = vrot.slane %v596, 6
  %v3154 = vrot.slane %v3043, 6
  %v3155 = vsel %vm378, %v3153, %v3154
  %v3156 = vrot.slane %v3044, 6
  %v3157 = vsel %vm378, %v3154, %v3156
  %v3158 = vrot.slane %v598, 6
  %v3159 = vrot.slane %v3045, 6
  %v3160 = vsel %vm378, %v3158, %v3159
  %v3161 = vrot.slane %v3046, 6
  %v3162 = vsel %vm378, %v3159, %v3161
  %v3163 = vrot.slane %v600, 6
  %v3164 = vrot.slane %v3047, 6
  %v3165 = vsel %vm378, %v3163, %v3164
  %v3166 = vrot.slane %v3048, 6
  %v3167 = vsel %vm378, %v3164, %v3166
  %v3168 = vrot.slane %v602, 6
  %v3169 = vrot.slane %v3049, 6
  %v3170 = vsel %vm378, %v3168, %v3169
  %v3171 = vrot.slane %v3050, 6
  %v3172 = vsel %vm378, %v3169, %v3171
  %v3173 = vrot.slane %v604, 6
  %v3174 = vrot.slane %v3051, 6
  %v3175 = vsel %vm378, %v3173, %v3174
  %v3176 = vrot.slane %v3052, 6
  %v3177 = vsel %vm378, %v3174, %v3176
  %v3178 = vrot.slane %v606, 6
  %v3179 = vrot.slane %v3053, 6
  %v3180 = vsel %vm378, %v3178, %v3179
  %v3181 = vrot.slane %v3054, 6
  %v3182 = vsel %vm378, %v3179, %v3181
  %v3215 = vadd.f32 %v2751, %v3105
  %v3216 = vadd.f32 %v2752, %v3107
  %v3217 = vadd.f32 %v2753, %v3110
  %v3218 = vadd.f32 %v2754, %v3112
  %v3219 = vadd.f32 %v2755, %v3115
  %v3220 = vadd.f32 %v2756, %v3117
  %v3221 = vadd.f32 %v2757, %v3120
  %v3222 = vadd.f32 %v2758, %v3122
  %v3223 = vadd.f32 %v2759, %v3125
  %v3224 = vadd.f32 %v2760, %v3127
  %v3225 = vadd.f32 %v2761, %v3130
  %v3226 = vadd.f32 %v2762, %v3132
  %v3227 = vadd.f32 %v2763, %v3135
  %v3228 = vadd.f32 %v2764, %v3137
  %v3229 = vadd.f32 %v2765, %v3140
  %v3230 = vadd.f32 %v2766, %v3142
  %v3231 = vadd.f32 %v2767, %v3145
  %v3232 = vadd.f32 %v2768, %v3147
  %v3233 = vadd.f32 %v2769, %v3150
  %v3234 = vadd.f32 %v2770, %v3152
  %v3235 = vadd.f32 %v2771, %v3155
  %v3236 = vadd.f32 %v2772, %v3157
  %v3237 = vadd.f32 %v2773, %v3160
  %v3238 = vadd.f32 %v2774, %v3162
  %v3239 = vadd.f32 %v2775, %v3165
  %v3240 = vadd.f32 %v2776, %v3167
  %v3241 = vadd.f32 %v2777, %v3170
  %v3242 = vadd.f32 %v2778, %v3172
  %v3243 = vadd.f32 %v2779, %v3175
  %v3244 = vadd.f32 %v2780, %v3177
  %v3245 = vadd.f32 %v2781, %v3180
  %v3246 = vadd.f32 %v2782, %v3182
  %v3295 = vrot.slane %v2975, 1
  %v3296 = vrot.slane %v2976, 1
  %v3297 = vsel %vm200, %v3295, %v3296
  %v3298 = vrot.slane %v2977, 1
  %v3299 = vsel %vm200, %v3296, %v3298
  %v3300 = vrot.slane %v2978, 1
  %v3301 = vrot.slane %v2979, 1
  %v3302 = vsel %vm200, %v3300, %v3301
  %v3303 = vrot.slane %v2980, 1
  %v3304 = vsel %vm200, %v3301, %v3303
  %v3305 = vrot.slane %v2981, 1
  %v3306 = vrot.slane %v2982, 1
  %v3307 = vsel %vm200, %v3305, %v3306
  %v3308 = vrot.slane %v2983, 1
  %v3309 = vsel %vm200, %v3306, %v3308
  %v3310 = vrot.slane %v2984, 1
  %v3311 = vrot.slane %v2985, 1
  %v3312 = vsel %vm200, %v3310, %v3311
  %v3313 = vrot.slane %v2986, 1
  %v3314 = vsel %vm200, %v3311, %v3313
  %v3315 = vrot.slane %v2987, 1
  %v3316 = vrot.slane %v2988, 1
  %v3317 = vsel %vm200, %v3315, %v3316
  %v3318 = vrot.slane %v2989, 1
  %v3319 = vsel %vm200, %v3316, %v3318
  %v3320 = vrot.slane %v2990, 1
  %v3321 = vrot.slane %v2991, 1
  %v3322 = vsel %vm200, %v3320, %v3321
  %v3323 = vrot.slane %v2992, 1
  %v3324 = vsel %vm200, %v3321, %v3323
  %v3325 = vrot.slane %v2993, 1
  %v3326 = vrot.slane %v2994, 1
  %v3327 = vsel %vm200, %v3325, %v3326
  %v3328 = vrot.slane %v2995, 1
  %v3329 = vsel %vm200, %v3326, %v3328
  %v3330 = vrot.slane %v2996, 1
  %v3331 = vrot.slane %v2997, 1
  %v3332 = vsel %vm200, %v3330, %v3331
  %v3333 = vrot.slane %v2998, 1
  %v3334 = vsel %vm200, %v3331, %v3333
  %v3335 = vrot.slane %v2999, 1
  %v3336 = vrot.slane %v3000, 1
  %v3337 = vsel %vm200, %v3335, %v3336
  %v3338 = vrot.slane %v3001, 1
  %v3339 = vsel %vm200, %v3336, %v3338
  %v3340 = vrot.slane %v3002, 1
  %v3341 = vrot.slane %v3003, 1
  %v3342 = vsel %vm200, %v3340, %v3341
  %v3343 = vrot.slane %v3004, 1
  %v3344 = vsel %vm200, %v3341, %v3343
  %v3345 = vrot.slane %v3005, 1
  %v3346 = vrot.slane %v3006, 1
  %v3347 = vsel %vm200, %v3345, %v3346
  %v3348 = vrot.slane %v3007, 1
  %v3349 = vsel %vm200, %v3346, %v3348
  %v3350 = vrot.slane %v3008, 1
  %v3351 = vrot.slane %v3009, 1
  %v3352 = vsel %vm200, %v3350, %v3351
  %v3353 = vrot.slane %v3010, 1
  %v3354 = vsel %vm200, %v3351, %v3353
  %v3355 = vrot.slane %v3011, 1
  %v3356 = vrot.slane %v3012, 1
  %v3357 = vsel %vm200, %v3355, %v3356
  %v3358 = vrot.slane %v3013, 1
  %v3359 = vsel %vm200, %v3356, %v3358
  %v3360 = vrot.slane %v3014, 1
  %v3361 = vrot.slane %v3015, 1
  %v3362 = vsel %vm200, %v3360, %v3361
  %v3363 = vrot.slane %v3016, 1
  %v3364 = vsel %vm200, %v3361, %v3363
  %v3365 = vrot.slane %v3017, 1
  %v3366 = vrot.slane %v3018, 1
  %v3367 = vsel %vm200, %v3365, %v3366
  %v3368 = vrot.slane %v3019, 1
  %v3369 = vsel %vm200, %v3366, %v3368
  %v3370 = vrot.slane %v3020, 1
  %v3371 = vrot.slane %v3021, 1
  %v3372 = vsel %vm200, %v3370, %v3371
  %v3373 = vrot.slane %v3022, 1
  %v3374 = vsel %vm200, %v3371, %v3373
  %v3407 = vadd.f32 %v3215, %v3297
  %v3408 = vadd.f32 %v3216, %v3299
  %v3409 = vadd.f32 %v3217, %v3302
  %v3410 = vadd.f32 %v3218, %v3304
  %v3411 = vadd.f32 %v3219, %v3307
  %v3412 = vadd.f32 %v3220, %v3309
  %v3413 = vadd.f32 %v3221, %v3312
  %v3414 = vadd.f32 %v3222, %v3314
  %v3415 = vadd.f32 %v3223, %v3317
  %v3416 = vadd.f32 %v3224, %v3319
  %v3417 = vadd.f32 %v3225, %v3322
  %v3418 = vadd.f32 %v3226, %v3324
  %v3419 = vadd.f32 %v3227, %v3327
  %v3420 = vadd.f32 %v3228, %v3329
  %v3421 = vadd.f32 %v3229, %v3332
  %v3422 = vadd.f32 %v3230, %v3334
  %v3423 = vadd.f32 %v3231, %v3337
  %v3424 = vadd.f32 %v3232, %v3339
  %v3425 = vadd.f32 %v3233, %v3342
  %v3426 = vadd.f32 %v3234, %v3344
  %v3427 = vadd.f32 %v3235, %v3347
  %v3428 = vadd.f32 %v3236, %v3349
  %v3429 = vadd.f32 %v3237, %v3352
  %v3430 = vadd.f32 %v3238, %v3354
  %v3431 = vadd.f32 %v3239, %v3357
  %v3432 = vadd.f32 %v3240, %v3359
  %v3433 = vadd.f32 %v3241, %v3362
  %v3434 = vadd.f32 %v3242, %v3364
  %v3435 = vadd.f32 %v3243, %v3367
  %v3436 = vadd.f32 %v3244, %v3369
  %v3437 = vadd.f32 %v3245, %v3372
  %v3438 = vadd.f32 %v3246, %v3374
  %v3439 = vmul.f32 %v3421, 0.034537863
  %v3440 = vmul.f32 %v3422, 0.034537863
  %v3441 = vmul.f32 %v3419, 0.034537863
  %v3442 = vmul.f32 %v3420, 0.034537863
  %v3443 = vmul.f32 %v3417, 0.034537863
  %v3444 = vmul.f32 %v3418, 0.034537863
  %v3445 = vmul.f32 %v3415, 0.034537863
  %v3446 = vmul.f32 %v3416, 0.034537863
  %v3447 = vmul.f32 %v3413, 0.034537863
  %v3448 = vmul.f32 %v3414, 0.034537863
  %v3449 = vmul.f32 %v3411, 0.034537863
  %v3450 = vmul.f32 %v3412, 0.034537863
  %v3451 = vmul.f32 %v3409, 0.034537863
  %v3452 = vmul.f32 %v3410, 0.034537863
  %v3453 = vmul.f32 %v3407, 0.034537863
  %v3454 = vmul.f32 %v3408, 0.034537863
  %v3455 = vmul.f32 %v3423, 0.034537863
  %v3456 = vmul.f32 %v3424, 0.034537863
  %v3457 = vmul.f32 %v3419, 0.044793192
  %v3458 = vmul.f32 %v3420, 0.044793192
  %v3459 = vmul.f32 %v3417, 0.044793192
  %v3460 = vmul.f32 %v3418, 0.044793192
  %v3461 = vmul.f32 %v3415, 0.044793192
  %v3462 = vmul.f32 %v3416, 0.044793192
  %v3463 = vmul.f32 %v3413, 0.044793192
  %v3464 = vmul.f32 %v3414, 0.044793192
  %v3465 = vmul.f32 %v3411, 0.044793192
  %v3466 = vmul.f32 %v3412, 0.044793192
  %v3467 = vmul.f32 %v3409, 0.044793192
  %v3468 = vmul.f32 %v3410, 0.044793192
  %v3469 = vmul.f32 %v3407, 0.044793192
  %v3470 = vmul.f32 %v3408, 0.044793192
  %v3471 = vmul.f32 %v3421, 0.044793192
  %v3472 = vmul.f32 %v3422, 0.044793192
  %v3473 = vmul.f32 %v3423, 0.044793192
  %v3474 = vmul.f32 %v3424, 0.044793192
  %v3475 = vmul.f32 %v3425, 0.044793192
  %v3476 = vmul.f32 %v3426, 0.044793192
  %v3477 = vmul.f32 %v3417, 0.055815756
  %v3478 = vmul.f32 %v3418, 0.055815756
  %v3479 = vmul.f32 %v3415, 0.055815756
  %v3480 = vmul.f32 %v3416, 0.055815756
  %v3481 = vmul.f32 %v3413, 0.055815756
  %v3482 = vmul.f32 %v3414, 0.055815756
  %v3483 = vmul.f32 %v3411, 0.055815756
  %v3484 = vmul.f32 %v3412, 0.055815756
  %v3485 = vmul.f32 %v3409, 0.055815756
  %v3486 = vmul.f32 %v3410, 0.055815756
  %v3487 = vmul.f32 %v3407, 0.055815756
  %v3488 = vmul.f32 %v3408, 0.055815756
  %v3489 = vmul.f32 %v3419, 0.055815756
  %v3490 = vmul.f32 %v3420, 0.055815756
  %v3491 = vmul.f32 %v3421, 0.055815756
  %v3492 = vmul.f32 %v3422, 0.055815756
  %v3493 = vmul.f32 %v3423, 0.055815756
  %v3494 = vmul.f32 %v3424, 0.055815756
  %v3495 = vmul.f32 %v3425, 0.055815756
  %v3496 = vmul.f32 %v3426, 0.055815756
  %v3497 = vmul.f32 %v3427, 0.055815756
  %v3498 = vmul.f32 %v3428, 0.055815756
  %v3499 = vadd.f32 %v3439, %v3477
  %v3500 = vadd.f32 %v3440, %v3478
  %v3501 = vadd.f32 %v3441, %v3479
  %v3502 = vadd.f32 %v3442, %v3480
  %v3503 = vadd.f32 %v3443, %v3481
  %v3504 = vadd.f32 %v3444, %v3482
  %v3505 = vadd.f32 %v3445, %v3483
  %v3506 = vadd.f32 %v3446, %v3484
  %v3507 = vadd.f32 %v3447, %v3485
  %v3508 = vadd.f32 %v3448, %v3486
  %v3509 = vadd.f32 %v3449, %v3487
  %v3510 = vadd.f32 %v3450, %v3488
  %v3511 = vadd.f32 %v3451, %v3485
  %v3512 = vadd.f32 %v3452, %v3486
  %v3513 = vadd.f32 %v3453, %v3483
  %v3514 = vadd.f32 %v3454, %v3484
  %v3515 = vadd.f32 %v3451, %v3481
  %v3516 = vadd.f32 %v3452, %v3482
  %v3517 = vadd.f32 %v3449, %v3479
  %v3518 = vadd.f32 %v3450, %v3480
  %v3519 = vadd.f32 %v3447, %v3477
  %v3520 = vadd.f32 %v3448, %v3478
  %v3521 = vadd.f32 %v3445, %v3489
  %v3522 = vadd.f32 %v3446, %v3490
  %v3523 = vadd.f32 %v3443, %v3491
  %v3524 = vadd.f32 %v3444, %v3492
  %v3525 = vadd.f32 %v3441, %v3493
  %v3526 = vadd.f32 %v3442, %v3494
  %v3527 = vadd.f32 %v3439, %v3495
  %v3528 = vadd.f32 %v3440, %v3496
  %v3529 = vadd.f32 %v3455, %v3497
  %v3530 = vadd.f32 %v3456, %v3498
  %v3531 = vmul.f32 %v3415, 0.066823594
  %v3532 = vmul.f32 %v3416, 0.066823594
  %v3533 = vmul.f32 %v3413, 0.066823594
  %v3534 = vmul.f32 %v3414, 0.066823594
  %v3535 = vmul.f32 %v3411, 0.066823594
  %v3536 = vmul.f32 %v3412, 0.066823594
  %v3537 = vmul.f32 %v3409, 0.066823594
  %v3538 = vmul.f32 %v3410, 0.066823594
  %v3539 = vmul.f32 %v3407, 0.066823594
  %v3540 = vmul.f32 %v3408, 0.066823594
  %v3541 = vmul.f32 %v3417, 0.066823594
  %v3542 = vmul.f32 %v3418, 0.066823594
  %v3543 = vmul.f32 %v3419, 0.066823594
  %v3544 = vmul.f32 %v3420, 0.066823594
  %v3545 = vmul.f32 %v3421, 0.066823594
  %v3546 = vmul.f32 %v3422, 0.066823594
  %v3547 = vmul.f32 %v3423, 0.066823594
  %v3548 = vmul.f32 %v3424, 0.066823594
  %v3549 = vmul.f32 %v3425, 0.066823594
  %v3550 = vmul.f32 %v3426, 0.066823594
  %v3551 = vmul.f32 %v3427, 0.066823594
  %v3552 = vmul.f32 %v3428, 0.066823594
  %v3553 = vmul.f32 %v3429, 0.066823594
  %v3554 = vmul.f32 %v3430, 0.066823594
  %v3555 = vadd.f32 %v3457, %v3531
  %v3556 = vadd.f32 %v3458, %v3532
  %v3557 = vadd.f32 %v3459, %v3533
  %v3558 = vadd.f32 %v3460, %v3534
  %v3559 = vadd.f32 %v3461, %v3535
  %v3560 = vadd.f32 %v3462, %v3536
  %v3561 = vadd.f32 %v3463, %v3537
  %v3562 = vadd.f32 %v3464, %v3538
  %v3563 = vadd.f32 %v3465, %v3539
  %v3564 = vadd.f32 %v3466, %v3540
  %v3565 = vadd.f32 %v3467, %v3537
  %v3566 = vadd.f32 %v3468, %v3538
  %v3567 = vadd.f32 %v3469, %v3535
  %v3568 = vadd.f32 %v3470, %v3536
  %v3569 = vadd.f32 %v3467, %v3533
  %v3570 = vadd.f32 %v3468, %v3534
  %v3571 = vadd.f32 %v3465, %v3531
  %v3572 = vadd.f32 %v3466, %v3532
  %v3573 = vadd.f32 %v3463, %v3541
  %v3574 = vadd.f32 %v3464, %v3542
  %v3575 = vadd.f32 %v3461, %v3543
  %v3576 = vadd.f32 %v3462, %v3544
  %v3577 = vadd.f32 %v3459, %v3545
  %v3578 = vadd.f32 %v3460, %v3546
  %v3579 = vadd.f32 %v3457, %v3547
  %v3580 = vadd.f32 %v3458, %v3548
  %v3581 = vadd.f32 %v3471, %v3549
  %v3582 = vadd.f32 %v3472, %v3550
  %v3583 = vadd.f32 %v3473, %v3551
  %v3584 = vadd.f32 %v3474, %v3552
  %v3585 = vadd.f32 %v3475, %v3553
  %v3586 = vadd.f32 %v3476, %v3554
  %v3587 = vmul.f32 %v3413, 0.07686543
  %v3588 = vmul.f32 %v3414, 0.07686543
  %v3589 = vmul.f32 %v3411, 0.07686543
  %v3590 = vmul.f32 %v3412, 0.07686543
  %v3591 = vmul.f32 %v3409, 0.07686543
  %v3592 = vmul.f32 %v3410, 0.07686543
  %v3593 = vmul.f32 %v3407, 0.07686543
  %v3594 = vmul.f32 %v3408, 0.07686543
  %v3595 = vmul.f32 %v3415, 0.07686543
  %v3596 = vmul.f32 %v3416, 0.07686543
  %v3597 = vmul.f32 %v3417, 0.07686543
  %v3598 = vmul.f32 %v3418, 0.07686543
  %v3599 = vmul.f32 %v3419, 0.07686543
  %v3600 = vmul.f32 %v3420, 0.07686543
  %v3601 = vmul.f32 %v3421, 0.07686543
  %v3602 = vmul.f32 %v3422, 0.07686543
  %v3603 = vmul.f32 %v3423, 0.07686543
  %v3604 = vmul.f32 %v3424, 0.07686543
  %v3605 = vmul.f32 %v3425, 0.07686543
  %v3606 = vmul.f32 %v3426, 0.07686543
  %v3607 = vmul.f32 %v3427, 0.07686543
  %v3608 = vmul.f32 %v3428, 0.07686543
  %v3609 = vmul.f32 %v3429, 0.07686543
  %v3610 = vmul.f32 %v3430, 0.07686543
  %v3611 = vmul.f32 %v3431, 0.07686543
  %v3612 = vmul.f32 %v3432, 0.07686543
  %v3613 = vadd.f32 %v3499, %v3587
  %v3614 = vadd.f32 %v3500, %v3588
  %v3615 = vadd.f32 %v3501, %v3589
  %v3616 = vadd.f32 %v3502, %v3590
  %v3617 = vadd.f32 %v3503, %v3591
  %v3618 = vadd.f32 %v3504, %v3592
  %v3619 = vadd.f32 %v3505, %v3593
  %v3620 = vadd.f32 %v3506, %v3594
  %v3621 = vadd.f32 %v3507, %v3591
  %v3622 = vadd.f32 %v3508, %v3592
  %v3623 = vadd.f32 %v3509, %v3589
  %v3624 = vadd.f32 %v3510, %v3590
  %v3625 = vadd.f32 %v3511, %v3587
  %v3626 = vadd.f32 %v3512, %v3588
  %v3627 = vadd.f32 %v3513, %v3595
  %v3628 = vadd.f32 %v3514, %v3596
  %v3629 = vadd.f32 %v3515, %v3597
  %v3630 = vadd.f32 %v3516, %v3598
  %v3631 = vadd.f32 %v3517, %v3599
  %v3632 = vadd.f32 %v3518, %v3600
  %v3633 = vadd.f32 %v3519, %v3601
  %v3634 = vadd.f32 %v3520, %v3602
  %v3635 = vadd.f32 %v3521, %v3603
  %v3636 = vadd.f32 %v3522, %v3604
  %v3637 = vadd.f32 %v3523, %v3605
  %v3638 = vadd.f32 %v3524, %v3606
  %v3639 = vadd.f32 %v3525, %v3607
  %v3640 = vadd.f32 %v3526, %v3608
  %v3641 = vadd.f32 %v3527, %v3609
  %v3642 = vadd.f32 %v3528, %v3610
  %v3643 = vadd.f32 %v3529, %v3611
  %v3644 = vadd.f32 %v3530, %v3612
  %v3645 = vmul.f32 %v3411, 0.084949434
  %v3646 = vmul.f32 %v3412, 0.084949434
  %v3647 = vmul.f32 %v3409, 0.084949434
  %v3648 = vmul.f32 %v3410, 0.084949434
  %v3649 = vmul.f32 %v3407, 0.084949434
  %v3650 = vmul.f32 %v3408, 0.084949434
  %v3651 = vmul.f32 %v3413, 0.084949434
  %v3652 = vmul.f32 %v3414, 0.084949434
  %v3653 = vmul.f32 %v3415, 0.084949434
  %v3654 = vmul.f32 %v3416, 0.084949434
  %v3655 = vmul.f32 %v3417, 0.084949434
  %v3656 = vmul.f32 %v3418, 0.084949434
  %v3657 = vmul.f32 %v3419, 0.084949434
  %v3658 = vmul.f32 %v3420, 0.084949434
  %v3659 = vmul.f32 %v3421, 0.084949434
  %v3660 = vmul.f32 %v3422, 0.084949434
  %v3661 = vmul.f32 %v3423, 0.084949434
  %v3662 = vmul.f32 %v3424, 0.084949434
  %v3663 = vmul.f32 %v3425, 0.084949434
  %v3664 = vmul.f32 %v3426, 0.084949434
  %v3665 = vmul.f32 %v3427, 0.084949434
  %v3666 = vmul.f32 %v3428, 0.084949434
  %v3667 = vmul.f32 %v3429, 0.084949434
  %v3668 = vmul.f32 %v3430, 0.084949434
  %v3669 = vmul.f32 %v3431, 0.084949434
  %v3670 = vmul.f32 %v3432, 0.084949434
  %v3671 = vmul.f32 %v3433, 0.084949434
  %v3672 = vmul.f32 %v3434, 0.084949434
  %v3673 = vadd.f32 %v3555, %v3645
  %v3674 = vadd.f32 %v3556, %v3646
  %v3675 = vadd.f32 %v3557, %v3647
  %v3676 = vadd.f32 %v3558, %v3648
  %v3677 = vadd.f32 %v3559, %v3649
  %v3678 = vadd.f32 %v3560, %v3650
  %v3679 = vadd.f32 %v3561, %v3647
  %v3680 = vadd.f32 %v3562, %v3648
  %v3681 = vadd.f32 %v3563, %v3645
  %v3682 = vadd.f32 %v3564, %v3646
  %v3683 = vadd.f32 %v3565, %v3651
  %v3684 = vadd.f32 %v3566, %v3652
  %v3685 = vadd.f32 %v3567, %v3653
  %v3686 = vadd.f32 %v3568, %v3654
  %v3687 = vadd.f32 %v3569, %v3655
  %v3688 = vadd.f32 %v3570, %v3656
  %v3689 = vadd.f32 %v3571, %v3657
  %v3690 = vadd.f32 %v3572, %v3658
  %v3691 = vadd.f32 %v3573, %v3659
  %v3692 = vadd.f32 %v3574, %v3660
  %v3693 = vadd.f32 %v3575, %v3661
  %v3694 = vadd.f32 %v3576, %v3662
  %v3695 = vadd.f32 %v3577, %v3663
  %v3696 = vadd.f32 %v3578, %v3664
  %v3697 = vadd.f32 %v3579, %v3665
  %v3698 = vadd.f32 %v3580, %v3666
  %v3699 = vadd.f32 %v3581, %v3667
  %v3700 = vadd.f32 %v3582, %v3668
  %v3701 = vadd.f32 %v3583, %v3669
  %v3702 = vadd.f32 %v3584, %v3670
  %v3703 = vadd.f32 %v3585, %v3671
  %v3704 = vadd.f32 %v3586, %v3672
  %v3705 = vmul.f32 %v3409, 0.09020241
  %v3706 = vmul.f32 %v3410, 0.09020241
  %v3707 = vmul.f32 %v3407, 0.09020241
  %v3708 = vmul.f32 %v3408, 0.09020241
  %v3709 = vmul.f32 %v3411, 0.09020241
  %v3710 = vmul.f32 %v3412, 0.09020241
  %v3711 = vmul.f32 %v3413, 0.09020241
  %v3712 = vmul.f32 %v3414, 0.09020241
  %v3713 = vmul.f32 %v3415, 0.09020241
  %v3714 = vmul.f32 %v3416, 0.09020241
  %v3715 = vmul.f32 %v3417, 0.09020241
  %v3716 = vmul.f32 %v3418, 0.09020241
  %v3717 = vmul.f32 %v3419, 0.09020241
  %v3718 = vmul.f32 %v3420, 0.09020241
  %v3719 = vmul.f32 %v3421, 0.09020241
  %v3720 = vmul.f32 %v3422, 0.09020241
  %v3721 = vmul.f32 %v3423, 0.09020241
  %v3722 = vmul.f32 %v3424, 0.09020241
  %v3723 = vmul.f32 %v3425, 0.09020241
  %v3724 = vmul.f32 %v3426, 0.09020241
  %v3725 = vmul.f32 %v3427, 0.09020241
  %v3726 = vmul.f32 %v3428, 0.09020241
  %v3727 = vmul.f32 %v3429, 0.09020241
  %v3728 = vmul.f32 %v3430, 0.09020241
  %v3729 = vmul.f32 %v3431, 0.09020241
  %v3730 = vmul.f32 %v3432, 0.09020241
  %v3731 = vmul.f32 %v3433, 0.09020241
  %v3732 = vmul.f32 %v3434, 0.09020241
  %v3733 = vmul.f32 %v3435, 0.09020241
  %v3734 = vmul.f32 %v3436, 0.09020241
  %v3735 = vadd.f32 %v3613, %v3705
  %v3736 = vadd.f32 %v3614, %v3706
  %v3737 = vadd.f32 %v3615, %v3707
  %v3738 = vadd.f32 %v3616, %v3708
  %v3739 = vadd.f32 %v3617, %v3705
  %v3740 = vadd.f32 %v3618, %v3706
  %v3741 = vadd.f32 %v3619, %v3709
  %v3742 = vadd.f32 %v3620, %v3710
  %v3743 = vadd.f32 %v3621, %v3711
  %v3744 = vadd.f32 %v3622, %v3712
  %v3745 = vadd.f32 %v3623, %v3713
  %v3746 = vadd.f32 %v3624, %v3714
  %v3747 = vadd.f32 %v3625, %v3715
  %v3748 = vadd.f32 %v3626, %v3716
  %v3749 = vadd.f32 %v3627, %v3717
  %v3750 = vadd.f32 %v3628, %v3718
  %v3751 = vadd.f32 %v3629, %v3719
  %v3752 = vadd.f32 %v3630, %v3720
  %v3753 = vadd.f32 %v3631, %v3721
  %v3754 = vadd.f32 %v3632, %v3722
  %v3755 = vadd.f32 %v3633, %v3723
  %v3756 = vadd.f32 %v3634, %v3724
  %v3757 = vadd.f32 %v3635, %v3725
  %v3758 = vadd.f32 %v3636, %v3726
  %v3759 = vadd.f32 %v3637, %v3727
  %v3760 = vadd.f32 %v3638, %v3728
  %v3761 = vadd.f32 %v3639, %v3729
  %v3762 = vadd.f32 %v3640, %v3730
  %v3763 = vadd.f32 %v3641, %v3731
  %v3764 = vadd.f32 %v3642, %v3732
  %v3765 = vadd.f32 %v3643, %v3733
  %v3766 = vadd.f32 %v3644, %v3734
  %v3767 = vmul.f32 %v3407, 0.092024624
  %v3768 = vmul.f32 %v3408, 0.092024624
  %v3769 = vmul.f32 %v3409, 0.092024624
  %v3770 = vmul.f32 %v3410, 0.092024624
  %v3771 = vmul.f32 %v3411, 0.092024624
  %v3772 = vmul.f32 %v3412, 0.092024624
  %v3773 = vmul.f32 %v3413, 0.092024624
  %v3774 = vmul.f32 %v3414, 0.092024624
  %v3775 = vmul.f32 %v3415, 0.092024624
  %v3776 = vmul.f32 %v3416, 0.092024624
  %v3777 = vmul.f32 %v3417, 0.092024624
  %v3778 = vmul.f32 %v3418, 0.092024624
  %v3779 = vmul.f32 %v3419, 0.092024624
  %v3780 = vmul.f32 %v3420, 0.092024624
  %v3781 = vmul.f32 %v3421, 0.092024624
  %v3782 = vmul.f32 %v3422, 0.092024624
  %v3783 = vmul.f32 %v3423, 0.092024624
  %v3784 = vmul.f32 %v3424, 0.092024624
  %v3785 = vmul.f32 %v3425, 0.092024624
  %v3786 = vmul.f32 %v3426, 0.092024624
  %v3787 = vmul.f32 %v3427, 0.092024624
  %v3788 = vmul.f32 %v3428, 0.092024624
  %v3789 = vmul.f32 %v3429, 0.092024624
  %v3790 = vmul.f32 %v3430, 0.092024624
  %v3791 = vmul.f32 %v3431, 0.092024624
  %v3792 = vmul.f32 %v3432, 0.092024624
  %v3793 = vmul.f32 %v3433, 0.092024624
  %v3794 = vmul.f32 %v3434, 0.092024624
  %v3795 = vmul.f32 %v3435, 0.092024624
  %v3796 = vmul.f32 %v3436, 0.092024624
  %v3797 = vmul.f32 %v3437, 0.092024624
  %v3798 = vmul.f32 %v3438, 0.092024624
  %v3799 = vadd.f32 %v3673, %v3767
  %v3800 = vadd.f32 %v3674, %v3768
  %v3801 = vadd.f32 %v3675, %v3769
  %v3802 = vadd.f32 %v3676, %v3770
  %v3803 = vadd.f32 %v3677, %v3771
  %v3804 = vadd.f32 %v3678, %v3772
  %v3805 = vadd.f32 %v3679, %v3773
  %v3806 = vadd.f32 %v3680, %v3774
  %v3807 = vadd.f32 %v3681, %v3775
  %v3808 = vadd.f32 %v3682, %v3776
  %v3809 = vadd.f32 %v3683, %v3777
  %v3810 = vadd.f32 %v3684, %v3778
  %v3811 = vadd.f32 %v3685, %v3779
  %v3812 = vadd.f32 %v3686, %v3780
  %v3813 = vadd.f32 %v3687, %v3781
  %v3814 = vadd.f32 %v3688, %v3782
  %v3815 = vadd.f32 %v3689, %v3783
  %v3816 = vadd.f32 %v3690, %v3784
  %v3817 = vadd.f32 %v3691, %v3785
  %v3818 = vadd.f32 %v3692, %v3786
  %v3819 = vadd.f32 %v3693, %v3787
  %v3820 = vadd.f32 %v3694, %v3788
  %v3821 = vadd.f32 %v3695, %v3789
  %v3822 = vadd.f32 %v3696, %v3790
  %v3823 = vadd.f32 %v3697, %v3791
  %v3824 = vadd.f32 %v3698, %v3792
  %v3825 = vadd.f32 %v3699, %v3793
  %v3826 = vadd.f32 %v3700, %v3794
  %v3827 = vadd.f32 %v3701, %v3795
  %v3828 = vadd.f32 %v3702, %v3796
  %v3829 = vadd.f32 %v3703, %v3797
  %v3830 = vadd.f32 %v3704, %v3798
  %v3831 = vmul.f32 %v3437, 0.09020241
  %v3832 = vmul.f32 %v3438, 0.09020241
  %v3833 = vadd.f32 %v3735, %v3705
  %v3834 = vadd.f32 %v3736, %v3706
  %v3835 = vadd.f32 %v3737, %v3709
  %v3836 = vadd.f32 %v3738, %v3710
  %v3837 = vadd.f32 %v3739, %v3711
  %v3838 = vadd.f32 %v3740, %v3712
  %v3839 = vadd.f32 %v3741, %v3713
  %v3840 = vadd.f32 %v3742, %v3714
  %v3841 = vadd.f32 %v3743, %v3715
  %v3842 = vadd.f32 %v3744, %v3716
  %v3843 = vadd.f32 %v3745, %v3717
  %v3844 = vadd.f32 %v3746, %v3718
  %v3845 = vadd.f32 %v3747, %v3719
  %v3846 = vadd.f32 %v3748, %v3720
  %v3847 = vadd.f32 %v3749, %v3721
  %v3848 = vadd.f32 %v3750, %v3722
  %v3849 = vadd.f32 %v3751, %v3723
  %v3850 = vadd.f32 %v3752, %v3724
  %v3851 = vadd.f32 %v3753, %v3725
  %v3852 = vadd.f32 %v3754, %v3726
  %v3853 = vadd.f32 %v3755, %v3727
  %v3854 = vadd.f32 %v3756, %v3728
  %v3855 = vadd.f32 %v3757, %v3729
  %v3856 = vadd.f32 %v3758, %v3730
  %v3857 = vadd.f32 %v3759, %v3731
  %v3858 = vadd.f32 %v3760, %v3732
  %v3859 = vadd.f32 %v3761, %v3733
  %v3860 = vadd.f32 %v3762, %v3734
  %v3861 = vadd.f32 %v3763, %v3831
  %v3862 = vadd.f32 %v3764, %v3832
  %v3863 = vadd.f32 %v3765, %v3733
  %v3864 = vadd.f32 %v3766, %v3734
  %v3865 = vmul.f32 %v3435, 0.084949434
  %v3866 = vmul.f32 %v3436, 0.084949434
  %v3867 = vmul.f32 %v3437, 0.084949434
  %v3868 = vmul.f32 %v3438, 0.084949434
  %v3869 = vadd.f32 %v3799, %v3645
  %v3870 = vadd.f32 %v3800, %v3646
  %v3871 = vadd.f32 %v3801, %v3651
  %v3872 = vadd.f32 %v3802, %v3652
  %v3873 = vadd.f32 %v3803, %v3653
  %v3874 = vadd.f32 %v3804, %v3654
  %v3875 = vadd.f32 %v3805, %v3655
  %v3876 = vadd.f32 %v3806, %v3656
  %v3877 = vadd.f32 %v3807, %v3657
  %v3878 = vadd.f32 %v3808, %v3658
  %v3879 = vadd.f32 %v3809, %v3659
  %v3880 = vadd.f32 %v3810, %v3660
  %v3881 = vadd.f32 %v3811, %v3661
  %v3882 = vadd.f32 %v3812, %v3662
  %v3883 = vadd.f32 %v3813, %v3663
  %v3884 = vadd.f32 %v3814, %v3664
  %v3885 = vadd.f32 %v3815, %v3665
  %v3886 = vadd.f32 %v3816, %v3666
  %v3887 = vadd.f32 %v3817, %v3667
  %v3888 = vadd.f32 %v3818, %v3668
  %v3889 = vadd.f32 %v3819, %v3669
  %v3890 = vadd.f32 %v3820, %v3670
  %v3891 = vadd.f32 %v3821, %v3671
  %v3892 = vadd.f32 %v3822, %v3672
  %v3893 = vadd.f32 %v3823, %v3865
  %v3894 = vadd.f32 %v3824, %v3866
  %v3895 = vadd.f32 %v3825, %v3867
  %v3896 = vadd.f32 %v3826, %v3868
  %v3897 = vadd.f32 %v3827, %v3865
  %v3898 = vadd.f32 %v3828, %v3866
  %v3899 = vadd.f32 %v3829, %v3671
  %v3900 = vadd.f32 %v3830, %v3672
  %v3901 = vmul.f32 %v3433, 0.07686543
  %v3902 = vmul.f32 %v3434, 0.07686543
  %v3903 = vmul.f32 %v3435, 0.07686543
  %v3904 = vmul.f32 %v3436, 0.07686543
  %v3905 = vmul.f32 %v3437, 0.07686543
  %v3906 = vmul.f32 %v3438, 0.07686543
  %v3907 = vadd.f32 %v3833, %v3587
  %v3908 = vadd.f32 %v3834, %v3588
  %v3909 = vadd.f32 %v3835, %v3595
  %v3910 = vadd.f32 %v3836, %v3596
  %v3911 = vadd.f32 %v3837, %v3597
  %v3912 = vadd.f32 %v3838, %v3598
  %v3913 = vadd.f32 %v3839, %v3599
  %v3914 = vadd.f32 %v3840, %v3600
  %v3915 = vadd.f32 %v3841, %v3601
  %v3916 = vadd.f32 %v3842, %v3602
  %v3917 = vadd.f32 %v3843, %v3603
  %v3918 = vadd.f32 %v3844, %v3604
  %v3919 = vadd.f32 %v3845, %v3605
  %v3920 = vadd.f32 %v3846, %v3606
  %v3921 = vadd.f32 %v3847, %v3607
  %v3922 = vadd.f32 %v3848, %v3608
  %v3923 = vadd.f32 %v3849, %v3609
  %v3924 = vadd.f32 %v3850, %v3610
  %v3925 = vadd.f32 %v3851, %v3611
  %v3926 = vadd.f32 %v3852, %v3612
  %v3927 = vadd.f32 %v3853, %v3901
  %v3928 = vadd.f32 %v3854, %v3902
  %v3929 = vadd.f32 %v3855, %v3903
  %v3930 = vadd.f32 %v3856, %v3904
  %v3931 = vadd.f32 %v3857, %v3905
  %v3932 = vadd.f32 %v3858, %v3906
  %v3933 = vadd.f32 %v3859, %v3903
  %v3934 = vadd.f32 %v3860, %v3904
  %v3935 = vadd.f32 %v3861, %v3901
  %v3936 = vadd.f32 %v3862, %v3902
  %v3937 = vadd.f32 %v3863, %v3611
  %v3938 = vadd.f32 %v3864, %v3612
  %v3939 = vmul.f32 %v3431, 0.066823594
  %v3940 = vmul.f32 %v3432, 0.066823594
  %v3941 = vmul.f32 %v3433, 0.066823594
  %v3942 = vmul.f32 %v3434, 0.066823594
  %v3943 = vmul.f32 %v3435, 0.066823594
  %v3944 = vmul.f32 %v3436, 0.066823594
  %v3945 = vmul.f32 %v3437, 0.066823594
  %v3946 = vmul.f32 %v3438, 0.066823594
  %v3947 = vadd.f32 %v3869, %v3531
  %v3948 = vadd.f32 %v3870, %v3532
  %v3949 = vadd.f32 %v3871, %v3541
  %v3950 = vadd.f32 %v3872, %v3542
  %v3951 = vadd.f32 %v3873, %v3543
  %v3952 = vadd.f32 %v3874, %v3544
  %v3953 = vadd.f32 %v3875, %v3545
  %v3954 = vadd.f32 %v3876, %v3546
  %v3955 = vadd.f32 %v3877, %v3547
  %v3956 = vadd.f32 %v3878, %v3548
  %v3957 = vadd.f32 %v3879, %v3549
  %v3958 = vadd.f32 %v3880, %v3550
  %v3959 = vadd.f32 %v3881, %v3551
  %v3960 = vadd.f32 %v3882, %v3552
  %v3961 = vadd.f32 %v3883, %v3553
  %v3962 = vadd.f32 %v3884, %v3554
  %v3963 = vadd.f32 %v3885, %v3939
  %v3964 = vadd.f32 %v3886, %v3940
  %v3965 = vadd.f32 %v3887, %v3941
  %v3966 = vadd.f32 %v3888, %v3942
  %v3967 = vadd.f32 %v3889, %v3943
  %v3968 = vadd.f32 %v3890, %v3944
  %v3969 = vadd.f32 %v3891, %v3945
  %v3970 = vadd.f32 %v3892, %v3946
  %v3971 = vadd.f32 %v3893, %v3943
  %v3972 = vadd.f32 %v3894, %v3944
  %v3973 = vadd.f32 %v3895, %v3941
  %v3974 = vadd.f32 %v3896, %v3942
  %v3975 = vadd.f32 %v3897, %v3939
  %v3976 = vadd.f32 %v3898, %v3940
  %v3977 = vadd.f32 %v3899, %v3553
  %v3978 = vadd.f32 %v3900, %v3554
  %v3979 = vmul.f32 %v3429, 0.055815756
  %v3980 = vmul.f32 %v3430, 0.055815756
  %v3981 = vmul.f32 %v3431, 0.055815756
  %v3982 = vmul.f32 %v3432, 0.055815756
  %v3983 = vmul.f32 %v3433, 0.055815756
  %v3984 = vmul.f32 %v3434, 0.055815756
  %v3985 = vmul.f32 %v3435, 0.055815756
  %v3986 = vmul.f32 %v3436, 0.055815756
  %v3987 = vmul.f32 %v3437, 0.055815756
  %v3988 = vmul.f32 %v3438, 0.055815756
  %v3989 = vadd.f32 %v3907, %v3477
  %v3990 = vadd.f32 %v3908, %v3478
  %v3991 = vadd.f32 %v3909, %v3489
  %v3992 = vadd.f32 %v3910, %v3490
  %v3993 = vadd.f32 %v3911, %v3491
  %v3994 = vadd.f32 %v3912, %v3492
  %v3995 = vadd.f32 %v3913, %v3493
  %v3996 = vadd.f32 %v3914, %v3494
  %v3997 = vadd.f32 %v3915, %v3495
  %v3998 = vadd.f32 %v3916, %v3496
  %v3999 = vadd.f32 %v3917, %v3497
  %v4000 = vadd.f32 %v3918, %v3498
  %v4001 = vadd.f32 %v3919, %v3979
  %v4002 = vadd.f32 %v3920, %v3980
  %v4003 = vadd.f32 %v3921, %v3981
  %v4004 = vadd.f32 %v3922, %v3982
  %v4005 = vadd.f32 %v3923, %v3983
  %v4006 = vadd.f32 %v3924, %v3984
  %v4007 = vadd.f32 %v3925, %v3985
  %v4008 = vadd.f32 %v3926, %v3986
  %v4009 = vadd.f32 %v3927, %v3987
  %v4010 = vadd.f32 %v3928, %v3988
  %v4011 = vadd.f32 %v3929, %v3985
  %v4012 = vadd.f32 %v3930, %v3986
  %v4013 = vadd.f32 %v3931, %v3983
  %v4014 = vadd.f32 %v3932, %v3984
  %v4015 = vadd.f32 %v3933, %v3981
  %v4016 = vadd.f32 %v3934, %v3982
  %v4017 = vadd.f32 %v3935, %v3979
  %v4018 = vadd.f32 %v3936, %v3980
  %v4019 = vadd.f32 %v3937, %v3497
  %v4020 = vadd.f32 %v3938, %v3498
  %v4021 = vmul.f32 %v3427, 0.044793192
  %v4022 = vmul.f32 %v3428, 0.044793192
  %v4023 = vmul.f32 %v3429, 0.044793192
  %v4024 = vmul.f32 %v3430, 0.044793192
  %v4025 = vmul.f32 %v3431, 0.044793192
  %v4026 = vmul.f32 %v3432, 0.044793192
  %v4027 = vmul.f32 %v3433, 0.044793192
  %v4028 = vmul.f32 %v3434, 0.044793192
  %v4029 = vmul.f32 %v3435, 0.044793192
  %v4030 = vmul.f32 %v3436, 0.044793192
  %v4031 = vmul.f32 %v3437, 0.044793192
  %v4032 = vmul.f32 %v3438, 0.044793192
  %v4033 = vadd.f32 %v3947, %v3457
  %v4034 = vadd.f32 %v3948, %v3458
  %v4035 = vadd.f32 %v3949, %v3471
  %v4036 = vadd.f32 %v3950, %v3472
  %v4037 = vadd.f32 %v3951, %v3473
  %v4038 = vadd.f32 %v3952, %v3474
  %v4039 = vadd.f32 %v3953, %v3475
  %v4040 = vadd.f32 %v3954, %v3476
  %v4041 = vadd.f32 %v3955, %v4021
  %v4042 = vadd.f32 %v3956, %v4022
  %v4043 = vadd.f32 %v3957, %v4023
  %v4044 = vadd.f32 %v3958, %v4024
  %v4045 = vadd.f32 %v3959, %v4025
  %v4046 = vadd.f32 %v3960, %v4026
  %v4047 = vadd.f32 %v3961, %v4027
  %v4048 = vadd.f32 %v3962, %v4028
  %v4049 = vadd.f32 %v3963, %v4029
  %v4050 = vadd.f32 %v3964, %v4030
  %v4051 = vadd.f32 %v3965, %v4031
  %v4052 = vadd.f32 %v3966, %v4032
  %v4053 = vadd.f32 %v3967, %v4029
  %v4054 = vadd.f32 %v3968, %v4030
  %v4055 = vadd.f32 %v3969, %v4027
  %v4056 = vadd.f32 %v3970, %v4028
  %v4057 = vadd.f32 %v3971, %v4025
  %v4058 = vadd.f32 %v3972, %v4026
  %v4059 = vadd.f32 %v3973, %v4023
  %v4060 = vadd.f32 %v3974, %v4024
  %v4061 = vadd.f32 %v3975, %v4021
  %v4062 = vadd.f32 %v3976, %v4022
  %v4063 = vadd.f32 %v3977, %v3475
  %v4064 = vadd.f32 %v3978, %v3476
  %v4065 = vmul.f32 %v3425, 0.034537863
  %v4066 = vmul.f32 %v3426, 0.034537863
  %v4067 = vmul.f32 %v3427, 0.034537863
  %v4068 = vmul.f32 %v3428, 0.034537863
  %v4069 = vmul.f32 %v3429, 0.034537863
  %v4070 = vmul.f32 %v3430, 0.034537863
  %v4071 = vmul.f32 %v3431, 0.034537863
  %v4072 = vmul.f32 %v3432, 0.034537863
  %v4073 = vmul.f32 %v3433, 0.034537863
  %v4074 = vmul.f32 %v3434, 0.034537863
  %v4075 = vmul.f32 %v3435, 0.034537863
  %v4076 = vmul.f32 %v3436, 0.034537863
  %v4077 = vmul.f32 %v3437, 0.034537863
  %v4078 = vmul.f32 %v3438, 0.034537863
  %v4079 = vadd.f32 %v3989, %v3439
  %v4080 = vadd.f32 %v3990, %v3440
  %v4081 = vadd.f32 %v3991, %v3455
  %v4082 = vadd.f32 %v3992, %v3456
  %v4083 = vadd.f32 %v3993, %v4065
  %v4084 = vadd.f32 %v3994, %v4066
  %v4085 = vadd.f32 %v3995, %v4067
  %v4086 = vadd.f32 %v3996, %v4068
  %v4087 = vadd.f32 %v3997, %v4069
  %v4088 = vadd.f32 %v3998, %v4070
  %v4089 = vadd.f32 %v3999, %v4071
  %v4090 = vadd.f32 %v4000, %v4072
  %v4091 = vadd.f32 %v4001, %v4073
  %v4092 = vadd.f32 %v4002, %v4074
  %v4093 = vadd.f32 %v4003, %v4075
  %v4094 = vadd.f32 %v4004, %v4076
  %v4095 = vadd.f32 %v4005, %v4077
  %v4096 = vadd.f32 %v4006, %v4078
  %v4097 = vadd.f32 %v4007, %v4075
  %v4098 = vadd.f32 %v4008, %v4076
  %v4099 = vadd.f32 %v4009, %v4073
  %v4100 = vadd.f32 %v4010, %v4074
  %v4101 = vadd.f32 %v4011, %v4071
  %v4102 = vadd.f32 %v4012, %v4072
  %v4103 = vadd.f32 %v4013, %v4069
  %v4104 = vadd.f32 %v4014, %v4070
  %v4105 = vadd.f32 %v4015, %v4067
  %v4106 = vadd.f32 %v4016, %v4068
  %v4107 = vadd.f32 %v4017, %v4065
  %v4108 = vadd.f32 %v4018, %v4066
  %v4109 = vadd.f32 %v4019, %v3455
  %v4110 = vadd.f32 %v4020, %v3456
  %v4111 = vadd.f32 %v4079, %v4033
  %v4112 = vadd.f32 %v4080, %v4034
  %v4113 = vadd.f32 %v4081, %v4035
  %v4114 = vadd.f32 %v4082, %v4036
  %v4115 = vadd.f32 %v4083, %v4037
  %v4116 = vadd.f32 %v4084, %v4038
  %v4117 = vadd.f32 %v4085, %v4039
  %v4118 = vadd.f32 %v4086, %v4040
  %v4119 = vadd.f32 %v4087, %v4041
  %v4120 = vadd.f32 %v4088, %v4042
  %v4121 = vadd.f32 %v4089, %v4043
  %v4122 = vadd.f32 %v4090, %v4044
  %v4123 = vadd.f32 %v4091, %v4045
  %v4124 = vadd.f32 %v4092, %v4046
  %v4125 = vadd.f32 %v4093, %v4047
  %v4126 = vadd.f32 %v4094, %v4048
  %v4127 = vadd.f32 %v4095, %v4049
  %v4128 = vadd.f32 %v4096, %v4050
  %v4129 = vadd.f32 %v4097, %v4051
  %v4130 = vadd.f32 %v4098, %v4052
  %v4131 = vadd.f32 %v4099, %v4053
  %v4132 = vadd.f32 %v4100, %v4054
  %v4133 = vadd.f32 %v4101, %v4055
  %v4134 = vadd.f32 %v4102, %v4056
  %v4135 = vadd.f32 %v4103, %v4057
  %v4136 = vadd.f32 %v4104, %v4058
  %v4137 = vadd.f32 %v4105, %v4059
  %v4138 = vadd.f32 %v4106, %v4060
  %v4139 = vadd.f32 %v4107, %v4061
  %v4140 = vadd.f32 %v4108, %v4062
  %v4141 = vadd.f32 %v4109, %v4063
  %v4142 = vadd.f32 %v4110, %v4064
  %4143 = vst [vmem:[%s1] sm:$0xff] %v4111
  %4144 = vst [vmem:[%s1 + $0x8] sm:$0xff] %v4112
  %4145 = vst [vmem:[%s1 + $0x10] sm:$0xff] %v4113
  %4146 = vst [vmem:[%s1 + $0x18] sm:$0xff] %v4114
  %4147 = vst [vmem:[%s1 + $0x20] sm:$0xff] %v4115
  %4148 = vst [vmem:[%s1 + $0x28] sm:$0xff] %v4116
  %4149 = vst [vmem:[%s1 + $0x30] sm:$0xff] %v4117
  %4150 = vst [vmem:[%s1 + $0x38] sm:$0xff] %v4118
  %4151 = vst [vmem:[%s1 + $0x40] sm:$0xff] %v4119
  %4152 = vst [vmem:[%s1 + $0x48] sm:$0xff] %v4120
  %4153 = vst [vmem:[%s1 + $0x50] sm:$0xff] %v4121
  %4154 = vst [vmem:[%s1 + $0x58] sm:$0xff] %v4122
  %4155 = vst [vmem:[%s1 + $0x60] sm:$0xff] %v4123
  %4156 = vst [vmem:[%s1 + $0x68] sm:$0xff] %v4124
  %4157 = vst [vmem:[%s1 + $0x70] sm:$0xff] %v4125
  %4158 = vst [vmem:[%s1 + $0x78] sm:$0xff] %v4126
  %4159 = vst [vmem:[%s1 + $0x80] sm:$0xff] %v4127
  %4160 = vst [vmem:[%s1 + $0x88] sm:$0xff] %v4128
  %4161 = vst [vmem:[%s1 + $0x90] sm:$0xff] %v4129
  %4162 = vst [vmem:[%s1 + $0x98] sm:$0xff] %v4130
  %4163 = vst [vmem:[%s1 + $0xa0] sm:$0xff] %v4131
  %4164 = vst [vmem:[%s1 + $0xa8] sm:$0xff] %v4132
  %4165 = vst [vmem:[%s1 + $0xb0] sm:$0xff] %v4133
  %4166 = vst [vmem:[%s1 + $0xb8] sm:$0xff] %v4134
  %4167 = vst [vmem:[%s1 + $0xc0] sm:$0xff] %v4135
  %4168 = vst [vmem:[%s1 + $0xc8] sm:$0xff] %v4136
  %4169 = vst [vmem:[%s1 + $0xd0] sm:$0xff] %v4137
  %4170 = vst [vmem:[%s1 + $0xd8] sm:$0xff] %v4138
  %4171 = vst [vmem:[%s1 + $0xe0] sm:$0xff] %v4139
  %4172 = vst [vmem:[%s1 + $0xe8] sm:$0xff] %v4140
  %4173 = vst [vmem:[%s1 + $0xf0] sm:$0xff] %v4141
  %4174 = vst [vmem:[%s1 + $0xf8] sm:$0xff] %v4142
  // Predicated region
  $region6: #{_blur_call.1} parent=0 // pred_check
    _
  $region7: #{_blur_call.1} parent=0 // pred_check_branch
    %4176 = sbr.rel (0) target = $region9
  $region8: #{_blur_call.1} parent=0 // pred_region
    _
  $region9: #{_blur_call.1} parent=0 // pred_fallthru
    _
  // Predicated region
  $region10: #{_blur_call.1} parent=0 // pred_check
    _
  $region11: #{_blur_call.1} parent=0 // pred_check_branch
    %4178 = sbr.rel (0) target = $region13
  $region12: #{_blur_call.1} parent=0 // pred_region
    _
  $region13: #{_blur_call.1} parent=0 // pred_fallthru
    _

</llo_original>
